<compile_context>
chip_gen: v5e
topology: v5e:2x2
jax: 0.10.0
libtpu: 0.0.40
codegen_flags: <defaults>
</compile_context>

<pallas_src>
import functools

import jax
import jax.numpy as jnp
from jax import lax
from jax.experimental import pallas as pl
from jax.experimental.pallas import tpu as pltpu

EPS = 1e-5   # PyTorch BatchNorm2d default eps

# TODO(synk): BatchNorm running_mean/running_var buffer updates (training-mode side effect)
# are not reproduced; only the forward output is computed.


def _vmem_limit_bytes():
    """~75% of this chip's VMEM (128 MiB-class on v5e/v6e, 64 MiB on v7x)."""
    try:
        cap = pltpu.get_tpu_info().vmem_capacity_bytes
        return int(cap * 3 // 4)
    except Exception:
        return 48 * 1024 * 1024


# ---------------------------------------------------------------------------
# Pass 1 (fused): conv3x3 (SAME) as 9 MXU matmuls on pre-shifted bf16 slabs,
# K-accumulated in a row-chunked f32 VMEM scratch, + last-k epilogue doing
# BN1 (batch stats, centered variance) + ReLU + 1x1 projection, accumulating
# the per-branch logit across Cout tiles into the resident (M, 1) output.
# Grid: (branch, Cout-tile, Cin-tile).  Cin is the matmul reduction, Cout is
# the logit-accumulation reduction (both "arbitrary"); branch is "parallel".
# ---------------------------------------------------------------------------
def _conv_bn_proj_kernel(x_ref, w_ref, p_ref, z_ref, acc_ref, *, hc):
    # x_ref  : (3, N, H+2, W, kt) bf16   three pre-shifted (dx=0,1,2) zero-padded slabs
    # w_ref  : (3, 3, kt, cot)    bf16   conv3x3 weight slice (dy, dx, Cin, Cout)
    # p_ref  : (3, cot)           f32    rows = [gamma1, beta1, w2] for this Cout slice
    # z_ref  : (M, 1)             f32    per-branch logit, accumulated across Cout tiles
    # acc_ref: (M, cot)           f32    conv accumulator scratch (resident across Cin)
    co = pl.program_id(1)
    k = pl.program_id(2)

    _, n_b, hp, w_sp, _ = x_ref.shape
    h_sp = hp - 2
    m_rows, _ = acc_ref.shape
    chunk = hc * w_sp

    @pl.when(k == 0)
    def _init():
        acc_ref[...] = jnp.zeros_like(acc_ref)

    # Row-chunked accumulation: one scratch read + one write per chunk; all 9 taps
    # accumulate into a register-resident (chunk, cot) f32 value.
    for n in range(n_b):
        for h0 in range(0, h_sp, hc):
            r0 = (n * h_sp + h0) * w_sp
            acc = acc_ref[r0:r0 + chunk, :]
            for dy in range(3):
                for dx in range(3):
                    patch = x_ref[dx, n, h0 + dy:h0 + dy + hc, :, :].reshape(chunk, -1)
                    acc = acc + jnp.dot(patch, w_ref[dy, dx],
                                        preferred_element_type=jnp.float32)
            acc_ref[r0:r0 + chunk, :] = acc

    @pl.when(k == pl.num_programs(2) - 1)
    def _epilogue():
        y = acc_ref[...]                                            # (M, cot) f32
        inv_m = 1.0 / float(m_rows)
        mean = jnp.sum(y, axis=0, keepdims=True) * inv_m            # (1, cot)
        centered = y - mean
        var = jnp.sum(centered * centered, axis=0, keepdims=True) * inv_m
        scale = p_ref[0:1, :] * lax.rsqrt(var + EPS)                # gamma1 * rsqrt(var+eps)
        yb = jnp.maximum(centered * scale + p_ref[1:2, :], 0.0)     # BN1 affine + ReLU
        zpart = jnp.sum(yb * p_ref[2:3, :], axis=1, keepdims=True)  # 1x1 conv -> (M, 1)

        @pl.when(co == 0)
        def _set():
            z_ref[...] = zpart

        @pl.when(co > 0)
        def _add():
            z_ref[...] = z_ref[...] + zpart


# ---------------------------------------------------------------------------
# Pass 3: branch softmax + broadcast multiply.  Grid: (branch, row-tile), one
# branch's (tm, C) tile per block; the tiny (tm, 6) softmax is recomputed per
# branch block (negligible) and the needed column is picked with a lane mask.
# ---------------------------------------------------------------------------
def _softmax_mix_kernel(logit_ref, h_ref, out_ref):
    # logit_ref: (tm, B) f32 BN2-affined branch logits ; h_ref/out_ref: (tm, C) f32
    b = pl.program_id(0)
    l = logit_ref[...]
    l = l - jnp.max(l, axis=1, keepdims=True)
    e = jnp.exp(l)
    denom = jnp.sum(e, axis=1, keepdims=True)
    lane = lax.broadcasted_iota(jnp.int32, e.shape, 1)
    num = jnp.sum(jnp.where(lane == b, e, 0.0), axis=1, keepdims=True)
    out_ref[...] = h_ref[...] * (num / denom)                       # exact division


# ---------------------------------------------------------------------------
# Wrapper
# ---------------------------------------------------------------------------
def mix_forward(h_list_nchw, params, *, kt=512, cot=512, tm_mix=512, return_nchw=True):
    """h_list_nchw: 6 arrays (N, C, H, W).  Returns (out_nchw (N,6C,H,W), out_stacked (6,N,H,W,C))."""
    w1s, b1s, g1s, be1s, w2s, b2s, g2s, be2s = params
    del b1s, b2s  # conv biases cancel exactly under training-mode (batch-stat) BatchNorm

    # NCHW -> NHWC boundary glue (channels land on lanes in every kernel).
    hs = jnp.stack([jnp.transpose(h, (0, 2, 3, 1)) for h in h_list_nchw], axis=0)  # (B,N,H,W,C)
    B, N, H, W, C = hs.shape
    M = N * H * W
    vmem_limit = _vmem_limit_bytes()

    kt = min(kt, C)
    cot = min(cot, C)
    tm_mix = min(tm_mix, M)
    assert C % kt == 0 and C % cot == 0
    assert (kt == C or kt % 128 == 0) and (cot == C or cot % 128 == 0)
    assert M % tm_mix == 0 and (tm_mix == M or tm_mix % 8 == 0)
    assert W % 8 == 0, "W must be a multiple of 8 for layout-free (hc, W)->rows reshapes"

    # Three pre-shifted bf16 slabs: one fused cast+pad+slice+stack in XLA; the dx (width)
    # shift happens here so the kernel never slices at an unaligned sublane offset.
    xp = jnp.pad(hs.astype(jnp.bfloat16), ((0, 0), (0, 0), (1, 1), (1, 1), (0, 0)))
    xsh = jnp.stack([xp[:, :, :, dx:dx + W, :] for dx in range(3)], axis=1)  # (B,3,N,H+2,W,C)
    w1_bf = w1s.astype(jnp.bfloat16)
    p1 = jnp.concatenate([g1s, be1s, w2s], axis=1).astype(jnp.float32)       # (B,3,C)
    hflat = hs.reshape(B, M, C)                                              # free reshape

    # Row-chunk size: keep the per-chunk f32 accumulator at ~<=64 KB of registers.
    hc = max(1, min(H, (16384 // max(cot, 1)) // W))
    while H % hc:
        hc -= 1
    conv_kernel = functools.partial(_conv_bn_proj_kernel, hc=hc)

    # ---- Pass 1 (fused): conv3x3 + BN1(batch) + ReLU + 1x1 conv -> branch logits -------
    z = pl.pallas_call(
        conv_kernel,
        out_shape=jax.ShapeDtypeStruct((B, M, 1), jnp.float32),
        grid=(B, C // cot, C // kt),
        in_specs=[
            pl.BlockSpec((None, 3, N, H + 2, W, kt), lambda b, co, k: (b, 0, 0, 0, 0, k)),
            pl.BlockSpec((None, 3, 3, kt, cot),      lambda b, co, k: (b, 0, 0, k, co)),
            pl.BlockSpec((None, 3, cot),             lambda b, co, k: (b, 0, co)),
        ],
        out_specs=pl.BlockSpec((None, M, 1), lambda b, co, k: (b, 0, 0)),
        scratch_shapes=[pltpu.VMEM((M, cot), jnp.float32)],
        compiler_params=pltpu.CompilerParams(
            dimension_semantics=("parallel", "arbitrary", "arbitrary"),
            vmem_limit_bytes=vmem_limit),
    )(xsh, w1_bf, p1)

    # ---- BN2 (batch stats) folded into the logits: tiny per-branch JAX glue ------------
    z2 = z[:, :, 0]                                           # (B, M)
    mu2 = jnp.mean(z2, axis=1, keepdims=True)
    var2 = jnp.mean((z2 - mu2) ** 2, axis=1, keepdims=True)   # biased batch variance
    inv2 = lax.rsqrt(var2 + EPS)
    g2v = g2s[:, :, 0]                                        # (B, 1)
    be2v = be2s[:, :, 0]                                      # (B, 1)
    logits = ((z2 - mu2) * (g2v * inv2) + be2v).T             # (M, B) lane-dense logit slab

    # ---- Pass 3: branch softmax + broadcast multiply (one branch per block) ------------
    out = pl.pallas_call(
        _softmax_mix_kernel,
        out_shape=jax.ShapeDtypeStruct((B, M, C), jnp.float32),
        grid=(B, M // tm_mix),
        in_specs=[
            pl.BlockSpec((tm_mix, B),       lambda b, m: (m, 0)),
            pl.BlockSpec((None, tm_mix, C), lambda b, m: (b, m, 0)),
        ],
        out_specs=pl.BlockSpec((None, tm_mix, C), lambda b, m: (b, m, 0)),
        compiler_params=pltpu.CompilerParams(
            dimension_semantics=("parallel", "parallel"),
            vmem_limit_bytes=vmem_limit),
    )(logits, hflat)

    out_stacked = out.reshape(B, N, H, W, C)
    if not return_nchw:
        return None, out_stacked
    # torch.cat((h1_x, ..., h6_x), 1) in NCHW (boundary glue; skip via return_nchw=False
    # if the consumer accepts channels-last).
    out_nchw = jnp.transpose(out_stacked, (1, 0, 4, 2, 3)).reshape(N, B * C, H, W)
    return out_nchw, out_stacked


# ---------------------------------------------------------------------------
# Pure-JAX reference (faithful to PyTorch, f32, biases included).
# ---------------------------------------------------------------------------
def ref_forward(h_list_nchw, params):
    w1s, b1s, g1s, be1s, w2s, b2s, g2s, be2s = params
    hs = jnp.stack([jnp.transpose(h, (0, 2, 3, 1)) for h in h_list_nchw], axis=0)
    B = hs.shape[0]
    logits = []
    for i in range(B):
        x = hs[i]
        y = lax.conv_general_dilated(
            x, w1s[i], window_strides=(1, 1), padding='SAME',
            dimension_numbers=('NHWC', 'HWIO', 'NHWC')) + b1s[i, 0]
        mu = jnp.mean(y, axis=(0, 1, 2))
        var = jnp.mean((y - mu) ** 2, axis=(0, 1, 2))
        y = (y - mu) / jnp.sqrt(var + EPS) * g1s[i, 0] + be1s[i, 0]
        y = jnp.maximum(y, 0.0)
        z = jnp.einsum('nhwc,c->nhw', y, w2s[i, 0]) + b2s[i, 0, 0]
        mu2 = jnp.mean(z)
        var2 = jnp.mean((z - mu2) ** 2)
        z = (z - mu2) / jnp.sqrt(var2 + EPS) * g2s[i, 0, 0] + be2s[i, 0, 0]
        logits.append(z)
    att = jax.nn.softmax(jnp.stack(logits, 0), axis=0)    # (B,N,H,W)
    return hs * att[..., None]                             # (B,N,H,W,C)


if __name__ == "__main__":
    key = jax.random.PRNGKey(0)
    B = 6
    N, C, H, W = 4, 256, 8, 8        # small stand-in for f_dim=2048; chosen so every grid
                                     # axis has >= 2 steps with the demo tile sizes below

    keys = jax.random.split(key, 10)
    std1 = (2.0 / (C * 9)) ** 0.5    # kaiming_normal_, fan_out, relu (3x3, C outputs)
    std2 = (2.0 / 1.0) ** 0.5        # 1x1 conv, 1 output channel
    w1s = jax.random.normal(keys[0], (B, 3, 3, C, C), jnp.float32) * std1   # HWIO per branch
    b1s = jax.random.normal(keys[1], (B, 1, C), jnp.float32) * 0.1
    g1s = 1.0 + 0.1 * jax.random.normal(keys[2], (B, 1, C), jnp.float32)
    be1s = 0.1 * jax.random.normal(keys[3], (B, 1, C), jnp.float32)
    w2s = jax.random.normal(keys[4], (B, 1, C), jnp.float32) * std2
    b2s = jax.random.normal(keys[5], (B, 1, 1), jnp.float32) * 0.1
    g2s = 1.0 + 0.1 * jax.random.normal(keys[6], (B, 1, 1), jnp.float32)
    be2s = 0.1 * jax.random.normal(keys[7], (B, 1, 1), jnp.float32)
    params = (w1s, b1s, g1s, be1s, w2s, b2s, g2s, be2s)

    h_keys = jax.random.split(keys[8], B)
    h_list = [jax.random.normal(h_keys[i], (N, C, H, W), jnp.float32) for i in range(B)]

    out_nchw, out_stacked = mix_forward(h_list, params, kt=128, cot=128, tm_mix=128)
    out_nchw = jax.block_until_ready(out_nchw)
    assert out_nchw.shape == (N, B * C, H, W)

    ref = ref_forward(h_list, params)
    # bf16 MXU inputs -> slightly loose element tolerance; genuine bugs are O(1).
    assert jnp.allclose(out_stacked, ref, rtol=5e-2, atol=5e-2), "mismatch vs reference"
    assert float(jnp.mean(jnp.abs(out_stacked - ref))) < 5e-3, "mean error too large vs reference"

    print("KERNEL_OK")
</pallas_src>

<mosaic_0001>
module attributes {stable_mosaic.version = 11 : i64} {
  func.func @_conv_bn_proj_kernel(%arg0: i32, %arg1: i32, %arg2: i32, %arg3: memref<1x3x4x10x8x128xbf16, #tpu.memory_space<vmem>>, %arg4: memref<1x3x3x128x128xbf16, #tpu.memory_space<vmem>>, %arg5: memref<1x3x128xf32, #tpu.memory_space<vmem>>, %arg6: memref<1x256x1xf32, #tpu.memory_space<vmem>>, %arg7: memref<256x128xf32, #tpu.memory_space<vmem>>) attributes {dimension_semantics = [#tpu.dimension_semantics<parallel>, #tpu.dimension_semantics<arbitrary>, #tpu.dimension_semantics<arbitrary>], iteration_bounds = array<i64: 6, 2, 2>, scalar_prefetch = 0 : i64, scratch_operands = 1 : i64, tpu.core_type = #tpu.core_type<tc>, window_params = [{transform_indices = @transform_0, window_bounds = array<i64: 1, 3, 4, 10, 8, 128>}, {transform_indices = @transform_1, window_bounds = array<i64: 1, 3, 3, 128, 128>}, {transform_indices = @transform_2, window_bounds = array<i64: 1, 3, 128>}, {transform_indices = @transform_3, window_bounds = array<i64: 1, 256, 1>}]} {
    %c0_i32 = arith.constant 0 : i32
    %0 = arith.cmpi eq, %arg2, %c0_i32 : i32
    %1 = arith.extui %0 : i1 to i32
    %c0_i32_0 = arith.constant 0 : i32
    %2 = arith.cmpi ne, %1, %c0_i32_0 : i32
    scf.if %2 {
      %cst_442 = arith.constant 0.000000e+00 : f32
      %266 = vector.broadcast %cst_442 : f32 to vector<256x128xf32>
      %c0_443 = arith.constant 0 : index
      %c0_444 = arith.constant 0 : index
      %267 = vector.load %arg7[%c0_443, %c0_444] : memref<256x128xf32, #tpu.memory_space<vmem>>, vector<256x128xf32>
      tpu.vector_store %arg7[%c0_443, %c0_444], %266 {strides = array<i32>} : memref<256x128xf32, #tpu.memory_space<vmem>>, vector<256x128xf32>,
    } else {
    }
    %c0 = arith.constant 0 : index
    %c0_1 = arith.constant 0 : index
    %3 = vector.load %arg7[%c0, %c0_1] : memref<256x128xf32, #tpu.memory_space<vmem>>, vector<64x128xf32>
    %c0_2 = arith.constant 0 : index
    %c0_3 = arith.constant 0 : index
    %c0_4 = arith.constant 0 : index
    %c0_5 = arith.constant 0 : index
    %c0_6 = arith.constant 0 : index
    %c0_7 = arith.constant 0 : index
    %4 = vector.load %arg3[%c0_2, %c0_3, %c0_4, %c0_5, %c0_6, %c0_7] : memref<1x3x4x10x8x128xbf16, #tpu.memory_space<vmem>>, vector<1x1x1x8x8x128xbf16>
    %5 = vector.shape_cast %4 : vector<1x1x1x8x8x128xbf16> to vector<8x8x128xbf16>
    %6 = vector.shape_cast %5 : vector<8x8x128xbf16> to vector<64x128xbf16>
    %c0_8 = arith.constant 0 : index
    %c0_9 = arith.constant 0 : index
    %c0_10 = arith.constant 0 : index
    %c0_11 = arith.constant 0 : index
    %c0_12 = arith.constant 0 : index
    %7 = vector.load %arg4[%c0_8, %c0_9, %c0_10, %c0_11, %c0_12] : memref<1x3x3x128x128xbf16, #tpu.memory_space<vmem>>, vector<1x1x1x128x128xbf16>
    %8 = vector.shape_cast %7 : vector<1x1x1x128x128xbf16> to vector<128x128xbf16>
    %cst = arith.constant dense<0.000000e+00> : vector<64x128xf32>
    %9 = tpu.matmul %6, %8, %cst {dimension_numbers = #tpu.dot_dimension_numbers<[1], [0], [0], [1], [0, 0, 1, 1], [], []>} : vector<64x128xbf16>, vector<128x128xbf16>, vector<64x128xf32> -> vector<64x128xf32>
    %10 = arith.addf %3, %9 : vector<64x128xf32>
    %c0_13 = arith.constant 0 : index
    %c1 = arith.constant 1 : index
    %c0_14 = arith.constant 0 : index
    %c0_15 = arith.constant 0 : index
    %c0_16 = arith.constant 0 : index
    %c0_17 = arith.constant 0 : index
    %11 = vector.load %arg3[%c0_13, %c1, %c0_14, %c0_15, %c0_16, %c0_17] : memref<1x3x4x10x8x128xbf16, #tpu.memory_space<vmem>>, vector<1x1x1x8x8x128xbf16>
    %12 = vector.shape_cast %11 : vector<1x1x1x8x8x128xbf16> to vector<8x8x128xbf16>
    %13 = vector.shape_cast %12 : vector<8x8x128xbf16> to vector<64x128xbf16>
    %c0_18 = arith.constant 0 : index
    %c0_19 = arith.constant 0 : index
    %c1_20 = arith.constant 1 : index
    %c0_21 = arith.constant 0 : index
    %c0_22 = arith.constant 0 : index
    %14 = vector.load %arg4[%c0_18, %c0_19, %c1_20, %c0_21, %c0_22] : memref<1x3x3x128x128xbf16, #tpu.memory_space<vmem>>, vector<1x1x1x128x128xbf16>
    %15 = vector.shape_cast %14 : vector<1x1x1x128x128xbf16> to vector<128x128xbf16>
    %cst_23 = arith.constant dense<0.000000e+00> : vector<64x128xf32>
    %16 = tpu.matmul %13, %15, %cst_23 {dimension_numbers = #tpu.dot_dimension_numbers<[1], [0], [0], [1], [0, 0, 1, 1], [], []>} : vector<64x128xbf16>, vector<128x128xbf16>, vector<64x128xf32> -> vector<64x128xf32>
    %17 = arith.addf %10, %16 : vector<64x128xf32>
    %c0_24 = arith.constant 0 : index
    %c2 = arith.constant 2 : index
    %c0_25 = arith.constant 0 : index
    %c0_26 = arith.constant 0 : index
    %c0_27 = arith.constant 0 : index
    %c0_28 = arith.constant 0 : index
    %18 = vector.load %arg3[%c0_24, %c2, %c0_25, %c0_26, %c0_27, %c0_28] : memref<1x3x4x10x8x128xbf16, #tpu.memory_space<vmem>>, vector<1x1x1x8x8x128xbf16>
    %19 = vector.shape_cast %18 : vector<1x1x1x8x8x128xbf16> to vector<8x8x128xbf16>
    %20 = vector.shape_cast %19 : vector<8x8x128xbf16> to vector<64x128xbf16>
    %c0_29 = arith.constant 0 : index
    %c0_30 = arith.constant 0 : index
    %c2_31 = arith.constant 2 : index
    %c0_32 = arith.constant 0 : index
    %c0_33 = arith.constant 0 : index
    %21 = vector.load %arg4[%c0_29, %c0_30, %c2_31, %c0_32, %c0_33] : memref<1x3x3x128x128xbf16, #tpu.memory_space<vmem>>, vector<1x1x1x128x128xbf16>
    %22 = vector.shape_cast %21 : vector<1x1x1x128x128xbf16> to vector<128x128xbf16>
    %cst_34 = arith.constant dense<0.000000e+00> : vector<64x128xf32>
    %23 = tpu.matmul %20, %22, %cst_34 {dimension_numbers = #tpu.dot_dimension_numbers<[1], [0], [0], [1], [0, 0, 1, 1], [], []>} : vector<64x128xbf16>, vector<128x128xbf16>, vector<64x128xf32> -> vector<64x128xf32>
    %24 = arith.addf %17, %23 : vector<64x128xf32>
    %c0_35 = arith.constant 0 : index
    %c0_36 = arith.constant 0 : index
    %c0_37 = arith.constant 0 : index
    %c1_38 = arith.constant 1 : index
    %c0_39 = arith.constant 0 : index
    %c0_40 = arith.constant 0 : index
    %25 = vector.load %arg3[%c0_35, %c0_36, %c0_37, %c1_38, %c0_39, %c0_40] : memref<1x3x4x10x8x128xbf16, #tpu.memory_space<vmem>>, vector<1x1x1x8x8x128xbf16>
    %26 = vector.shape_cast %25 : vector<1x1x1x8x8x128xbf16> to vector<8x8x128xbf16>
    %27 = vector.shape_cast %26 : vector<8x8x128xbf16> to vector<64x128xbf16>
    %c0_41 = arith.constant 0 : index
    %c1_42 = arith.constant 1 : index
    %c0_43 = arith.constant 0 : index
    %c0_44 = arith.constant 0 : index
    %c0_45 = arith.constant 0 : index
    %28 = vector.load %arg4[%c0_41, %c1_42, %c0_43, %c0_44, %c0_45] : memref<1x3x3x128x128xbf16, #tpu.memory_space<vmem>>, vector<1x1x1x128x128xbf16>
    %29 = vector.shape_cast %28 : vector<1x1x1x128x128xbf16> to vector<128x128xbf16>
    %cst_46 = arith.constant dense<0.000000e+00> : vector<64x128xf32>
    %30 = tpu.matmul %27, %29, %cst_46 {dimension_numbers = #tpu.dot_dimension_numbers<[1], [0], [0], [1], [0, 0, 1, 1], [], []>} : vector<64x128xbf16>, vector<128x128xbf16>, vector<64x128xf32> -> vector<64x128xf32>
    %31 = arith.addf %24, %30 : vector<64x128xf32>
    %c0_47 = arith.constant 0 : index
    %c1_48 = arith.constant 1 : index
    %c0_49 = arith.constant 0 : index
    %c1_50 = arith.constant 1 : index
    %c0_51 = arith.constant 0 : index
    %c0_52 = arith.constant 0 : index
    %32 = vector.load %arg3[%c0_47, %c1_48, %c0_49, %c1_50, %c0_51, %c0_52] : memref<1x3x4x10x8x128xbf16, #tpu.memory_space<vmem>>, vector<1x1x1x8x8x128xbf16>
    %33 = vector.shape_cast %32 : vector<1x1x1x8x8x128xbf16> to vector<8x8x128xbf16>
    %34 = vector.shape_cast %33 : vector<8x8x128xbf16> to vector<64x128xbf16>
    %c0_53 = arith.constant 0 : index
    %c1_54 = arith.constant 1 : index
    %c1_55 = arith.constant 1 : index
    %c0_56 = arith.constant 0 : index
    %c0_57 = arith.constant 0 : index
    %35 = vector.load %arg4[%c0_53, %c1_54, %c1_55, %c0_56, %c0_57] : memref<1x3x3x128x128xbf16, #tpu.memory_space<vmem>>, vector<1x1x1x128x128xbf16>
    %36 = vector.shape_cast %35 : vector<1x1x1x128x128xbf16> to vector<128x128xbf16>
    %cst_58 = arith.constant dense<0.000000e+00> : vector<64x128xf32>
    %37 = tpu.matmul %34, %36, %cst_58 {dimension_numbers = #tpu.dot_dimension_numbers<[1], [0], [0], [1], [0, 0, 1, 1], [], []>} : vector<64x128xbf16>, vector<128x128xbf16>, vector<64x128xf32> -> vector<64x128xf32>
    %38 = arith.addf %31, %37 : vector<64x128xf32>
    %c0_59 = arith.constant 0 : index
    %c2_60 = arith.constant 2 : index
    %c0_61 = arith.constant 0 : index
    %c1_62 = arith.constant 1 : index
    %c0_63 = arith.constant 0 : index
    %c0_64 = arith.constant 0 : index
    %39 = vector.load %arg3[%c0_59, %c2_60, %c0_61, %c1_62, %c0_63, %c0_64] : memref<1x3x4x10x8x128xbf16, #tpu.memory_space<vmem>>, vector<1x1x1x8x8x128xbf16>
    %40 = vector.shape_cast %39 : vector<1x1x1x8x8x128xbf16> to vector<8x8x128xbf16>
    %41 = vector.shape_cast %40 : vector<8x8x128xbf16> to vector<64x128xbf16>
    %c0_65 = arith.constant 0 : index
    %c1_66 = arith.constant 1 : index
    %c2_67 = arith.constant 2 : index
    %c0_68 = arith.constant 0 : index
    %c0_69 = arith.constant 0 : index
    %42 = vector.load %arg4[%c0_65, %c1_66, %c2_67, %c0_68, %c0_69] : memref<1x3x3x128x128xbf16, #tpu.memory_space<vmem>>, vector<1x1x1x128x128xbf16>
    %43 = vector.shape_cast %42 : vector<1x1x1x128x128xbf16> to vector<128x128xbf16>
    %cst_70 = arith.constant dense<0.000000e+00> : vector<64x128xf32>
    %44 = tpu.matmul %41, %43, %cst_70 {dimension_numbers = #tpu.dot_dimension_numbers<[1], [0], [0], [1], [0, 0, 1, 1], [], []>} : vector<64x128xbf16>, vector<128x128xbf16>, vector<64x128xf32> -> vector<64x128xf32>
    %45 = arith.addf %38, %44 : vector<64x128xf32>
    %c0_71 = arith.constant 0 : index
    %c0_72 = arith.constant 0 : index
    %c0_73 = arith.constant 0 : index
    %c2_74 = arith.constant 2 : index
    %c0_75 = arith.constant 0 : index
    %c0_76 = arith.constant 0 : index
    %46 = vector.load %arg3[%c0_71, %c0_72, %c0_73, %c2_74, %c0_75, %c0_76] : memref<1x3x4x10x8x128xbf16, #tpu.memory_space<vmem>>, vector<1x1x1x8x8x128xbf16>
    %47 = vector.shape_cast %46 : vector<1x1x1x8x8x128xbf16> to vector<8x8x128xbf16>
    %48 = vector.shape_cast %47 : vector<8x8x128xbf16> to vector<64x128xbf16>
    %c0_77 = arith.constant 0 : index
    %c2_78 = arith.constant 2 : index
    %c0_79 = arith.constant 0 : index
    %c0_80 = arith.constant 0 : index
    %c0_81 = arith.constant 0 : index
    %49 = vector.load %arg4[%c0_77, %c2_78, %c0_79, %c0_80, %c0_81] : memref<1x3x3x128x128xbf16, #tpu.memory_space<vmem>>, vector<1x1x1x128x128xbf16>
    %50 = vector.shape_cast %49 : vector<1x1x1x128x128xbf16> to vector<128x128xbf16>
    %cst_82 = arith.constant dense<0.000000e+00> : vector<64x128xf32>
    %51 = tpu.matmul %48, %50, %cst_82 {dimension_numbers = #tpu.dot_dimension_numbers<[1], [0], [0], [1], [0, 0, 1, 1], [], []>} : vector<64x128xbf16>, vector<128x128xbf16>, vector<64x128xf32> -> vector<64x128xf32>
    %52 = arith.addf %45, %51 : vector<64x128xf32>
    %c0_83 = arith.constant 0 : index
    %c1_84 = arith.constant 1 : index
    %c0_85 = arith.constant 0 : index
    %c2_86 = arith.constant 2 : index
    %c0_87 = arith.constant 0 : index
    %c0_88 = arith.constant 0 : index
    %53 = vector.load %arg3[%c0_83, %c1_84, %c0_85, %c2_86, %c0_87, %c0_88] : memref<1x3x4x10x8x128xbf16, #tpu.memory_space<vmem>>, vector<1x1x1x8x8x128xbf16>
    %54 = vector.shape_cast %53 : vector<1x1x1x8x8x128xbf16> to vector<8x8x128xbf16>
    %55 = vector.shape_cast %54 : vector<8x8x128xbf16> to vector<64x128xbf16>
    %c0_89 = arith.constant 0 : index
    %c2_90 = arith.constant 2 : index
    %c1_91 = arith.constant 1 : index
    %c0_92 = arith.constant 0 : index
    %c0_93 = arith.constant 0 : index
    %56 = vector.load %arg4[%c0_89, %c2_90, %c1_91, %c0_92, %c0_93] : memref<1x3x3x128x128xbf16, #tpu.memory_space<vmem>>, vector<1x1x1x128x128xbf16>
    %57 = vector.shape_cast %56 : vector<1x1x1x128x128xbf16> to vector<128x128xbf16>
    %cst_94 = arith.constant dense<0.000000e+00> : vector<64x128xf32>
    %58 = tpu.matmul %55, %57, %cst_94 {dimension_numbers = #tpu.dot_dimension_numbers<[1], [0], [0], [1], [0, 0, 1, 1], [], []>} : vector<64x128xbf16>, vector<128x128xbf16>, vector<64x128xf32> -> vector<64x128xf32>
    %59 = arith.addf %52, %58 : vector<64x128xf32>
    %c0_95 = arith.constant 0 : index
    %c2_96 = arith.constant 2 : index
    %c0_97 = arith.constant 0 : index
    %c2_98 = arith.constant 2 : index
    %c0_99 = arith.constant 0 : index
    %c0_100 = arith.constant 0 : index
    %60 = vector.load %arg3[%c0_95, %c2_96, %c0_97, %c2_98, %c0_99, %c0_100] : memref<1x3x4x10x8x128xbf16, #tpu.memory_space<vmem>>, vector<1x1x1x8x8x128xbf16>
    %61 = vector.shape_cast %60 : vector<1x1x1x8x8x128xbf16> to vector<8x8x128xbf16>
    %62 = vector.shape_cast %61 : vector<8x8x128xbf16> to vector<64x128xbf16>
    %c0_101 = arith.constant 0 : index
    %c2_102 = arith.constant 2 : index
    %c2_103 = arith.constant 2 : index
    %c0_104 = arith.constant 0 : index
    %c0_105 = arith.constant 0 : index
    %63 = vector.load %arg4[%c0_101, %c2_102, %c2_103, %c0_104, %c0_105] : memref<1x3x3x128x128xbf16, #tpu.memory_space<vmem>>, vector<1x1x1x128x128xbf16>
    %64 = vector.shape_cast %63 : vector<1x1x1x128x128xbf16> to vector<128x128xbf16>
    %cst_106 = arith.constant dense<0.000000e+00> : vector<64x128xf32>
    %65 = tpu.matmul %62, %64, %cst_106 {dimension_numbers = #tpu.dot_dimension_numbers<[1], [0], [0], [1], [0, 0, 1, 1], [], []>} : vector<64x128xbf16>, vector<128x128xbf16>, vector<64x128xf32> -> vector<64x128xf32>
    %66 = arith.addf %59, %65 : vector<64x128xf32>
    %c0_107 = arith.constant 0 : index
    %c0_108 = arith.constant 0 : index
    %67 = vector.load %arg7[%c0_107, %c0_108] : memref<256x128xf32, #tpu.memory_space<vmem>>, vector<64x128xf32>
    tpu.vector_store %arg7[%c0_107, %c0_108], %66 {strides = array<i32>} : memref<256x128xf32, #tpu.memory_space<vmem>>, vector<64x128xf32>,
    %c64 = arith.constant 64 : index
    %c0_109 = arith.constant 0 : index
    %68 = vector.load %arg7[%c64, %c0_109] : memref<256x128xf32, #tpu.memory_space<vmem>>, vector<64x128xf32>
    %c0_110 = arith.constant 0 : index
    %c0_111 = arith.constant 0 : index
    %c1_112 = arith.constant 1 : index
    %c0_113 = arith.constant 0 : index
    %c0_114 = arith.constant 0 : index
    %c0_115 = arith.constant 0 : index
    %69 = vector.load %arg3[%c0_110, %c0_111, %c1_112, %c0_113, %c0_114, %c0_115] : memref<1x3x4x10x8x128xbf16, #tpu.memory_space<vmem>>, vector<1x1x1x8x8x128xbf16>
    %70 = vector.shape_cast %69 : vector<1x1x1x8x8x128xbf16> to vector<8x8x128xbf16>
    %71 = vector.shape_cast %70 : vector<8x8x128xbf16> to vector<64x128xbf16>
    %c0_116 = arith.constant 0 : index
    %c0_117 = arith.constant 0 : index
    %c0_118 = arith.constant 0 : index
    %c0_119 = arith.constant 0 : index
    %c0_120 = arith.constant 0 : index
    %72 = vector.load %arg4[%c0_116, %c0_117, %c0_118, %c0_119, %c0_120] : memref<1x3x3x128x128xbf16, #tpu.memory_space<vmem>>, vector<1x1x1x128x128xbf16>
    %73 = vector.shape_cast %72 : vector<1x1x1x128x128xbf16> to vector<128x128xbf16>
    %cst_121 = arith.constant dense<0.000000e+00> : vector<64x128xf32>
    %74 = tpu.matmul %71, %73, %cst_121 {dimension_numbers = #tpu.dot_dimension_numbers<[1], [0], [0], [1], [0, 0, 1, 1], [], []>} : vector<64x128xbf16>, vector<128x128xbf16>, vector<64x128xf32> -> vector<64x128xf32>
    %75 = arith.addf %68, %74 : vector<64x128xf32>
    %c0_122 = arith.constant 0 : index
    %c1_123 = arith.constant 1 : index
    %c1_124 = arith.constant 1 : index
    %c0_125 = arith.constant 0 : index
    %c0_126 = arith.constant 0 : index
    %c0_127 = arith.constant 0 : index
    %76 = vector.load %arg3[%c0_122, %c1_123, %c1_124, %c0_125, %c0_126, %c0_127] : memref<1x3x4x10x8x128xbf16, #tpu.memory_space<vmem>>, vector<1x1x1x8x8x128xbf16>
    %77 = vector.shape_cast %76 : vector<1x1x1x8x8x128xbf16> to vector<8x8x128xbf16>
    %78 = vector.shape_cast %77 : vector<8x8x128xbf16> to vector<64x128xbf16>
    %c0_128 = arith.constant 0 : index
    %c0_129 = arith.constant 0 : index
    %c1_130 = arith.constant 1 : index
    %c0_131 = arith.constant 0 : index
    %c0_132 = arith.constant 0 : index
    %79 = vector.load %arg4[%c0_128, %c0_129, %c1_130, %c0_131, %c0_132] : memref<1x3x3x128x128xbf16, #tpu.memory_space<vmem>>, vector<1x1x1x128x128xbf16>
    %80 = vector.shape_cast %79 : vector<1x1x1x128x128xbf16> to vector<128x128xbf16>
    %cst_133 = arith.constant dense<0.000000e+00> : vector<64x128xf32>
    %81 = tpu.matmul %78, %80, %cst_133 {dimension_numbers = #tpu.dot_dimension_numbers<[1], [0], [0], [1], [0, 0, 1, 1], [], []>} : vector<64x128xbf16>, vector<128x128xbf16>, vector<64x128xf32> -> vector<64x128xf32>
    %82 = arith.addf %75, %81 : vector<64x128xf32>
    %c0_134 = arith.constant 0 : index
    %c2_135 = arith.constant 2 : index
    %c1_136 = arith.constant 1 : index
    %c0_137 = arith.constant 0 : index
    %c0_138 = arith.constant 0 : index
    %c0_139 = arith.constant 0 : index
    %83 = vector.load %arg3[%c0_134, %c2_135, %c1_136, %c0_137, %c0_138, %c0_139] : memref<1x3x4x10x8x128xbf16, #tpu.memory_space<vmem>>, vector<1x1x1x8x8x128xbf16>
    %84 = vector.shape_cast %83 : vector<1x1x1x8x8x128xbf16> to vector<8x8x128xbf16>
    %85 = vector.shape_cast %84 : vector<8x8x128xbf16> to vector<64x128xbf16>
    %c0_140 = arith.constant 0 : index
    %c0_141 = arith.constant 0 : index
    %c2_142 = arith.constant 2 : index
    %c0_143 = arith.constant 0 : index
    %c0_144 = arith.constant 0 : index
    %86 = vector.load %arg4[%c0_140, %c0_141, %c2_142, %c0_143, %c0_144] : memref<1x3x3x128x128xbf16, #tpu.memory_space<vmem>>, vector<1x1x1x128x128xbf16>
    %87 = vector.shape_cast %86 : vector<1x1x1x128x128xbf16> to vector<128x128xbf16>
    %cst_145 = arith.constant dense<0.000000e+00> : vector<64x128xf32>
    %88 = tpu.matmul %85, %87, %cst_145 {dimension_numbers = #tpu.dot_dimension_numbers<[1], [0], [0], [1], [0, 0, 1, 1], [], []>} : vector<64x128xbf16>, vector<128x128xbf16>, vector<64x128xf32> -> vector<64x128xf32>
    %89 = arith.addf %82, %88 : vector<64x128xf32>
    %c0_146 = arith.constant 0 : index
    %c0_147 = arith.constant 0 : index
    %c1_148 = arith.constant 1 : index
    %c1_149 = arith.constant 1 : index
    %c0_150 = arith.constant 0 : index
    %c0_151 = arith.constant 0 : index
    %90 = vector.load %arg3[%c0_146, %c0_147, %c1_148, %c1_149, %c0_150, %c0_151] : memref<1x3x4x10x8x128xbf16, #tpu.memory_space<vmem>>, vector<1x1x1x8x8x128xbf16>
    %91 = vector.shape_cast %90 : vector<1x1x1x8x8x128xbf16> to vector<8x8x128xbf16>
    %92 = vector.shape_cast %91 : vector<8x8x128xbf16> to vector<64x128xbf16>
    %c0_152 = arith.constant 0 : index
    %c1_153 = arith.constant 1 : index
    %c0_154 = arith.constant 0 : index
    %c0_155 = arith.constant 0 : index
    %c0_156 = arith.constant 0 : index
    %93 = vector.load %arg4[%c0_152, %c1_153, %c0_154, %c0_155, %c0_156] : memref<1x3x3x128x128xbf16, #tpu.memory_space<vmem>>, vector<1x1x1x128x128xbf16>
    %94 = vector.shape_cast %93 : vector<1x1x1x128x128xbf16> to vector<128x128xbf16>
    %cst_157 = arith.constant dense<0.000000e+00> : vector<64x128xf32>
    %95 = tpu.matmul %92, %94, %cst_157 {dimension_numbers = #tpu.dot_dimension_numbers<[1], [0], [0], [1], [0, 0, 1, 1], [], []>} : vector<64x128xbf16>, vector<128x128xbf16>, vector<64x128xf32> -> vector<64x128xf32>
    %96 = arith.addf %89, %95 : vector<64x128xf32>
    %c0_158 = arith.constant 0 : index
    %c1_159 = arith.constant 1 : index
    %c1_160 = arith.constant 1 : index
    %c1_161 = arith.constant 1 : index
    %c0_162 = arith.constant 0 : index
    %c0_163 = arith.constant 0 : index
    %97 = vector.load %arg3[%c0_158, %c1_159, %c1_160, %c1_161, %c0_162, %c0_163] : memref<1x3x4x10x8x128xbf16, #tpu.memory_space<vmem>>, vector<1x1x1x8x8x128xbf16>
    %98 = vector.shape_cast %97 : vector<1x1x1x8x8x128xbf16> to vector<8x8x128xbf16>
    %99 = vector.shape_cast %98 : vector<8x8x128xbf16> to vector<64x128xbf16>
    %c0_164 = arith.constant 0 : index
    %c1_165 = arith.constant 1 : index
    %c1_166 = arith.constant 1 : index
    %c0_167 = arith.constant 0 : index
    %c0_168 = arith.constant 0 : index
    %100 = vector.load %arg4[%c0_164, %c1_165, %c1_166, %c0_167, %c0_168] : memref<1x3x3x128x128xbf16, #tpu.memory_space<vmem>>, vector<1x1x1x128x128xbf16>
    %101 = vector.shape_cast %100 : vector<1x1x1x128x128xbf16> to vector<128x128xbf16>
    %cst_169 = arith.constant dense<0.000000e+00> : vector<64x128xf32>
    %102 = tpu.matmul %99, %101, %cst_169 {dimension_numbers = #tpu.dot_dimension_numbers<[1], [0], [0], [1], [0, 0, 1, 1], [], []>} : vector<64x128xbf16>, vector<128x128xbf16>, vector<64x128xf32> -> vector<64x128xf32>
    %103 = arith.addf %96, %102 : vector<64x128xf32>
    %c0_170 = arith.constant 0 : index
    %c2_171 = arith.constant 2 : index
    %c1_172 = arith.constant 1 : index
    %c1_173 = arith.constant 1 : index
    %c0_174 = arith.constant 0 : index
    %c0_175 = arith.constant 0 : index
    %104 = vector.load %arg3[%c0_170, %c2_171, %c1_172, %c1_173, %c0_174, %c0_175] : memref<1x3x4x10x8x128xbf16, #tpu.memory_space<vmem>>, vector<1x1x1x8x8x128xbf16>
    %105 = vector.shape_cast %104 : vector<1x1x1x8x8x128xbf16> to vector<8x8x128xbf16>
    %106 = vector.shape_cast %105 : vector<8x8x128xbf16> to vector<64x128xbf16>
    %c0_176 = arith.constant 0 : index
    %c1_177 = arith.constant 1 : index
    %c2_178 = arith.constant 2 : index
    %c0_179 = arith.constant 0 : index
    %c0_180 = arith.constant 0 : index
    %107 = vector.load %arg4[%c0_176, %c1_177, %c2_178, %c0_179, %c0_180] : memref<1x3x3x128x128xbf16, #tpu.memory_space<vmem>>, vector<1x1x1x128x128xbf16>
    %108 = vector.shape_cast %107 : vector<1x1x1x128x128xbf16> to vector<128x128xbf16>
    %cst_181 = arith.constant dense<0.000000e+00> : vector<64x128xf32>
    %109 = tpu.matmul %106, %108, %cst_181 {dimension_numbers = #tpu.dot_dimension_numbers<[1], [0], [0], [1], [0, 0, 1, 1], [], []>} : vector<64x128xbf16>, vector<128x128xbf16>, vector<64x128xf32> -> vector<64x128xf32>
    %110 = arith.addf %103, %109 : vector<64x128xf32>
    %c0_182 = arith.constant 0 : index
    %c0_183 = arith.constant 0 : index
    %c1_184 = arith.constant 1 : index
    %c2_185 = arith.constant 2 : index
    %c0_186 = arith.constant 0 : index
    %c0_187 = arith.constant 0 : index
    %111 = vector.load %arg3[%c0_182, %c0_183, %c1_184, %c2_185, %c0_186, %c0_187] : memref<1x3x4x10x8x128xbf16, #tpu.memory_space<vmem>>, vector<1x1x1x8x8x128xbf16>
    %112 = vector.shape_cast %111 : vector<1x1x1x8x8x128xbf16> to vector<8x8x128xbf16>
    %113 = vector.shape_cast %112 : vector<8x8x128xbf16> to vector<64x128xbf16>
    %c0_188 = arith.constant 0 : index
    %c2_189 = arith.constant 2 : index
    %c0_190 = arith.constant 0 : index
    %c0_191 = arith.constant 0 : index
    %c0_192 = arith.constant 0 : index
    %114 = vector.load %arg4[%c0_188, %c2_189, %c0_190, %c0_191, %c0_192] : memref<1x3x3x128x128xbf16, #tpu.memory_space<vmem>>, vector<1x1x1x128x128xbf16>
    %115 = vector.shape_cast %114 : vector<1x1x1x128x128xbf16> to vector<128x128xbf16>
    %cst_193 = arith.constant dense<0.000000e+00> : vector<64x128xf32>
    %116 = tpu.matmul %113, %115, %cst_193 {dimension_numbers = #tpu.dot_dimension_numbers<[1], [0], [0], [1], [0, 0, 1, 1], [], []>} : vector<64x128xbf16>, vector<128x128xbf16>, vector<64x128xf32> -> vector<64x128xf32>
    %117 = arith.addf %110, %116 : vector<64x128xf32>
    %c0_194 = arith.constant 0 : index
    %c1_195 = arith.constant 1 : index
    %c1_196 = arith.constant 1 : index
    %c2_197 = arith.constant 2 : index
    %c0_198 = arith.constant 0 : index
    %c0_199 = arith.constant 0 : index
    %118 = vector.load %arg3[%c0_194, %c1_195, %c1_196, %c2_197, %c0_198, %c0_199] : memref<1x3x4x10x8x128xbf16, #tpu.memory_space<vmem>>, vector<1x1x1x8x8x128xbf16>
    %119 = vector.shape_cast %118 : vector<1x1x1x8x8x128xbf16> to vector<8x8x128xbf16>
    %120 = vector.shape_cast %119 : vector<8x8x128xbf16> to vector<64x128xbf16>
    %c0_200 = arith.constant 0 : index
    %c2_201 = arith.constant 2 : index
    %c1_202 = arith.constant 1 : index
    %c0_203 = arith.constant 0 : index
    %c0_204 = arith.constant 0 : index
    %121 = vector.load %arg4[%c0_200, %c2_201, %c1_202, %c0_203, %c0_204] : memref<1x3x3x128x128xbf16, #tpu.memory_space<vmem>>, vector<1x1x1x128x128xbf16>
    %122 = vector.shape_cast %121 : vector<1x1x1x128x128xbf16> to vector<128x128xbf16>
    %cst_205 = arith.constant dense<0.000000e+00> : vector<64x128xf32>
    %123 = tpu.matmul %120, %122, %cst_205 {dimension_numbers = #tpu.dot_dimension_numbers<[1], [0], [0], [1], [0, 0, 1, 1], [], []>} : vector<64x128xbf16>, vector<128x128xbf16>, vector<64x128xf32> -> vector<64x128xf32>
    %124 = arith.addf %117, %123 : vector<64x128xf32>
    %c0_206 = arith.constant 0 : index
    %c2_207 = arith.constant 2 : index
    %c1_208 = arith.constant 1 : index
    %c2_209 = arith.constant 2 : index
    %c0_210 = arith.constant 0 : index
    %c0_211 = arith.constant 0 : index
    %125 = vector.load %arg3[%c0_206, %c2_207, %c1_208, %c2_209, %c0_210, %c0_211] : memref<1x3x4x10x8x128xbf16, #tpu.memory_space<vmem>>, vector<1x1x1x8x8x128xbf16>
    %126 = vector.shape_cast %125 : vector<1x1x1x8x8x128xbf16> to vector<8x8x128xbf16>
    %127 = vector.shape_cast %126 : vector<8x8x128xbf16> to vector<64x128xbf16>
    %c0_212 = arith.constant 0 : index
    %c2_213 = arith.constant 2 : index
    %c2_214 = arith.constant 2 : index
    %c0_215 = arith.constant 0 : index
    %c0_216 = arith.constant 0 : index
    %128 = vector.load %arg4[%c0_212, %c2_213, %c2_214, %c0_215, %c0_216] : memref<1x3x3x128x128xbf16, #tpu.memory_space<vmem>>, vector<1x1x1x128x128xbf16>
    %129 = vector.shape_cast %128 : vector<1x1x1x128x128xbf16> to vector<128x128xbf16>
    %cst_217 = arith.constant dense<0.000000e+00> : vector<64x128xf32>
    %130 = tpu.matmul %127, %129, %cst_217 {dimension_numbers = #tpu.dot_dimension_numbers<[1], [0], [0], [1], [0, 0, 1, 1], [], []>} : vector<64x128xbf16>, vector<128x128xbf16>, vector<64x128xf32> -> vector<64x128xf32>
    %131 = arith.addf %124, %130 : vector<64x128xf32>
    %c64_218 = arith.constant 64 : index
    %c0_219 = arith.constant 0 : index
    %132 = vector.load %arg7[%c64_218, %c0_219] : memref<256x128xf32, #tpu.memory_space<vmem>>, vector<64x128xf32>
    tpu.vector_store %arg7[%c64_218, %c0_219], %131 {strides = array<i32>} : memref<256x128xf32, #tpu.memory_space<vmem>>, vector<64x128xf32>,
    %c128 = arith.constant 128 : index
    %c0_220 = arith.constant 0 : index
    %133 = vector.load %arg7[%c128, %c0_220] : memref<256x128xf32, #tpu.memory_space<vmem>>, vector<64x128xf32>
    %c0_221 = arith.constant 0 : index
    %c0_222 = arith.constant 0 : index
    %c2_223 = arith.constant 2 : index
    %c0_224 = arith.constant 0 : index
    %c0_225 = arith.constant 0 : index
    %c0_226 = arith.constant 0 : index
    %134 = vector.load %arg3[%c0_221, %c0_222, %c2_223, %c0_224, %c0_225, %c0_226] : memref<1x3x4x10x8x128xbf16, #tpu.memory_space<vmem>>, vector<1x1x1x8x8x128xbf16>
    %135 = vector.shape_cast %134 : vector<1x1x1x8x8x128xbf16> to vector<8x8x128xbf16>
    %136 = vector.shape_cast %135 : vector<8x8x128xbf16> to vector<64x128xbf16>
    %c0_227 = arith.constant 0 : index
    %c0_228 = arith.constant 0 : index
    %c0_229 = arith.constant 0 : index
    %c0_230 = arith.constant 0 : index
    %c0_231 = arith.constant 0 : index
    %137 = vector.load %arg4[%c0_227, %c0_228, %c0_229, %c0_230, %c0_231] : memref<1x3x3x128x128xbf16, #tpu.memory_space<vmem>>, vector<1x1x1x128x128xbf16>
    %138 = vector.shape_cast %137 : vector<1x1x1x128x128xbf16> to vector<128x128xbf16>
    %cst_232 = arith.constant dense<0.000000e+00> : vector<64x128xf32>
    %139 = tpu.matmul %136, %138, %cst_232 {dimension_numbers = #tpu.dot_dimension_numbers<[1], [0], [0], [1], [0, 0, 1, 1], [], []>} : vector<64x128xbf16>, vector<128x128xbf16>, vector<64x128xf32> -> vector<64x128xf32>
    %140 = arith.addf %133, %139 : vector<64x128xf32>
    %c0_233 = arith.constant 0 : index
    %c1_234 = arith.constant 1 : index
    %c2_235 = arith.constant 2 : index
    %c0_236 = arith.constant 0 : index
    %c0_237 = arith.constant 0 : index
    %c0_238 = arith.constant 0 : index
    %141 = vector.load %arg3[%c0_233, %c1_234, %c2_235, %c0_236, %c0_237, %c0_238] : memref<1x3x4x10x8x128xbf16, #tpu.memory_space<vmem>>, vector<1x1x1x8x8x128xbf16>
    %142 = vector.shape_cast %141 : vector<1x1x1x8x8x128xbf16> to vector<8x8x128xbf16>
    %143 = vector.shape_cast %142 : vector<8x8x128xbf16> to vector<64x128xbf16>
    %c0_239 = arith.constant 0 : index
    %c0_240 = arith.constant 0 : index
    %c1_241 = arith.constant 1 : index
    %c0_242 = arith.constant 0 : index
    %c0_243 = arith.constant 0 : index
    %144 = vector.load %arg4[%c0_239, %c0_240, %c1_241, %c0_242, %c0_243] : memref<1x3x3x128x128xbf16, #tpu.memory_space<vmem>>, vector<1x1x1x128x128xbf16>
    %145 = vector.shape_cast %144 : vector<1x1x1x128x128xbf16> to vector<128x128xbf16>
    %cst_244 = arith.constant dense<0.000000e+00> : vector<64x128xf32>
    %146 = tpu.matmul %143, %145, %cst_244 {dimension_numbers = #tpu.dot_dimension_numbers<[1], [0], [0], [1], [0, 0, 1, 1], [], []>} : vector<64x128xbf16>, vector<128x128xbf16>, vector<64x128xf32> -> vector<64x128xf32>
    %147 = arith.addf %140, %146 : vector<64x128xf32>
    %c0_245 = arith.constant 0 : index
    %c2_246 = arith.constant 2 : index
    %c2_247 = arith.constant 2 : index
    %c0_248 = arith.constant 0 : index
    %c0_249 = arith.constant 0 : index
    %c0_250 = arith.constant 0 : index
    %148 = vector.load %arg3[%c0_245, %c2_246, %c2_247, %c0_248, %c0_249, %c0_250] : memref<1x3x4x10x8x128xbf16, #tpu.memory_space<vmem>>, vector<1x1x1x8x8x128xbf16>
    %149 = vector.shape_cast %148 : vector<1x1x1x8x8x128xbf16> to vector<8x8x128xbf16>
    %150 = vector.shape_cast %149 : vector<8x8x128xbf16> to vector<64x128xbf16>
    %c0_251 = arith.constant 0 : index
    %c0_252 = arith.constant 0 : index
    %c2_253 = arith.constant 2 : index
    %c0_254 = arith.constant 0 : index
    %c0_255 = arith.constant 0 : index
    %151 = vector.load %arg4[%c0_251, %c0_252, %c2_253, %c0_254, %c0_255] : memref<1x3x3x128x128xbf16, #tpu.memory_space<vmem>>, vector<1x1x1x128x128xbf16>
    %152 = vector.shape_cast %151 : vector<1x1x1x128x128xbf16> to vector<128x128xbf16>
    %cst_256 = arith.constant dense<0.000000e+00> : vector<64x128xf32>
    %153 = tpu.matmul %150, %152, %cst_256 {dimension_numbers = #tpu.dot_dimension_numbers<[1], [0], [0], [1], [0, 0, 1, 1], [], []>} : vector<64x128xbf16>, vector<128x128xbf16>, vector<64x128xf32> -> vector<64x128xf32>
    %154 = arith.addf %147, %153 : vector<64x128xf32>
    %c0_257 = arith.constant 0 : index
    %c0_258 = arith.constant 0 : index
    %c2_259 = arith.constant 2 : index
    %c1_260 = arith.constant 1 : index
    %c0_261 = arith.constant 0 : index
    %c0_262 = arith.constant 0 : index
    %155 = vector.load %arg3[%c0_257, %c0_258, %c2_259, %c1_260, %c0_261, %c0_262] : memref<1x3x4x10x8x128xbf16, #tpu.memory_space<vmem>>, vector<1x1x1x8x8x128xbf16>
    %156 = vector.shape_cast %155 : vector<1x1x1x8x8x128xbf16> to vector<8x8x128xbf16>
    %157 = vector.shape_cast %156 : vector<8x8x128xbf16> to vector<64x128xbf16>
    %c0_263 = arith.constant 0 : index
    %c1_264 = arith.constant 1 : index
    %c0_265 = arith.constant 0 : index
    %c0_266 = arith.constant 0 : index
    %c0_267 = arith.constant 0 : index
    %158 = vector.load %arg4[%c0_263, %c1_264, %c0_265, %c0_266, %c0_267] : memref<1x3x3x128x128xbf16, #tpu.memory_space<vmem>>, vector<1x1x1x128x128xbf16>
    %159 = vector.shape_cast %158 : vector<1x1x1x128x128xbf16> to vector<128x128xbf16>
    %cst_268 = arith.constant dense<0.000000e+00> : vector<64x128xf32>
    %160 = tpu.matmul %157, %159, %cst_268 {dimension_numbers = #tpu.dot_dimension_numbers<[1], [0], [0], [1], [0, 0, 1, 1], [], []>} : vector<64x128xbf16>, vector<128x128xbf16>, vector<64x128xf32> -> vector<64x128xf32>
    %161 = arith.addf %154, %160 : vector<64x128xf32>
    %c0_269 = arith.constant 0 : index
    %c1_270 = arith.constant 1 : index
    %c2_271 = arith.constant 2 : index
    %c1_272 = arith.constant 1 : index
    %c0_273 = arith.constant 0 : index
    %c0_274 = arith.constant 0 : index
    %162 = vector.load %arg3[%c0_269, %c1_270, %c2_271, %c1_272, %c0_273, %c0_274] : memref<1x3x4x10x8x128xbf16, #tpu.memory_space<vmem>>, vector<1x1x1x8x8x128xbf16>
    %163 = vector.shape_cast %162 : vector<1x1x1x8x8x128xbf16> to vector<8x8x128xbf16>
    %164 = vector.shape_cast %163 : vector<8x8x128xbf16> to vector<64x128xbf16>
    %c0_275 = arith.constant 0 : index
    %c1_276 = arith.constant 1 : index
    %c1_277 = arith.constant 1 : index
    %c0_278 = arith.constant 0 : index
    %c0_279 = arith.constant 0 : index
    %165 = vector.load %arg4[%c0_275, %c1_276, %c1_277, %c0_278, %c0_279] : memref<1x3x3x128x128xbf16, #tpu.memory_space<vmem>>, vector<1x1x1x128x128xbf16>
    %166 = vector.shape_cast %165 : vector<1x1x1x128x128xbf16> to vector<128x128xbf16>
    %cst_280 = arith.constant dense<0.000000e+00> : vector<64x128xf32>
    %167 = tpu.matmul %164, %166, %cst_280 {dimension_numbers = #tpu.dot_dimension_numbers<[1], [0], [0], [1], [0, 0, 1, 1], [], []>} : vector<64x128xbf16>, vector<128x128xbf16>, vector<64x128xf32> -> vector<64x128xf32>
    %168 = arith.addf %161, %167 : vector<64x128xf32>
    %c0_281 = arith.constant 0 : index
    %c2_282 = arith.constant 2 : index
    %c2_283 = arith.constant 2 : index
    %c1_284 = arith.constant 1 : index
    %c0_285 = arith.constant 0 : index
    %c0_286 = arith.constant 0 : index
    %169 = vector.load %arg3[%c0_281, %c2_282, %c2_283, %c1_284, %c0_285, %c0_286] : memref<1x3x4x10x8x128xbf16, #tpu.memory_space<vmem>>, vector<1x1x1x8x8x128xbf16>
    %170 = vector.shape_cast %169 : vector<1x1x1x8x8x128xbf16> to vector<8x8x128xbf16>
    %171 = vector.shape_cast %170 : vector<8x8x128xbf16> to vector<64x128xbf16>
    %c0_287 = arith.constant 0 : index
    %c1_288 = arith.constant 1 : index
    %c2_289 = arith.constant 2 : index
    %c0_290 = arith.constant 0 : index
    %c0_291 = arith.constant 0 : index
    %172 = vector.load %arg4[%c0_287, %c1_288, %c2_289, %c0_290, %c0_291] : memref<1x3x3x128x128xbf16, #tpu.memory_space<vmem>>, vector<1x1x1x128x128xbf16>
    %173 = vector.shape_cast %172 : vector<1x1x1x128x128xbf16> to vector<128x128xbf16>
    %cst_292 = arith.constant dense<0.000000e+00> : vector<64x128xf32>
    %174 = tpu.matmul %171, %173, %cst_292 {dimension_numbers = #tpu.dot_dimension_numbers<[1], [0], [0], [1], [0, 0, 1, 1], [], []>} : vector<64x128xbf16>, vector<128x128xbf16>, vector<64x128xf32> -> vector<64x128xf32>
    %175 = arith.addf %168, %174 : vector<64x128xf32>
    %c0_293 = arith.constant 0 : index
    %c0_294 = arith.constant 0 : index
    %c2_295 = arith.constant 2 : index
    %c2_296 = arith.constant 2 : index
    %c0_297 = arith.constant 0 : index
    %c0_298 = arith.constant 0 : index
    %176 = vector.load %arg3[%c0_293, %c0_294, %c2_295, %c2_296, %c0_297, %c0_298] : memref<1x3x4x10x8x128xbf16, #tpu.memory_space<vmem>>, vector<1x1x1x8x8x128xbf16>
    %177 = vector.shape_cast %176 : vector<1x1x1x8x8x128xbf16> to vector<8x8x128xbf16>
    %178 = vector.shape_cast %177 : vector<8x8x128xbf16> to vector<64x128xbf16>
    %c0_299 = arith.constant 0 : index
    %c2_300 = arith.constant 2 : index
    %c0_301 = arith.constant 0 : index
    %c0_302 = arith.constant 0 : index
    %c0_303 = arith.constant 0 : index
    %179 = vector.load %arg4[%c0_299, %c2_300, %c0_301, %c0_302, %c0_303] : memref<1x3x3x128x128xbf16, #tpu.memory_space<vmem>>, vector<1x1x1x128x128xbf16>
    %180 = vector.shape_cast %179 : vector<1x1x1x128x128xbf16> to vector<128x128xbf16>
    %cst_304 = arith.constant dense<0.000000e+00> : vector<64x128xf32>
    %181 = tpu.matmul %178, %180, %cst_304 {dimension_numbers = #tpu.dot_dimension_numbers<[1], [0], [0], [1], [0, 0, 1, 1], [], []>} : vector<64x128xbf16>, vector<128x128xbf16>, vector<64x128xf32> -> vector<64x128xf32>
    %182 = arith.addf %175, %181 : vector<64x128xf32>
    %c0_305 = arith.constant 0 : index
    %c1_306 = arith.constant 1 : index
    %c2_307 = arith.constant 2 : index
    %c2_308 = arith.constant 2 : index
    %c0_309 = arith.constant 0 : index
    %c0_310 = arith.constant 0 : index
    %183 = vector.load %arg3[%c0_305, %c1_306, %c2_307, %c2_308, %c0_309, %c0_310] : memref<1x3x4x10x8x128xbf16, #tpu.memory_space<vmem>>, vector<1x1x1x8x8x128xbf16>
    %184 = vector.shape_cast %183 : vector<1x1x1x8x8x128xbf16> to vector<8x8x128xbf16>
    %185 = vector.shape_cast %184 : vector<8x8x128xbf16> to vector<64x128xbf16>
    %c0_311 = arith.constant 0 : index
    %c2_312 = arith.constant 2 : index
    %c1_313 = arith.constant 1 : index
    %c0_314 = arith.constant 0 : index
    %c0_315 = arith.constant 0 : index
    %186 = vector.load %arg4[%c0_311, %c2_312, %c1_313, %c0_314, %c0_315] : memref<1x3x3x128x128xbf16, #tpu.memory_space<vmem>>, vector<1x1x1x128x128xbf16>
    %187 = vector.shape_cast %186 : vector<1x1x1x128x128xbf16> to vector<128x128xbf16>
    %cst_316 = arith.constant dense<0.000000e+00> : vector<64x128xf32>
    %188 = tpu.matmul %185, %187, %cst_316 {dimension_numbers = #tpu.dot_dimension_numbers<[1], [0], [0], [1], [0, 0, 1, 1], [], []>} : vector<64x128xbf16>, vector<128x128xbf16>, vector<64x128xf32> -> vector<64x128xf32>
    %189 = arith.addf %182, %188 : vector<64x128xf32>
    %c0_317 = arith.constant 0 : index
    %c2_318 = arith.constant 2 : index
    %c2_319 = arith.constant 2 : index
    %c2_320 = arith.constant 2 : index
    %c0_321 = arith.constant 0 : index
    %c0_322 = arith.constant 0 : index
    %190 = vector.load %arg3[%c0_317, %c2_318, %c2_319, %c2_320, %c0_321, %c0_322] : memref<1x3x4x10x8x128xbf16, #tpu.memory_space<vmem>>, vector<1x1x1x8x8x128xbf16>
    %191 = vector.shape_cast %190 : vector<1x1x1x8x8x128xbf16> to vector<8x8x128xbf16>
    %192 = vector.shape_cast %191 : vector<8x8x128xbf16> to vector<64x128xbf16>
    %c0_323 = arith.constant 0 : index
    %c2_324 = arith.constant 2 : index
    %c2_325 = arith.constant 2 : index
    %c0_326 = arith.constant 0 : index
    %c0_327 = arith.constant 0 : index
    %193 = vector.load %arg4[%c0_323, %c2_324, %c2_325, %c0_326, %c0_327] : memref<1x3x3x128x128xbf16, #tpu.memory_space<vmem>>, vector<1x1x1x128x128xbf16>
    %194 = vector.shape_cast %193 : vector<1x1x1x128x128xbf16> to vector<128x128xbf16>
    %cst_328 = arith.constant dense<0.000000e+00> : vector<64x128xf32>
    %195 = tpu.matmul %192, %194, %cst_328 {dimension_numbers = #tpu.dot_dimension_numbers<[1], [0], [0], [1], [0, 0, 1, 1], [], []>} : vector<64x128xbf16>, vector<128x128xbf16>, vector<64x128xf32> -> vector<64x128xf32>
    %196 = arith.addf %189, %195 : vector<64x128xf32>
    %c128_329 = arith.constant 128 : index
    %c0_330 = arith.constant 0 : index
    %197 = vector.load %arg7[%c128_329, %c0_330] : memref<256x128xf32, #tpu.memory_space<vmem>>, vector<64x128xf32>
    tpu.vector_store %arg7[%c128_329, %c0_330], %196 {strides = array<i32>} : memref<256x128xf32, #tpu.memory_space<vmem>>, vector<64x128xf32>,
    %c192 = arith.constant 192 : index
    %c0_331 = arith.constant 0 : index
    %198 = vector.load %arg7[%c192, %c0_331] : memref<256x128xf32, #tpu.memory_space<vmem>>, vector<64x128xf32>
    %c0_332 = arith.constant 0 : index
    %c0_333 = arith.constant 0 : index
    %c3 = arith.constant 3 : index
    %c0_334 = arith.constant 0 : index
    %c0_335 = arith.constant 0 : index
    %c0_336 = arith.constant 0 : index
    %199 = vector.load %arg3[%c0_332, %c0_333, %c3, %c0_334, %c0_335, %c0_336] : memref<1x3x4x10x8x128xbf16, #tpu.memory_space<vmem>>, vector<1x1x1x8x8x128xbf16>
    %200 = vector.shape_cast %199 : vector<1x1x1x8x8x128xbf16> to vector<8x8x128xbf16>
    %201 = vector.shape_cast %200 : vector<8x8x128xbf16> to vector<64x128xbf16>
    %c0_337 = arith.constant 0 : index
    %c0_338 = arith.constant 0 : index
    %c0_339 = arith.constant 0 : index
    %c0_340 = arith.constant 0 : index
    %c0_341 = arith.constant 0 : index
    %202 = vector.load %arg4[%c0_337, %c0_338, %c0_339, %c0_340, %c0_341] : memref<1x3x3x128x128xbf16, #tpu.memory_space<vmem>>, vector<1x1x1x128x128xbf16>
    %203 = vector.shape_cast %202 : vector<1x1x1x128x128xbf16> to vector<128x128xbf16>
    %cst_342 = arith.constant dense<0.000000e+00> : vector<64x128xf32>
    %204 = tpu.matmul %201, %203, %cst_342 {dimension_numbers = #tpu.dot_dimension_numbers<[1], [0], [0], [1], [0, 0, 1, 1], [], []>} : vector<64x128xbf16>, vector<128x128xbf16>, vector<64x128xf32> -> vector<64x128xf32>
    %205 = arith.addf %198, %204 : vector<64x128xf32>
    %c0_343 = arith.constant 0 : index
    %c1_344 = arith.constant 1 : index
    %c3_345 = arith.constant 3 : index
    %c0_346 = arith.constant 0 : index
    %c0_347 = arith.constant 0 : index
    %c0_348 = arith.constant 0 : index
    %206 = vector.load %arg3[%c0_343, %c1_344, %c3_345, %c0_346, %c0_347, %c0_348] : memref<1x3x4x10x8x128xbf16, #tpu.memory_space<vmem>>, vector<1x1x1x8x8x128xbf16>
    %207 = vector.shape_cast %206 : vector<1x1x1x8x8x128xbf16> to vector<8x8x128xbf16>
    %208 = vector.shape_cast %207 : vector<8x8x128xbf16> to vector<64x128xbf16>
    %c0_349 = arith.constant 0 : index
    %c0_350 = arith.constant 0 : index
    %c1_351 = arith.constant 1 : index
    %c0_352 = arith.constant 0 : index
    %c0_353 = arith.constant 0 : index
    %209 = vector.load %arg4[%c0_349, %c0_350, %c1_351, %c0_352, %c0_353] : memref<1x3x3x128x128xbf16, #tpu.memory_space<vmem>>, vector<1x1x1x128x128xbf16>
    %210 = vector.shape_cast %209 : vector<1x1x1x128x128xbf16> to vector<128x128xbf16>
    %cst_354 = arith.constant dense<0.000000e+00> : vector<64x128xf32>
    %211 = tpu.matmul %208, %210, %cst_354 {dimension_numbers = #tpu.dot_dimension_numbers<[1], [0], [0], [1], [0, 0, 1, 1], [], []>} : vector<64x128xbf16>, vector<128x128xbf16>, vector<64x128xf32> -> vector<64x128xf32>
    %212 = arith.addf %205, %211 : vector<64x128xf32>
    %c0_355 = arith.constant 0 : index
    %c2_356 = arith.constant 2 : index
    %c3_357 = arith.constant 3 : index
    %c0_358 = arith.constant 0 : index
    %c0_359 = arith.constant 0 : index
    %c0_360 = arith.constant 0 : index
    %213 = vector.load %arg3[%c0_355, %c2_356, %c3_357, %c0_358, %c0_359, %c0_360] : memref<1x3x4x10x8x128xbf16, #tpu.memory_space<vmem>>, vector<1x1x1x8x8x128xbf16>
    %214 = vector.shape_cast %213 : vector<1x1x1x8x8x128xbf16> to vector<8x8x128xbf16>
    %215 = vector.shape_cast %214 : vector<8x8x128xbf16> to vector<64x128xbf16>
    %c0_361 = arith.constant 0 : index
    %c0_362 = arith.constant 0 : index
    %c2_363 = arith.constant 2 : index
    %c0_364 = arith.constant 0 : index
    %c0_365 = arith.constant 0 : index
    %216 = vector.load %arg4[%c0_361, %c0_362, %c2_363, %c0_364, %c0_365] : memref<1x3x3x128x128xbf16, #tpu.memory_space<vmem>>, vector<1x1x1x128x128xbf16>
    %217 = vector.shape_cast %216 : vector<1x1x1x128x128xbf16> to vector<128x128xbf16>
    %cst_366 = arith.constant dense<0.000000e+00> : vector<64x128xf32>
    %218 = tpu.matmul %215, %217, %cst_366 {dimension_numbers = #tpu.dot_dimension_numbers<[1], [0], [0], [1], [0, 0, 1, 1], [], []>} : vector<64x128xbf16>, vector<128x128xbf16>, vector<64x128xf32> -> vector<64x128xf32>
    %219 = arith.addf %212, %218 : vector<64x128xf32>
    %c0_367 = arith.constant 0 : index
    %c0_368 = arith.constant 0 : index
    %c3_369 = arith.constant 3 : index
    %c1_370 = arith.constant 1 : index
    %c0_371 = arith.constant 0 : index
    %c0_372 = arith.constant 0 : index
    %220 = vector.load %arg3[%c0_367, %c0_368, %c3_369, %c1_370, %c0_371, %c0_372] : memref<1x3x4x10x8x128xbf16, #tpu.memory_space<vmem>>, vector<1x1x1x8x8x128xbf16>
    %221 = vector.shape_cast %220 : vector<1x1x1x8x8x128xbf16> to vector<8x8x128xbf16>
    %222 = vector.shape_cast %221 : vector<8x8x128xbf16> to vector<64x128xbf16>
    %c0_373 = arith.constant 0 : index
    %c1_374 = arith.constant 1 : index
    %c0_375 = arith.constant 0 : index
    %c0_376 = arith.constant 0 : index
    %c0_377 = arith.constant 0 : index
    %223 = vector.load %arg4[%c0_373, %c1_374, %c0_375, %c0_376, %c0_377] : memref<1x3x3x128x128xbf16, #tpu.memory_space<vmem>>, vector<1x1x1x128x128xbf16>
    %224 = vector.shape_cast %223 : vector<1x1x1x128x128xbf16> to vector<128x128xbf16>
    %cst_378 = arith.constant dense<0.000000e+00> : vector<64x128xf32>
    %225 = tpu.matmul %222, %224, %cst_378 {dimension_numbers = #tpu.dot_dimension_numbers<[1], [0], [0], [1], [0, 0, 1, 1], [], []>} : vector<64x128xbf16>, vector<128x128xbf16>, vector<64x128xf32> -> vector<64x128xf32>
    %226 = arith.addf %219, %225 : vector<64x128xf32>
    %c0_379 = arith.constant 0 : index
    %c1_380 = arith.constant 1 : index
    %c3_381 = arith.constant 3 : index
    %c1_382 = arith.constant 1 : index
    %c0_383 = arith.constant 0 : index
    %c0_384 = arith.constant 0 : index
    %227 = vector.load %arg3[%c0_379, %c1_380, %c3_381, %c1_382, %c0_383, %c0_384] : memref<1x3x4x10x8x128xbf16, #tpu.memory_space<vmem>>, vector<1x1x1x8x8x128xbf16>
    %228 = vector.shape_cast %227 : vector<1x1x1x8x8x128xbf16> to vector<8x8x128xbf16>
    %229 = vector.shape_cast %228 : vector<8x8x128xbf16> to vector<64x128xbf16>
    %c0_385 = arith.constant 0 : index
    %c1_386 = arith.constant 1 : index
    %c1_387 = arith.constant 1 : index
    %c0_388 = arith.constant 0 : index
    %c0_389 = arith.constant 0 : index
    %230 = vector.load %arg4[%c0_385, %c1_386, %c1_387, %c0_388, %c0_389] : memref<1x3x3x128x128xbf16, #tpu.memory_space<vmem>>, vector<1x1x1x128x128xbf16>
    %231 = vector.shape_cast %230 : vector<1x1x1x128x128xbf16> to vector<128x128xbf16>
    %cst_390 = arith.constant dense<0.000000e+00> : vector<64x128xf32>
    %232 = tpu.matmul %229, %231, %cst_390 {dimension_numbers = #tpu.dot_dimension_numbers<[1], [0], [0], [1], [0, 0, 1, 1], [], []>} : vector<64x128xbf16>, vector<128x128xbf16>, vector<64x128xf32> -> vector<64x128xf32>
    %233 = arith.addf %226, %232 : vector<64x128xf32>
    %c0_391 = arith.constant 0 : index
    %c2_392 = arith.constant 2 : index
    %c3_393 = arith.constant 3 : index
    %c1_394 = arith.constant 1 : index
    %c0_395 = arith.constant 0 : index
    %c0_396 = arith.constant 0 : index
    %234 = vector.load %arg3[%c0_391, %c2_392, %c3_393, %c1_394, %c0_395, %c0_396] : memref<1x3x4x10x8x128xbf16, #tpu.memory_space<vmem>>, vector<1x1x1x8x8x128xbf16>
    %235 = vector.shape_cast %234 : vector<1x1x1x8x8x128xbf16> to vector<8x8x128xbf16>
    %236 = vector.shape_cast %235 : vector<8x8x128xbf16> to vector<64x128xbf16>
    %c0_397 = arith.constant 0 : index
    %c1_398 = arith.constant 1 : index
    %c2_399 = arith.constant 2 : index
    %c0_400 = arith.constant 0 : index
    %c0_401 = arith.constant 0 : index
    %237 = vector.load %arg4[%c0_397, %c1_398, %c2_399, %c0_400, %c0_401] : memref<1x3x3x128x128xbf16, #tpu.memory_space<vmem>>, vector<1x1x1x128x128xbf16>
    %238 = vector.shape_cast %237 : vector<1x1x1x128x128xbf16> to vector<128x128xbf16>
    %cst_402 = arith.constant dense<0.000000e+00> : vector<64x128xf32>
    %239 = tpu.matmul %236, %238, %cst_402 {dimension_numbers = #tpu.dot_dimension_numbers<[1], [0], [0], [1], [0, 0, 1, 1], [], []>} : vector<64x128xbf16>, vector<128x128xbf16>, vector<64x128xf32> -> vector<64x128xf32>
    %240 = arith.addf %233, %239 : vector<64x128xf32>
    %c0_403 = arith.constant 0 : index
    %c0_404 = arith.constant 0 : index
    %c3_405 = arith.constant 3 : index
    %c2_406 = arith.constant 2 : index
    %c0_407 = arith.constant 0 : index
    %c0_408 = arith.constant 0 : index
    %241 = vector.load %arg3[%c0_403, %c0_404, %c3_405, %c2_406, %c0_407, %c0_408] : memref<1x3x4x10x8x128xbf16, #tpu.memory_space<vmem>>, vector<1x1x1x8x8x128xbf16>
    %242 = vector.shape_cast %241 : vector<1x1x1x8x8x128xbf16> to vector<8x8x128xbf16>
    %243 = vector.shape_cast %242 : vector<8x8x128xbf16> to vector<64x128xbf16>
    %c0_409 = arith.constant 0 : index
    %c2_410 = arith.constant 2 : index
    %c0_411 = arith.constant 0 : index
    %c0_412 = arith.constant 0 : index
    %c0_413 = arith.constant 0 : index
    %244 = vector.load %arg4[%c0_409, %c2_410, %c0_411, %c0_412, %c0_413] : memref<1x3x3x128x128xbf16, #tpu.memory_space<vmem>>, vector<1x1x1x128x128xbf16>
    %245 = vector.shape_cast %244 : vector<1x1x1x128x128xbf16> to vector<128x128xbf16>
    %cst_414 = arith.constant dense<0.000000e+00> : vector<64x128xf32>
    %246 = tpu.matmul %243, %245, %cst_414 {dimension_numbers = #tpu.dot_dimension_numbers<[1], [0], [0], [1], [0, 0, 1, 1], [], []>} : vector<64x128xbf16>, vector<128x128xbf16>, vector<64x128xf32> -> vector<64x128xf32>
    %247 = arith.addf %240, %246 : vector<64x128xf32>
    %c0_415 = arith.constant 0 : index
    %c1_416 = arith.constant 1 : index
    %c3_417 = arith.constant 3 : index
    %c2_418 = arith.constant 2 : index
    %c0_419 = arith.constant 0 : index
    %c0_420 = arith.constant 0 : index
    %248 = vector.load %arg3[%c0_415, %c1_416, %c3_417, %c2_418, %c0_419, %c0_420] : memref<1x3x4x10x8x128xbf16, #tpu.memory_space<vmem>>, vector<1x1x1x8x8x128xbf16>
    %249 = vector.shape_cast %248 : vector<1x1x1x8x8x128xbf16> to vector<8x8x128xbf16>
    %250 = vector.shape_cast %249 : vector<8x8x128xbf16> to vector<64x128xbf16>
    %c0_421 = arith.constant 0 : index
    %c2_422 = arith.constant 2 : index
    %c1_423 = arith.constant 1 : index
    %c0_424 = arith.constant 0 : index
    %c0_425 = arith.constant 0 : index
    %251 = vector.load %arg4[%c0_421, %c2_422, %c1_423, %c0_424, %c0_425] : memref<1x3x3x128x128xbf16, #tpu.memory_space<vmem>>, vector<1x1x1x128x128xbf16>
    %252 = vector.shape_cast %251 : vector<1x1x1x128x128xbf16> to vector<128x128xbf16>
    %cst_426 = arith.constant dense<0.000000e+00> : vector<64x128xf32>
    %253 = tpu.matmul %250, %252, %cst_426 {dimension_numbers = #tpu.dot_dimension_numbers<[1], [0], [0], [1], [0, 0, 1, 1], [], []>} : vector<64x128xbf16>, vector<128x128xbf16>, vector<64x128xf32> -> vector<64x128xf32>
    %254 = arith.addf %247, %253 : vector<64x128xf32>
    %c0_427 = arith.constant 0 : index
    %c2_428 = arith.constant 2 : index
    %c3_429 = arith.constant 3 : index
    %c2_430 = arith.constant 2 : index
    %c0_431 = arith.constant 0 : index
    %c0_432 = arith.constant 0 : index
    %255 = vector.load %arg3[%c0_427, %c2_428, %c3_429, %c2_430, %c0_431, %c0_432] : memref<1x3x4x10x8x128xbf16, #tpu.memory_space<vmem>>, vector<1x1x1x8x8x128xbf16>
    %256 = vector.shape_cast %255 : vector<1x1x1x8x8x128xbf16> to vector<8x8x128xbf16>
    %257 = vector.shape_cast %256 : vector<8x8x128xbf16> to vector<64x128xbf16>
    %c0_433 = arith.constant 0 : index
    %c2_434 = arith.constant 2 : index
    %c2_435 = arith.constant 2 : index
    %c0_436 = arith.constant 0 : index
    %c0_437 = arith.constant 0 : index
    %258 = vector.load %arg4[%c0_433, %c2_434, %c2_435, %c0_436, %c0_437] : memref<1x3x3x128x128xbf16, #tpu.memory_space<vmem>>, vector<1x1x1x128x128xbf16>
    %259 = vector.shape_cast %258 : vector<1x1x1x128x128xbf16> to vector<128x128xbf16>
    %cst_438 = arith.constant dense<0.000000e+00> : vector<64x128xf32>
    %260 = tpu.matmul %257, %259, %cst_438 {dimension_numbers = #tpu.dot_dimension_numbers<[1], [0], [0], [1], [0, 0, 1, 1], [], []>} : vector<64x128xbf16>, vector<128x128xbf16>, vector<64x128xf32> -> vector<64x128xf32>
    %261 = arith.addf %254, %260 : vector<64x128xf32>
    %c192_439 = arith.constant 192 : index
    %c0_440 = arith.constant 0 : index
    %262 = vector.load %arg7[%c192_439, %c0_440] : memref<256x128xf32, #tpu.memory_space<vmem>>, vector<64x128xf32>
    tpu.vector_store %arg7[%c192_439, %c0_440], %261 {strides = array<i32>} : memref<256x128xf32, #tpu.memory_space<vmem>>, vector<64x128xf32>,
    %c1_i32 = arith.constant 1 : i32
    %263 = arith.cmpi eq, %arg2, %c1_i32 : i32
    %264 = arith.extui %263 : i1 to i32
    %c0_i32_441 = arith.constant 0 : i32
    %265 = arith.cmpi ne, %264, %c0_i32_441 : i32
    scf.if %265 {
      %c0_442 = arith.constant 0 : index
      %c0_443 = arith.constant 0 : index
      %266 = vector.load %arg7[%c0_442, %c0_443] : memref<256x128xf32, #tpu.memory_space<vmem>>, vector<256x128xf32>
      %cst_444 = arith.constant dense<0.000000e+00> : vector<128xf32>
      %267 = vector.multi_reduction <add>, %266, %cst_444 [0] : vector<256x128xf32> to vector<128xf32>
      %268 = vector.shape_cast %267 : vector<128xf32> to vector<1x128xf32>
      %cst_445 = arith.constant 3.906250e-03 : f32
      %269 = vector.broadcast %cst_445 : f32 to vector<1x128xf32>
      %270 = arith.mulf %268, %269 : vector<1x128xf32>
      %271 = vector.broadcast %270 : vector<1x128xf32> to vector<256x128xf32>
      %272 = arith.subf %266, %271 : vector<256x128xf32>
      %273 = arith.mulf %272, %272 : vector<256x128xf32>
      %cst_446 = arith.constant dense<0.000000e+00> : vector<128xf32>
      %274 = vector.multi_reduction <add>, %273, %cst_446 [0] : vector<256x128xf32> to vector<128xf32>
      %275 = vector.shape_cast %274 : vector<128xf32> to vector<1x128xf32>
      %cst_447 = arith.constant 3.906250e-03 : f32
      %276 = vector.broadcast %cst_447 : f32 to vector<1x128xf32>
      %277 = arith.mulf %275, %276 : vector<1x128xf32>
      %c0_448 = arith.constant 0 : index
      %c0_449 = arith.constant 0 : index
      %c0_450 = arith.constant 0 : index
      %278 = vector.load %arg5[%c0_448, %c0_449, %c0_450] : memref<1x3x128xf32, #tpu.memory_space<vmem>>, vector<1x1x128xf32>
      %279 = vector.shape_cast %278 : vector<1x1x128xf32> to vector<1x128xf32>
      %cst_451 = arith.constant 9.99999974E-6 : f32
      %280 = vector.broadcast %cst_451 : f32 to vector<1x128xf32>
      %281 = arith.addf %277, %280 : vector<1x128xf32>
      %282 = math.rsqrt %281 : vector<1x128xf32>
      %283 = arith.mulf %279, %282 : vector<1x128xf32>
      %284 = vector.broadcast %283 : vector<1x128xf32> to vector<256x128xf32>
      %285 = arith.mulf %272, %284 : vector<256x128xf32>
      %c0_452 = arith.constant 0 : index
      %c1_453 = arith.constant 1 : index
      %c0_454 = arith.constant 0 : index
      %286 = vector.load %arg5[%c0_452, %c1_453, %c0_454] : memref<1x3x128xf32, #tpu.memory_space<vmem>>, vector<1x1x128xf32>
      %287 = vector.shape_cast %286 : vector<1x1x128xf32> to vector<1x128xf32>
      %288 = vector.broadcast %287 : vector<1x128xf32> to vector<256x128xf32>
      %289 = arith.addf %285, %288 : vector<256x128xf32>
      %cst_455 = arith.constant 0.000000e+00 : f32
      %290 = vector.broadcast %cst_455 : f32 to vector<256x128xf32>
      %291 = arith.maximumf %289, %290 : vector<256x128xf32>
      %c0_456 = arith.constant 0 : index
      %c2_457 = arith.constant 2 : index
      %c0_458 = arith.constant 0 : index
      %292 = vector.load %arg5[%c0_456, %c2_457, %c0_458] : memref<1x3x128xf32, #tpu.memory_space<vmem>>, vector<1x1x128xf32>
      %293 = vector.shape_cast %292 : vector<1x1x128xf32> to vector<1x128xf32>
      %294 = vector.broadcast %293 : vector<1x128xf32> to vector<256x128xf32>
      %295 = arith.mulf %291, %294 : vector<256x128xf32>
      %cst_459 = arith.constant dense<0.000000e+00> : vector<256xf32>
      %296 = vector.multi_reduction <add>, %295, %cst_459 [1] : vector<256x128xf32> to vector<256xf32>
      %297 = vector.shape_cast %296 : vector<256xf32> to vector<256x1xf32>
      %c0_i32_460 = arith.constant 0 : i32
      %298 = arith.cmpi eq, %arg1, %c0_i32_460 : i32
      %299 = arith.extui %298 : i1 to i32
      %c0_i32_461 = arith.constant 0 : i32
      %300 = arith.cmpi ne, %299, %c0_i32_461 : i32
      scf.if %300 {
        %c0_464 = arith.constant 0 : index
        %c0_465 = arith.constant 0 : index
        %c0_466 = arith.constant 0 : index
        %304 = vector.load %arg6[%c0_464, %c0_465, %c0_466] : memref<1x256x1xf32, #tpu.memory_space<vmem>>, vector<1x256x1xf32>
        %305 = vector.shape_cast %304 : vector<1x256x1xf32> to vector<256x1xf32>
        %306 = vector.shape_cast %297 : vector<256x1xf32> to vector<1x256x1xf32>
        tpu.vector_store %arg6[%c0_464, %c0_465, %c0_466], %306 {strides = array<i32>} : memref<1x256x1xf32, #tpu.memory_space<vmem>>, vector<1x256x1xf32>,
      } else {
      }
      %c0_i32_462 = arith.constant 0 : i32
      %301 = arith.cmpi sgt, %arg1, %c0_i32_462 : i32
      %302 = arith.extui %301 : i1 to i32
      %c0_i32_463 = arith.constant 0 : i32
      %303 = arith.cmpi ne, %302, %c0_i32_463 : i32
      scf.if %303 {
        %c0_464 = arith.constant 0 : index
        %c0_465 = arith.constant 0 : index
        %c0_466 = arith.constant 0 : index
        %304 = vector.load %arg6[%c0_464, %c0_465, %c0_466] : memref<1x256x1xf32, #tpu.memory_space<vmem>>, vector<1x256x1xf32>
        %305 = vector.shape_cast %304 : vector<1x256x1xf32> to vector<256x1xf32>
        %306 = arith.addf %305, %297 : vector<256x1xf32>
        %c0_467 = arith.constant 0 : index
        %c0_468 = arith.constant 0 : index
        %c0_469 = arith.constant 0 : index
        %307 = vector.load %arg6[%c0_467, %c0_468, %c0_469] : memref<1x256x1xf32, #tpu.memory_space<vmem>>, vector<1x256x1xf32>
        %308 = vector.shape_cast %307 : vector<1x256x1xf32> to vector<256x1xf32>
        %309 = vector.shape_cast %306 : vector<256x1xf32> to vector<1x256x1xf32>
        tpu.vector_store %arg6[%c0_467, %c0_468, %c0_469], %309 {strides = array<i32>} : memref<1x256x1xf32, #tpu.memory_space<vmem>>, vector<1x256x1xf32>,
      } else {
      }
    } else {
    }
    return
  }
  func.func @transform_0(%arg0: i32, %arg1: i32, %arg2: i32) -> (i32, i32, i32, i32, i32, i32) {
    %c0_i32 = arith.constant 0 : i32
    %c0_i32_0 = arith.constant 0 : i32
    %c0_i32_1 = arith.constant 0 : i32
    %c0_i32_2 = arith.constant 0 : i32
    %c0_i32_3 = arith.constant 0 : i32
    return %arg0, %c0_i32, %c0_i32_0, %c0_i32_1, %c0_i32_2, %arg2 : i32, i32, i32, i32, i32, i32
  }
  func.func @transform_1(%arg0: i32, %arg1: i32, %arg2: i32) -> (i32, i32, i32, i32, i32) {
    %c0_i32 = arith.constant 0 : i32
    %c0_i32_0 = arith.constant 0 : i32
    %c0_i32_1 = arith.constant 0 : i32
    return %arg0, %c0_i32, %c0_i32_0, %arg2, %arg1 : i32, i32, i32, i32, i32
  }
  func.func @transform_2(%arg0: i32, %arg1: i32, %arg2: i32) -> (i32, i32, i32) {
    %c0_i32 = arith.constant 0 : i32
    %c0_i32_0 = arith.constant 0 : i32
    return %arg0, %c0_i32, %arg1 : i32, i32, i32
  }
  func.func @transform_3(%arg0: i32, %arg1: i32, %arg2: i32) -> (i32, i32, i32) {
    %c0_i32 = arith.constant 0 : i32
    %c0_i32_0 = arith.constant 0 : i32
    %c0_i32_1 = arith.constant 0 : i32
    return %arg0, %c0_i32, %c0_i32_0 : i32, i32, i32
  }
}

</mosaic_0001>

<llo_original>
// kernel: tpu_custom_call.1
$region0: #{tpu_custom_call.1}
  #allocation0 [shape = 'u32[]', space=smem, size = 0x4, offset = 0x4, fixed_abs, tag = 'smem constant byte address 0x4 - core index']
  #allocation1 [shape = 'u32[72,128]{1,0:T(1,128)}', space=vmem, size = 0x9000, scoped, tag = 'internal scratch']
  #allocation2 [shape = 'f32[256,128]{1,0:T(8,128)}', space=vmem, size = 0x20000, scoped, tag = 'scratch operand']
  #allocation8 [shape = 's32[]', space=sflag, size = 0x4, offset = 0, fixed_abs, tag = 'sflag constant byte address 0x0 - dummy sync flag']
  %s0 = inlined_call_operand.hbm [shape: bf16[6,3,4,10,8,256], index: 0, kind: input, shape index: {}]
  %s1 = inlined_call_operand.hbm [shape: bf16[6,3,3,256,256], index: 1, kind: input, shape index: {}]
  %s2 = inlined_call_operand.hbm [shape: f32[6,3,256], index: 2, kind: input, shape index: {}]
  %s3 = inlined_call_operand.vmem [shape: f32[6,256,1], index: 3, kind: output, shape index: {}]
  %s4 = sld [smem:[#allocation0]]
  $region73: #{tpu_custom_call.1} parent=0
    _
  %s6 = ssub.s32 1, %s4
  %s7 = scalar_select 0, %s6, %s4
  $region1: #{tpu_custom_call.1} parent=0
    #allocation3 [shape = 'u8[491520]{0}', space=vmem, size = 0x78000, scoped, tag = 'input window, operand 0']
    #allocation4 [shape = 's32[2]{0}', space=sflag, size = 0x8, scoped, tag = 'scoped memory for tpu_custom_call.1']
    #allocation5 [shape = 'u8[589824]{0}', space=vmem, size = 0x90000, scoped, tag = 'input window, operand 1']
    #allocation6 [shape = 's32[2]{0}', space=sflag, size = 0x8, scoped, tag = 'scoped memory for tpu_custom_call.1']
    #allocation7 [shape = 'u8[4096]{0}', space=vmem, size = 0x1000, scoped, tag = 'input window, operand 2']
    %8 = vsyncpa [#allocation4], 0
    %s9 = scalar_lea.sflag [#allocation4], 1
    %10 = vsyncpa %s9, 0
    %11 = vsyncpa [#allocation6], 0
    %s12 = scalar_lea.sflag [#allocation6], 1
    %13 = vsyncpa %s12, 0
    loop: start=0, step=1, limit=26
    $region2: #{tpu_custom_call.1} parent=1 // loop_pre_header
      _
    $region3: #{tpu_custom_call.1} parent=1 // loop_header
      %s15 = sphi 0, %s19
      %p16 = scmp.ge.s32.totalorder %s15, 26
      %s22 = sphi 0, %s41
      %s23 = sphi 0, %s37
      %s24 = sphi 0, %s33
      %s25 = sphi 0, %s22
      %s26 = sphi 0, %s23
      %s27 = sphi 0, %s24
      %s28 = sphi 0, %s25
      %s29 = sphi 0, %s26
      %s30 = sphi 0, %s27
      %s46 = sphi 0, %s48
      %s49 = sphi 0, %s46
      %s50 = sphi 0, %s49
      %s66 = sphi 0, %s50
      %s76 = sphi 0, %s78
      %s79 = sphi 0, %s76
      %s80 = sphi 0, %s79
      %s96 = sphi 0, %s80
      %s104 = sphi 0, %s106
      %s107 = sphi 0, %s104
      %s108 = sphi 0, %s107
      %s124 = sphi 0, %s108
      %s130 = sphi 0, %s132
      %s133 = sphi 0, %s130
      %s134 = sphi 0, %s133
      %s150 = sphi 0, %s134
    $region4: #{tpu_custom_call.1} parent=1 // loop_header_branch
      %18 = sbr.rel (%p16) target = $region8
    $region5: #{tpu_custom_call.1} parent=1 // loop_body
      %s20 = ssub.s32 %s15, 1
      %s21 = ssub.s32 %s15, 2
      %s31 = sadd.s32 1, %s24
      %p32 = scmp.ge.s32.totalorder %s31, 2
      %s33 = scalar_select %p32, 0, %s31
      %s34 = sadd.s32 1, %s23
      %s35 = scalar_select %p32, %s34, %s23
      %p36 = scmp.ge.s32.totalorder %s35, 2
      %s37 = scalar_select %p36, 0, %s35
      %s38 = sadd.s32 1, %s22
      %s39 = scalar_select %p36, %s38, %s22
      %p40 = scmp.ge.s32.totalorder %s39, 6
      %s41 = scalar_select %p40, 0, %s39
      %s42 = ssub.s32 %s22, %s41
      %s43 = ssub.s32 %s24, %s33
      %s44 = sor.u32 %s42, %s43
      %p45 = scmp.eq.s32.totalorder %s44, 0
      %s47 = sadd.s32 %s46, 1
      %s48 = scalar_select %p45, %s46, %s47
      %p51 = pneg %p45
      %p52 = scmp.eq.s32.totalorder %s15, 23
      %p53 = por %p51, %p52
      %p54 = scmp.ne.s32.totalorder %s46, %s49
      %p55 = scmp.eq.s32.totalorder %s15, 0
      %p56 = por %p54, %p55
      %p57 = scmp.ne.s32.totalorder %s46, %s49
      %p58 = scmp.eq.s32.totalorder %s20, 23
      %p59 = por %p57, %p58
      %p60 = scmp.ne.s32.totalorder %s49, %s50
      %p61 = scmp.eq.s32.totalorder %s20, 0
      %p62 = por %p60, %p61
      %p63 = scmp.ne.s32.totalorder %s49, %s50
      %p64 = scmp.eq.s32.totalorder %s21, 23
      %p65 = por %p63, %p64
      %p67 = scmp.ne.s32.totalorder %s50, %s66
      %p68 = scmp.eq.s32.totalorder %s21, 0
      %p69 = por %p67, %p68
      %s70 = ssub.s32 %s22, %s41
      %s71 = ssub.s32 %s24, %s33
      %s72 = sor.u32 %s70, %s71
      %s73 = ssub.s32 %s23, %s37
      %s74 = sor.u32 %s72, %s73
      %p75 = scmp.eq.s32.totalorder %s74, 0
      %s77 = sadd.s32 %s76, 1
      %s78 = scalar_select %p75, %s76, %s77
      %p81 = pneg %p75
      %p82 = scmp.eq.s32.totalorder %s15, 23
      %p83 = por %p81, %p82
      %p84 = scmp.ne.s32.totalorder %s76, %s79
      %p85 = scmp.eq.s32.totalorder %s15, 0
      %p86 = por %p84, %p85
      %p87 = scmp.ne.s32.totalorder %s76, %s79
      %p88 = scmp.eq.s32.totalorder %s20, 23
      %p89 = por %p87, %p88
      %p90 = scmp.ne.s32.totalorder %s79, %s80
      %p91 = scmp.eq.s32.totalorder %s20, 0
      %p92 = por %p90, %p91
      %p93 = scmp.ne.s32.totalorder %s79, %s80
      %p94 = scmp.eq.s32.totalorder %s21, 23
      %p95 = por %p93, %p94
      %p97 = scmp.ne.s32.totalorder %s80, %s96
      %p98 = scmp.eq.s32.totalorder %s21, 0
      %p99 = por %p97, %p98
      %s100 = ssub.s32 %s22, %s41
      %s101 = ssub.s32 %s23, %s37
      %s102 = sor.u32 %s100, %s101
      %p103 = scmp.eq.s32.totalorder %s102, 0
      %s105 = sadd.s32 %s104, 1
      %s106 = scalar_select %p103, %s104, %s105
      %p109 = pneg %p103
      %p110 = scmp.eq.s32.totalorder %s15, 23
      %p111 = por %p109, %p110
      %p112 = scmp.ne.s32.totalorder %s104, %s107
      %p113 = scmp.eq.s32.totalorder %s15, 0
      %p114 = por %p112, %p113
      %p115 = scmp.ne.s32.totalorder %s104, %s107
      %p116 = scmp.eq.s32.totalorder %s20, 23
      %p117 = por %p115, %p116
      %p118 = scmp.ne.s32.totalorder %s107, %s108
      %p119 = scmp.eq.s32.totalorder %s20, 0
      %p120 = por %p118, %p119
      %p121 = scmp.ne.s32.totalorder %s107, %s108
      %p122 = scmp.eq.s32.totalorder %s21, 23
      %p123 = por %p121, %p122
      %p125 = scmp.ne.s32.totalorder %s108, %s124
      %p126 = scmp.eq.s32.totalorder %s21, 0
      %p127 = por %p125, %p126
      %s128 = ssub.s32 %s22, %s41
      %p129 = scmp.eq.s32.totalorder %s128, 0
      %s131 = sadd.s32 %s130, 1
      %s132 = scalar_select %p129, %s130, %s131
      %p135 = pneg %p129
      %p136 = scmp.eq.s32.totalorder %s15, 23
      %p137 = por %p135, %p136
      %p138 = scmp.ne.s32.totalorder %s130, %s133
      %p139 = scmp.eq.s32.totalorder %s15, 0
      %p140 = por %p138, %p139
      %p141 = scmp.ne.s32.totalorder %s130, %s133
      %p142 = scmp.eq.s32.totalorder %s20, 23
      %p143 = por %p141, %p142
      %p144 = scmp.ne.s32.totalorder %s133, %s134
      %p145 = scmp.eq.s32.totalorder %s20, 0
      %p146 = por %p144, %p145
      %p147 = scmp.ne.s32.totalorder %s133, %s134
      %p148 = scmp.eq.s32.totalorder %s21, 23
      %p149 = por %p147, %p148
      %p151 = scmp.ne.s32.totalorder %s134, %s150
      %p152 = scmp.eq.s32.totalorder %s21, 0
      %p153 = por %p151, %p152
      %p154 = scmp.le.s32.totalorder 1, %s15
      %p155 = scmp.lt.s32.totalorder %s15, 25
      %p156 = pnand %p154, %p155
      %p157 = pneg %p156
      // Predicated region
      $region9: #{tpu_custom_call.1} parent=5 // pred_check
        _
      $region10: #{tpu_custom_call.1} parent=5 // pred_check_branch
        %159 = sbr.rel (%p156) target = $region12
      $region11: #{tpu_custom_call.1} parent=5 // pred_region
        %s160 = ssub.s32 %s15, 1
      $region12: #{tpu_custom_call.1} parent=5 // pred_fallthru
        _
      %p161 = scmp.lt.s32.totalorder %s15, 24
      // Predicated region
      $region13: #{tpu_custom_call.1} parent=5 // pred_check
        %p162 = pneg %p161
      $region14: #{tpu_custom_call.1} parent=5 // pred_check_branch
        %164 = sbr.rel (%p162) target = $region16
      $region15: #{tpu_custom_call.1} parent=5 // pred_region
        // Predicated region
        $region17: #{tpu_custom_call.1} parent=15 // pred_check
          %p165 = pneg %p56
        $region18: #{tpu_custom_call.1} parent=15 // pred_check_branch
          %167 = sbr.rel (%p165) target = $region20
        $region19: #{tpu_custom_call.1} parent=15 // pred_region
          %s168 = sand.u32 %s46, 1
          %s169 = scalar_lea.sflag [#allocation4], %s168
          %s170 = sand.u32 %s46, 1
          %s171 = smul.addr %s170, 480
          %s172 = scalar_lea.vmem [#allocation3], %s171
          %174 = vsyncadd %s169, 0
          %s175 = smul.addr %s22, 240
          %s176 = sadd.s32 %s24, %s175
          %s177 = smul.addr %s176, 4
          %s178 = scalar_lea.hbm %s0, %s177
          %s179 = sshll.u32 %s178, 4
          %s180 = int_to_ptr.hbm [resolvable:$true] %s179
          %s181 = sshll.u32 %s172, 4
          %s182 = int_to_ptr.vmem [resolvable:$true] %s181
          %187 = dma.hbm_to_vmem [thread:$0]  %s180, 7680, %s182, %s169, 128, 64, 4
        $region20: #{tpu_custom_call.1} parent=15 // pred_fallthru
          _
        // Predicated region
        $region21: #{tpu_custom_call.1} parent=15 // pred_check
          %p188 = pneg %p86
        $region22: #{tpu_custom_call.1} parent=15 // pred_check_branch
          %190 = sbr.rel (%p188) target = $region24
        $region23: #{tpu_custom_call.1} parent=15 // pred_region
          #allocation9 [shape = 'u32[6]{0}', space=smem, size = 0x18, scoped, tag = 'DMA stride descriptor']
          %s191 = sand.u32 %s15, 1
          %s192 = scalar_lea.sflag [#allocation6], %s191
          %s193 = sand.u32 %s76, 1
          %s194 = smul.addr %s193, 576
          %s195 = scalar_lea.vmem [#allocation5], %s194
          %s196 = smul.u32 16, %s24
          %198 = vsyncadd %s192, 0
          %s199 = smul.addr %s196, 2
          %s200 = sadd.s32 %s23, %s199
          %s201 = smul.addr %s22, 576
          %s202 = sadd.s32 %s200, %s201
          %s203 = smul.addr %s202, 4
          %s204 = scalar_lea.hbm %s1, %s203
          %s206 = sshll.u32 1, 14
          %s207 = sxor.u32 4294967295, %s206
          %s209 = sld [smem:[#allocation0]]
          %s210 = sadd.s32 2, %s209
          %s212 = sshll.u32 7, 26
          %s213 = sxor.u32 4294967295, %s212
          %s214 = sand.u32 0, %s213
          %s215 = sshll.u32 %s210, 26
          %s216 = sor.u32 %s214, %s215
          %s217 = sshll.u32 %s204, 4
          %s218 = int_to_ptr.hbm [resolvable:$true] %s217
          %s219 = sshll.u32 %s195, 4
          %s220 = int_to_ptr.vmem [resolvable:$true] %s219
          %226 = sst [smem:[#allocation9]] 4096
          %s227 = scalar_lea.smem [#allocation9], 1
          %228 = sst [smem:[%s227]] 1024
          %s229 = scalar_lea.smem [#allocation9], 2
          %230 = sst [smem:[%s229]] 16
          %s231 = scalar_lea.smem [#allocation9], 3
          %232 = sst [smem:[%s231]] 128
          %s233 = scalar_lea.smem [#allocation9], 4
          %234 = sst [smem:[%s233]] 64
          %s235 = scalar_lea.smem [#allocation9], 5
          %236 = sst [smem:[%s235]] 4
          %238 = dma.general %s218, 9216, %s220, %s192, [#allocation8], [#allocation9], %s216, 0
        $region24: #{tpu_custom_call.1} parent=15 // pred_fallthru
          _
        // Predicated region
        $region25: #{tpu_custom_call.1} parent=15 // pred_check
          %p239 = pneg %p114
        $region26: #{tpu_custom_call.1} parent=15 // pred_check_branch
          %241 = sbr.rel (%p239) target = $region28
        $region27: #{tpu_custom_call.1} parent=15 // pred_region
          %s242 = sand.u32 %s15, 1
          %s243 = scalar_lea.sflag [#allocation6], %s242
          %s244 = sand.u32 %s104, 1
          %s245 = smul.addr %s244, 4
          %s246 = scalar_lea.vmem [#allocation7], %s245
          %248 = vsyncadd %s243, 0
          %s249 = smul.addr %s22, 2
          %s250 = sadd.s32 %s23, %s249
          %s251 = smul.addr %s250, 4
          %s252 = scalar_lea.hbm %s2, %s251
          %s254 = sshll.u32 %s252, 4
          %s255 = int_to_ptr.hbm [resolvable:$true] %s254
          %s256 = sshll.u32 %s246, 4
          %s257 = int_to_ptr.vmem [resolvable:$true] %s256
          %259 = dma.hbm_to_vmem [thread:$0]  %s255, 64, %s257, %s243
        $region28: #{tpu_custom_call.1} parent=15 // pred_fallthru
          _
      $region16: #{tpu_custom_call.1} parent=5 // pred_fallthru
        _
      %p260 = scmp.le.s32.totalorder 1, %s15
      %p261 = scmp.lt.s32.totalorder %s15, 25
      %p262 = pnand %p260, %p261
      %p263 = pneg %p262
      // Predicated region
      $region29: #{tpu_custom_call.1} parent=5 // pred_check
        _
      $region30: #{tpu_custom_call.1} parent=5 // pred_check_branch
        %265 = sbr.rel (%p262) target = $region32
      $region31: #{tpu_custom_call.1} parent=5 // pred_region
        %s266 = ssub.s32 %s15, 1
        %s267 = sand.u32 %s49, 1
        %s268 = scalar_lea.sflag [#allocation4], %s267
        %s269 = sand.u32 %s49, 1
        %s270 = smul.addr %s269, 480
        %s271 = scalar_lea.vmem [#allocation3], %s270
        // Predicated region
        $region33: #{tpu_custom_call.1} parent=31 // pred_check
          %p272 = pneg %p62
        $region34: #{tpu_custom_call.1} parent=31 // pred_check_branch
          %274 = sbr.rel (%p272) target = $region36
        $region35: #{tpu_custom_call.1} parent=31 // pred_region
          %276 = dma.done %s268, 7680
        $region36: #{tpu_custom_call.1} parent=31 // pred_fallthru
          _
        %s277 = sand.u32 %s20, 1
        %s278 = scalar_lea.sflag [#allocation6], %s277
        %s279 = sand.u32 %s79, 1
        %s280 = smul.addr %s279, 576
        %s281 = scalar_lea.vmem [#allocation5], %s280
        // Predicated region
        $region37: #{tpu_custom_call.1} parent=31 // pred_check
          %p282 = pneg %p92
        $region38: #{tpu_custom_call.1} parent=31 // pred_check_branch
          %284 = sbr.rel (%p282) target = $region40
        $region39: #{tpu_custom_call.1} parent=31 // pred_region
          %286 = dma.done %s278, 9216
        $region40: #{tpu_custom_call.1} parent=31 // pred_fallthru
          _
        %s287 = sand.u32 %s20, 1
        %s288 = scalar_lea.sflag [#allocation6], %s287
        %s289 = sand.u32 %s107, 1
        %s290 = smul.addr %s289, 4
        %s291 = scalar_lea.vmem [#allocation7], %s290
        // Predicated region
        $region41: #{tpu_custom_call.1} parent=31 // pred_check
          %p292 = pneg %p120
        $region42: #{tpu_custom_call.1} parent=31 // pred_check_branch
          %294 = sbr.rel (%p292) target = $region44
        $region43: #{tpu_custom_call.1} parent=31 // pred_region
          %296 = dma.done %s288, 64
        $region44: #{tpu_custom_call.1} parent=31 // pred_fallthru
          _
        %s297 = sand.u32 %s49, 1
        %s298 = scalar_lea.sflag [#allocation4], %s297
        %s299 = sand.u32 %s49, 1
        %s300 = smul.addr %s299, 480
        %s301 = scalar_lea.vmem [#allocation3], %s300
        %p302 = pneg %p62
        %p303 = pneg %p59
        %s304 = sand.u32 %s20, 1
        %s305 = scalar_lea.sflag [#allocation6], %s304
        %s306 = sand.u32 %s79, 1
        %s307 = smul.addr %s306, 576
        %s308 = scalar_lea.vmem [#allocation5], %s307
        %p309 = pneg %p92
        %p310 = pneg %p89
        %s311 = sand.u32 %s20, 1
        %s312 = scalar_lea.sflag [#allocation6], %s311
        %s313 = sand.u32 %s107, 1
        %s314 = smul.addr %s313, 4
        %s315 = scalar_lea.vmem [#allocation7], %s314
        %p316 = pneg %p120
        %p317 = pneg %p117
        %p318 = pneg %p146
        %p319 = pneg %p143
        %p320 = scmp.lt.s32.totalorder %s25, 5
        %s321 = scalar_select %p320, %s25, 5
        %s322 = smul.addr %s321, 32
        %s323 = smul.addr %s322, 8
        %s324 = scalar_lea.vmem %s3, %s323
        %s325 = smul.u32 16, %s27
        %p326 = scmp.lt.s32.totalorder %s25, 5
        %s327 = scalar_select %p326, %s25, 5
        %s328 = smul.addr %s327, 32
        %s329 = smul.addr %s328, 8
        %s330 = scalar_lea.vmem %s3, %s329
        %p331 = scmp.eq.s32.totalorder %s27, 0
        // Predicated region
        $region45: #{tpu_custom_call.1} parent=31 // pred_check
          %p332 = pneg %p331
        $region46: #{tpu_custom_call.1} parent=31 // pred_check_branch
          %334 = sbr.rel (%p332) target = $region48
        $region47: #{tpu_custom_call.1} parent=31 // pred_region
          %335 = vst [vmem:[#allocation2] sm:$0xff] 0.0
          %336 = vst [vmem:[#allocation2 + $0x8] sm:$0xff] 0.0
          %337 = vst [vmem:[#allocation2 + $0x10] sm:$0xff] 0.0
          %338 = vst [vmem:[#allocation2 + $0x18] sm:$0xff] 0.0
          %339 = vst [vmem:[#allocation2 + $0x20] sm:$0xff] 0.0
          %340 = vst [vmem:[#allocation2 + $0x28] sm:$0xff] 0.0
          %341 = vst [vmem:[#allocation2 + $0x30] sm:$0xff] 0.0
          %342 = vst [vmem:[#allocation2 + $0x38] sm:$0xff] 0.0
          %343 = vst [vmem:[#allocation2 + $0x40] sm:$0xff] 0.0
          %344 = vst [vmem:[#allocation2 + $0x48] sm:$0xff] 0.0
          %345 = vst [vmem:[#allocation2 + $0x50] sm:$0xff] 0.0
          %346 = vst [vmem:[#allocation2 + $0x58] sm:$0xff] 0.0
          %347 = vst [vmem:[#allocation2 + $0x60] sm:$0xff] 0.0
          %348 = vst [vmem:[#allocation2 + $0x68] sm:$0xff] 0.0
          %349 = vst [vmem:[#allocation2 + $0x70] sm:$0xff] 0.0
          %350 = vst [vmem:[#allocation2 + $0x78] sm:$0xff] 0.0
          %351 = vst [vmem:[#allocation2 + $0x80] sm:$0xff] 0.0
          %352 = vst [vmem:[#allocation2 + $0x88] sm:$0xff] 0.0
          %353 = vst [vmem:[#allocation2 + $0x90] sm:$0xff] 0.0
          %354 = vst [vmem:[#allocation2 + $0x98] sm:$0xff] 0.0
          %355 = vst [vmem:[#allocation2 + $0xa0] sm:$0xff] 0.0
          %356 = vst [vmem:[#allocation2 + $0xa8] sm:$0xff] 0.0
          %357 = vst [vmem:[#allocation2 + $0xb0] sm:$0xff] 0.0
          %358 = vst [vmem:[#allocation2 + $0xb8] sm:$0xff] 0.0
          %359 = vst [vmem:[#allocation2 + $0xc0] sm:$0xff] 0.0
          %360 = vst [vmem:[#allocation2 + $0xc8] sm:$0xff] 0.0
          %361 = vst [vmem:[#allocation2 + $0xd0] sm:$0xff] 0.0
          %362 = vst [vmem:[#allocation2 + $0xd8] sm:$0xff] 0.0
          %363 = vst [vmem:[#allocation2 + $0xe0] sm:$0xff] 0.0
          %364 = vst [vmem:[#allocation2 + $0xe8] sm:$0xff] 0.0
          %365 = vst [vmem:[#allocation2 + $0xf0] sm:$0xff] 0.0
          %366 = vst [vmem:[#allocation2 + $0xf8] sm:$0xff] 0.0
        $region48: #{tpu_custom_call.1} parent=31 // pred_fallthru
          _
        %v367 = vld [vmem:[#allocation2] sm:$0xff]
        %v368 = vld [vmem:[#allocation2 + $0x8] sm:$0xff]
        %v369 = vld [vmem:[#allocation2 + $0x10] sm:$0xff]
        %v370 = vld [vmem:[#allocation2 + $0x18] sm:$0xff]
        %v371 = vld [vmem:[#allocation2 + $0x20] sm:$0xff]
        %v372 = vld [vmem:[#allocation2 + $0x28] sm:$0xff]
        %v373 = vld [vmem:[#allocation2 + $0x30] sm:$0xff]
        %v374 = vld [vmem:[#allocation2 + $0x38] sm:$0xff]
        %v375 = vld [vmem:[%s271] sm:$0xf]
        %v376 = vld [vmem:[%s271 + $0x4] sm:$0xf]
        %v377 = vld [vmem:[%s271 + $0x8] sm:$0xf]
        %v378 = vld [vmem:[%s271 + $0xc] sm:$0xf]
        %v379 = vld [vmem:[%s271 + $0x10] sm:$0xf]
        %v380 = vld [vmem:[%s271 + $0x14] sm:$0xf]
        %v381 = vld [vmem:[%s271 + $0x18] sm:$0xf]
        %v382 = vld [vmem:[%s271 + $0x1c] sm:$0xf]
        %v383 = vld [vmem:[%s281] sm:$0xf]
        %v384 = vld [vmem:[%s281 + $0x4] sm:$0xf]
        %v385 = vld [vmem:[%s281 + $0x8] sm:$0xf]
        %v386 = vld [vmem:[%s281 + $0xc] sm:$0xf]
        %v387 = vld [vmem:[%s281 + $0x10] sm:$0xf]
        %v388 = vld [vmem:[%s281 + $0x14] sm:$0xf]
        %v389 = vld [vmem:[%s281 + $0x18] sm:$0xf]
        %v390 = vld [vmem:[%s281 + $0x1c] sm:$0xf]
        %v391 = vld [vmem:[%s281 + $0x20] sm:$0xf]
        %v392 = vld [vmem:[%s281 + $0x24] sm:$0xf]
        %v393 = vld [vmem:[%s281 + $0x28] sm:$0xf]
        %v394 = vld [vmem:[%s281 + $0x2c] sm:$0xf]
        %v395 = vld [vmem:[%s281 + $0x30] sm:$0xf]
        %v396 = vld [vmem:[%s281 + $0x34] sm:$0xf]
        %v397 = vld [vmem:[%s281 + $0x38] sm:$0xf]
        %v398 = vld [vmem:[%s281 + $0x3c] sm:$0xf]
        %v407 = vunpack.c.l.b16 %v375
        %v408 = vunpack.c.l.b16 %v376
        %v409 = vunpack.c.l.b16 %v377
        %v410 = vunpack.c.l.b16 %v378
        %v411 = vunpack.c.l.b16 %v379
        %v412 = vunpack.c.l.b16 %v380
        %v413 = vunpack.c.l.b16 %v381
        %v414 = vunpack.c.l.b16 %v382
        %v415 = vpack.c.b16 %v408, %v407
        %v416 = vpack.c.b16 %v410, %v409
        %v417 = vpack.c.b16 %v412, %v411
        %v418 = vpack.c.b16 %v414, %v413
        %v439 = vunpack.c.l.b16 %v383
        %v440 = vunpack.c.l.b16 %v384
        %v441 = vunpack.c.l.b16 %v385
        %v442 = vunpack.c.l.b16 %v386
        %v443 = vunpack.c.l.b16 %v387
        %v444 = vunpack.c.l.b16 %v388
        %v445 = vunpack.c.l.b16 %v389
        %v446 = vunpack.c.l.b16 %v390
        %v447 = vunpack.c.l.b16 %v391
        %v448 = vunpack.c.l.b16 %v392
        %v449 = vunpack.c.l.b16 %v393
        %v450 = vunpack.c.l.b16 %v394
        %v451 = vunpack.c.l.b16 %v395
        %v452 = vunpack.c.l.b16 %v396
        %v453 = vunpack.c.l.b16 %v397
        %v454 = vunpack.c.l.b16 %v398
        %v455 = vpack.c.b16 %v440, %v439
        %v456 = vpack.c.b16 %v442, %v441
        %v457 = vpack.c.b16 %v444, %v443
        %v458 = vpack.c.b16 %v446, %v445
        %v459 = vpack.c.b16 %v448, %v447
        %v460 = vpack.c.b16 %v450, %v449
        %v461 = vpack.c.b16 %v452, %v451
        %v462 = vpack.c.b16 %v454, %v453
        %471 = vmatpush.bf16.msra.mxu0 %v462
        %472 = vmatpush.bf16.msra.mxu0 %v461
        %473 = vmatpush.bf16.msra.mxu0 %v460
        %474 = vmatpush.bf16.msra.mxu0 %v459
        %475 = vmatpush.bf16.msra.mxu0 %v458
        %476 = vmatpush.bf16.msra.mxu0 %v457
        %477 = vmatpush.bf16.msra.mxu0 %v456
        %478 = vmatpush.bf16.msra.mxu0 %v455
        %479 = vmatmul.bf16.gmra.mxu0 %v415
        %v480 = vpop.f32.mrf.mxu0
        %v481 = vadd.f32 0.0, %v480
        %v482 = vpop.f32.mrf.mxu0
        %v483 = vadd.f32 0.0, %v482
        %484 = vmatmul.bf16.gmra.mxu0 %v416
        %v485 = vpop.f32.mrf.mxu0
        %v486 = vadd.f32 0.0, %v485
        %v487 = vpop.f32.mrf.mxu0
        %v488 = vadd.f32 0.0, %v487
        %489 = vmatmul.bf16.gmra.mxu0 %v417
        %v490 = vpop.f32.mrf.mxu0
        %v491 = vadd.f32 0.0, %v490
        %v492 = vpop.f32.mrf.mxu0
        %v493 = vadd.f32 0.0, %v492
        %494 = vmatmul.bf16.gmra.mxu0 %v418
        %v495 = vpop.f32.mrf.mxu0
        %v496 = vadd.f32 0.0, %v495
        %v497 = vpop.f32.mrf.mxu0
        %v498 = vadd.f32 0.0, %v497
        %499 = vdwg.mxu0
        %v500 = vadd.f32 %v367, %v481
        %v501 = vadd.f32 %v368, %v483
        %v502 = vadd.f32 %v369, %v486
        %v503 = vadd.f32 %v370, %v488
        %v504 = vadd.f32 %v371, %v491
        %v505 = vadd.f32 %v372, %v493
        %v506 = vadd.f32 %v373, %v496
        %v507 = vadd.f32 %v374, %v498
        %s508 = scalar_lea.vmem %s271, 160 [#allocation3]
        %v509 = vld [vmem:[%s508] sm:$0xf]
        %v510 = vld [vmem:[%s508 + $0x4] sm:$0xf]
        %v511 = vld [vmem:[%s508 + $0x8] sm:$0xf]
        %v512 = vld [vmem:[%s508 + $0xc] sm:$0xf]
        %v513 = vld [vmem:[%s508 + $0x10] sm:$0xf]
        %v514 = vld [vmem:[%s508 + $0x14] sm:$0xf]
        %v515 = vld [vmem:[%s508 + $0x18] sm:$0xf]
        %v516 = vld [vmem:[%s508 + $0x1c] sm:$0xf]
        %s517 = scalar_lea.vmem %s281, 64 [#allocation5]
        %v518 = vld [vmem:[%s517] sm:$0xf]
        %v519 = vld [vmem:[%s517 + $0x4] sm:$0xf]
        %v520 = vld [vmem:[%s517 + $0x8] sm:$0xf]
        %v521 = vld [vmem:[%s517 + $0xc] sm:$0xf]
        %v522 = vld [vmem:[%s517 + $0x10] sm:$0xf]
        %v523 = vld [vmem:[%s517 + $0x14] sm:$0xf]
        %v524 = vld [vmem:[%s517 + $0x18] sm:$0xf]
        %v525 = vld [vmem:[%s517 + $0x1c] sm:$0xf]
        %v526 = vld [vmem:[%s517 + $0x20] sm:$0xf]
        %v527 = vld [vmem:[%s517 + $0x24] sm:$0xf]
        %v528 = vld [vmem:[%s517 + $0x28] sm:$0xf]
        %v529 = vld [vmem:[%s517 + $0x2c] sm:$0xf]
        %v530 = vld [vmem:[%s517 + $0x30] sm:$0xf]
        %v531 = vld [vmem:[%s517 + $0x34] sm:$0xf]
        %v532 = vld [vmem:[%s517 + $0x38] sm:$0xf]
        %v533 = vld [vmem:[%s517 + $0x3c] sm:$0xf]
        %v542 = vunpack.c.l.b16 %v509
        %v543 = vunpack.c.l.b16 %v510
        %v544 = vunpack.c.l.b16 %v511
        %v545 = vunpack.c.l.b16 %v512
        %v546 = vunpack.c.l.b16 %v513
        %v547 = vunpack.c.l.b16 %v514
        %v548 = vunpack.c.l.b16 %v515
        %v549 = vunpack.c.l.b16 %v516
        %v550 = vpack.c.b16 %v543, %v542
        %v551 = vpack.c.b16 %v545, %v544
        %v552 = vpack.c.b16 %v547, %v546
        %v553 = vpack.c.b16 %v549, %v548
        %v574 = vunpack.c.l.b16 %v518
        %v575 = vunpack.c.l.b16 %v519
        %v576 = vunpack.c.l.b16 %v520
        %v577 = vunpack.c.l.b16 %v521
        %v578 = vunpack.c.l.b16 %v522
        %v579 = vunpack.c.l.b16 %v523
        %v580 = vunpack.c.l.b16 %v524
        %v581 = vunpack.c.l.b16 %v525
        %v582 = vunpack.c.l.b16 %v526
        %v583 = vunpack.c.l.b16 %v527
        %v584 = vunpack.c.l.b16 %v528
        %v585 = vunpack.c.l.b16 %v529
        %v586 = vunpack.c.l.b16 %v530
        %v587 = vunpack.c.l.b16 %v531
        %v588 = vunpack.c.l.b16 %v532
        %v589 = vunpack.c.l.b16 %v533
        %v590 = vpack.c.b16 %v575, %v574
        %v591 = vpack.c.b16 %v577, %v576
        %v592 = vpack.c.b16 %v579, %v578
        %v593 = vpack.c.b16 %v581, %v580
        %v594 = vpack.c.b16 %v583, %v582
        %v595 = vpack.c.b16 %v585, %v584
        %v596 = vpack.c.b16 %v587, %v586
        %v597 = vpack.c.b16 %v589, %v588
        %606 = vmatpush.bf16.msra.mxu0 %v597
        %607 = vmatpush.bf16.msra.mxu0 %v596
        %608 = vmatpush.bf16.msra.mxu0 %v595
        %609 = vmatpush.bf16.msra.mxu0 %v594
        %610 = vmatpush.bf16.msra.mxu0 %v593
        %611 = vmatpush.bf16.msra.mxu0 %v592
        %612 = vmatpush.bf16.msra.mxu0 %v591
        %613 = vmatpush.bf16.msra.mxu0 %v590
        %614 = vmatmul.bf16.gmra.mxu0 %v550
        %v615 = vpop.f32.mrf.mxu0
        %v616 = vadd.f32 0.0, %v615
        %v617 = vpop.f32.mrf.mxu0
        %v618 = vadd.f32 0.0, %v617
        %619 = vmatmul.bf16.gmra.mxu0 %v551
        %v620 = vpop.f32.mrf.mxu0
        %v621 = vadd.f32 0.0, %v620
        %v622 = vpop.f32.mrf.mxu0
        %v623 = vadd.f32 0.0, %v622
        %624 = vmatmul.bf16.gmra.mxu0 %v552
        %v625 = vpop.f32.mrf.mxu0
        %v626 = vadd.f32 0.0, %v625
        %v627 = vpop.f32.mrf.mxu0
        %v628 = vadd.f32 0.0, %v627
        %629 = vmatmul.bf16.gmra.mxu0 %v553
        %v630 = vpop.f32.mrf.mxu0
        %v631 = vadd.f32 0.0, %v630
        %v632 = vpop.f32.mrf.mxu0
        %v633 = vadd.f32 0.0, %v632
        %634 = vdwg.mxu0
        %v635 = vadd.f32 %v500, %v616
        %v636 = vadd.f32 %v501, %v618
        %v637 = vadd.f32 %v502, %v621
        %v638 = vadd.f32 %v503, %v623
        %v639 = vadd.f32 %v504, %v626
        %v640 = vadd.f32 %v505, %v628
        %v641 = vadd.f32 %v506, %v631
        %v642 = vadd.f32 %v507, %v633
        %s643 = scalar_lea.vmem %s271, 320 [#allocation3]
        %v644 = vld [vmem:[%s643] sm:$0xf]
        %v645 = vld [vmem:[%s643 + $0x4] sm:$0xf]
        %v646 = vld [vmem:[%s643 + $0x8] sm:$0xf]
        %v647 = vld [vmem:[%s643 + $0xc] sm:$0xf]
        %v648 = vld [vmem:[%s643 + $0x10] sm:$0xf]
        %v649 = vld [vmem:[%s643 + $0x14] sm:$0xf]
        %v650 = vld [vmem:[%s643 + $0x18] sm:$0xf]
        %v651 = vld [vmem:[%s643 + $0x1c] sm:$0xf]
        %s652 = scalar_lea.vmem %s281, 128 [#allocation5]
        %v653 = vld [vmem:[%s652] sm:$0xf]
        %v654 = vld [vmem:[%s652 + $0x4] sm:$0xf]
        %v655 = vld [vmem:[%s652 + $0x8] sm:$0xf]
        %v656 = vld [vmem:[%s652 + $0xc] sm:$0xf]
        %v657 = vld [vmem:[%s652 + $0x10] sm:$0xf]
        %v658 = vld [vmem:[%s652 + $0x14] sm:$0xf]
        %v659 = vld [vmem:[%s652 + $0x18] sm:$0xf]
        %v660 = vld [vmem:[%s652 + $0x1c] sm:$0xf]
        %v661 = vld [vmem:[%s652 + $0x20] sm:$0xf]
        %v662 = vld [vmem:[%s652 + $0x24] sm:$0xf]
        %v663 = vld [vmem:[%s652 + $0x28] sm:$0xf]
        %v664 = vld [vmem:[%s652 + $0x2c] sm:$0xf]
        %v665 = vld [vmem:[%s652 + $0x30] sm:$0xf]
        %v666 = vld [vmem:[%s652 + $0x34] sm:$0xf]
        %v667 = vld [vmem:[%s652 + $0x38] sm:$0xf]
        %v668 = vld [vmem:[%s652 + $0x3c] sm:$0xf]
        %v677 = vunpack.c.l.b16 %v644
        %v678 = vunpack.c.l.b16 %v645
        %v679 = vunpack.c.l.b16 %v646
        %v680 = vunpack.c.l.b16 %v647
        %v681 = vunpack.c.l.b16 %v648
        %v682 = vunpack.c.l.b16 %v649
        %v683 = vunpack.c.l.b16 %v650
        %v684 = vunpack.c.l.b16 %v651
        %v685 = vpack.c.b16 %v678, %v677
        %v686 = vpack.c.b16 %v680, %v679
        %v687 = vpack.c.b16 %v682, %v681
        %v688 = vpack.c.b16 %v684, %v683
        %v709 = vunpack.c.l.b16 %v653
        %v710 = vunpack.c.l.b16 %v654
        %v711 = vunpack.c.l.b16 %v655
        %v712 = vunpack.c.l.b16 %v656
        %v713 = vunpack.c.l.b16 %v657
        %v714 = vunpack.c.l.b16 %v658
        %v715 = vunpack.c.l.b16 %v659
        %v716 = vunpack.c.l.b16 %v660
        %v717 = vunpack.c.l.b16 %v661
        %v718 = vunpack.c.l.b16 %v662
        %v719 = vunpack.c.l.b16 %v663
        %v720 = vunpack.c.l.b16 %v664
        %v721 = vunpack.c.l.b16 %v665
        %v722 = vunpack.c.l.b16 %v666
        %v723 = vunpack.c.l.b16 %v667
        %v724 = vunpack.c.l.b16 %v668
        %v725 = vpack.c.b16 %v710, %v709
        %v726 = vpack.c.b16 %v712, %v711
        %v727 = vpack.c.b16 %v714, %v713
        %v728 = vpack.c.b16 %v716, %v715
        %v729 = vpack.c.b16 %v718, %v717
        %v730 = vpack.c.b16 %v720, %v719
        %v731 = vpack.c.b16 %v722, %v721
        %v732 = vpack.c.b16 %v724, %v723
        %741 = vmatpush.bf16.msra.mxu0 %v732
        %742 = vmatpush.bf16.msra.mxu0 %v731
        %743 = vmatpush.bf16.msra.mxu0 %v730
        %744 = vmatpush.bf16.msra.mxu0 %v729
        %745 = vmatpush.bf16.msra.mxu0 %v728
        %746 = vmatpush.bf16.msra.mxu0 %v727
        %747 = vmatpush.bf16.msra.mxu0 %v726
        %748 = vmatpush.bf16.msra.mxu0 %v725
        %749 = vmatmul.bf16.gmra.mxu0 %v685
        %v750 = vpop.f32.mrf.mxu0
        %v751 = vadd.f32 0.0, %v750
        %v752 = vpop.f32.mrf.mxu0
        %v753 = vadd.f32 0.0, %v752
        %754 = vmatmul.bf16.gmra.mxu0 %v686
        %v755 = vpop.f32.mrf.mxu0
        %v756 = vadd.f32 0.0, %v755
        %v757 = vpop.f32.mrf.mxu0
        %v758 = vadd.f32 0.0, %v757
        %759 = vmatmul.bf16.gmra.mxu0 %v687
        %v760 = vpop.f32.mrf.mxu0
        %v761 = vadd.f32 0.0, %v760
        %v762 = vpop.f32.mrf.mxu0
        %v763 = vadd.f32 0.0, %v762
        %764 = vmatmul.bf16.gmra.mxu0 %v688
        %v765 = vpop.f32.mrf.mxu0
        %v766 = vadd.f32 0.0, %v765
        %v767 = vpop.f32.mrf.mxu0
        %v768 = vadd.f32 0.0, %v767
        %769 = vdwg.mxu0
        %v770 = vadd.f32 %v635, %v751
        %v771 = vadd.f32 %v636, %v753
        %v772 = vadd.f32 %v637, %v756
        %v773 = vadd.f32 %v638, %v758
        %v774 = vadd.f32 %v639, %v761
        %v775 = vadd.f32 %v640, %v763
        %v776 = vadd.f32 %v641, %v766
        %v777 = vadd.f32 %v642, %v768
        %s778 = scalar_lea.vmem %s271, 4 [#allocation3]
        %v779 = vld [vmem:[%s778] sm:$0xf]
        %v780 = vld [vmem:[%s778 + $0x4] sm:$0xf]
        %v781 = vld [vmem:[%s778 + $0x8] sm:$0xf]
        %v782 = vld [vmem:[%s778 + $0xc] sm:$0xf]
        %v783 = vld [vmem:[%s778 + $0x10] sm:$0xf]
        %v784 = vld [vmem:[%s778 + $0x14] sm:$0xf]
        %v785 = vld [vmem:[%s778 + $0x18] sm:$0xf]
        %v786 = vld [vmem:[%s778 + $0x1c] sm:$0xf]
        %s787 = scalar_lea.vmem %s281, 192 [#allocation5]
        %v788 = vld [vmem:[%s787] sm:$0xf]
        %v789 = vld [vmem:[%s787 + $0x4] sm:$0xf]
        %v790 = vld [vmem:[%s787 + $0x8] sm:$0xf]
        %v791 = vld [vmem:[%s787 + $0xc] sm:$0xf]
        %v792 = vld [vmem:[%s787 + $0x10] sm:$0xf]
        %v793 = vld [vmem:[%s787 + $0x14] sm:$0xf]
        %v794 = vld [vmem:[%s787 + $0x18] sm:$0xf]
        %v795 = vld [vmem:[%s787 + $0x1c] sm:$0xf]
        %v796 = vld [vmem:[%s787 + $0x20] sm:$0xf]
        %v797 = vld [vmem:[%s787 + $0x24] sm:$0xf]
        %v798 = vld [vmem:[%s787 + $0x28] sm:$0xf]
        %v799 = vld [vmem:[%s787 + $0x2c] sm:$0xf]
        %v800 = vld [vmem:[%s787 + $0x30] sm:$0xf]
        %v801 = vld [vmem:[%s787 + $0x34] sm:$0xf]
        %v802 = vld [vmem:[%s787 + $0x38] sm:$0xf]
        %v803 = vld [vmem:[%s787 + $0x3c] sm:$0xf]
        %v812 = vunpack.c.l.b16 %v779
        %v813 = vunpack.c.l.b16 %v780
        %v814 = vunpack.c.l.b16 %v781
        %v815 = vunpack.c.l.b16 %v782
        %v816 = vunpack.c.l.b16 %v783
        %v817 = vunpack.c.l.b16 %v784
        %v818 = vunpack.c.l.b16 %v785
        %v819 = vunpack.c.l.b16 %v786
        %v820 = vpack.c.b16 %v813, %v812
        %v821 = vpack.c.b16 %v815, %v814
        %v822 = vpack.c.b16 %v817, %v816
        %v823 = vpack.c.b16 %v819, %v818
        %v844 = vunpack.c.l.b16 %v788
        %v845 = vunpack.c.l.b16 %v789
        %v846 = vunpack.c.l.b16 %v790
        %v847 = vunpack.c.l.b16 %v791
        %v848 = vunpack.c.l.b16 %v792
        %v849 = vunpack.c.l.b16 %v793
        %v850 = vunpack.c.l.b16 %v794
        %v851 = vunpack.c.l.b16 %v795
        %v852 = vunpack.c.l.b16 %v796
        %v853 = vunpack.c.l.b16 %v797
        %v854 = vunpack.c.l.b16 %v798
        %v855 = vunpack.c.l.b16 %v799
        %v856 = vunpack.c.l.b16 %v800
        %v857 = vunpack.c.l.b16 %v801
        %v858 = vunpack.c.l.b16 %v802
        %v859 = vunpack.c.l.b16 %v803
        %v860 = vpack.c.b16 %v845, %v844
        %v861 = vpack.c.b16 %v847, %v846
        %v862 = vpack.c.b16 %v849, %v848
        %v863 = vpack.c.b16 %v851, %v850
        %v864 = vpack.c.b16 %v853, %v852
        %v865 = vpack.c.b16 %v855, %v854
        %v866 = vpack.c.b16 %v857, %v856
        %v867 = vpack.c.b16 %v859, %v858
        %876 = vmatpush.bf16.msra.mxu0 %v867
        %877 = vmatpush.bf16.msra.mxu0 %v866
        %878 = vmatpush.bf16.msra.mxu0 %v865
        %879 = vmatpush.bf16.msra.mxu0 %v864
        %880 = vmatpush.bf16.msra.mxu0 %v863
        %881 = vmatpush.bf16.msra.mxu0 %v862
        %882 = vmatpush.bf16.msra.mxu0 %v861
        %883 = vmatpush.bf16.msra.mxu0 %v860
        %884 = vmatmul.bf16.gmra.mxu0 %v820
        %v885 = vpop.f32.mrf.mxu0
        %v886 = vadd.f32 0.0, %v885
        %v887 = vpop.f32.mrf.mxu0
        %v888 = vadd.f32 0.0, %v887
        %889 = vmatmul.bf16.gmra.mxu0 %v821
        %v890 = vpop.f32.mrf.mxu0
        %v891 = vadd.f32 0.0, %v890
        %v892 = vpop.f32.mrf.mxu0
        %v893 = vadd.f32 0.0, %v892
        %894 = vmatmul.bf16.gmra.mxu0 %v822
        %v895 = vpop.f32.mrf.mxu0
        %v896 = vadd.f32 0.0, %v895
        %v897 = vpop.f32.mrf.mxu0
        %v898 = vadd.f32 0.0, %v897
        %899 = vmatmul.bf16.gmra.mxu0 %v823
        %v900 = vpop.f32.mrf.mxu0
        %v901 = vadd.f32 0.0, %v900
        %v902 = vpop.f32.mrf.mxu0
        %v903 = vadd.f32 0.0, %v902
        %904 = vdwg.mxu0
        %v905 = vadd.f32 %v770, %v886
        %v906 = vadd.f32 %v771, %v888
        %v907 = vadd.f32 %v772, %v891
        %v908 = vadd.f32 %v773, %v893
        %v909 = vadd.f32 %v774, %v896
        %v910 = vadd.f32 %v775, %v898
        %v911 = vadd.f32 %v776, %v901
        %v912 = vadd.f32 %v777, %v903
        %s913 = scalar_lea.vmem %s271, 164 [#allocation3]
        %v914 = vld [vmem:[%s913] sm:$0xf]
        %v915 = vld [vmem:[%s913 + $0x4] sm:$0xf]
        %v916 = vld [vmem:[%s913 + $0x8] sm:$0xf]
        %v917 = vld [vmem:[%s913 + $0xc] sm:$0xf]
        %v918 = vld [vmem:[%s913 + $0x10] sm:$0xf]
        %v919 = vld [vmem:[%s913 + $0x14] sm:$0xf]
        %v920 = vld [vmem:[%s913 + $0x18] sm:$0xf]
        %v921 = vld [vmem:[%s913 + $0x1c] sm:$0xf]
        %s922 = scalar_lea.vmem %s281, 256 [#allocation5]
        %v923 = vld [vmem:[%s922] sm:$0xf]
        %v924 = vld [vmem:[%s922 + $0x4] sm:$0xf]
        %v925 = vld [vmem:[%s922 + $0x8] sm:$0xf]
        %v926 = vld [vmem:[%s922 + $0xc] sm:$0xf]
        %v927 = vld [vmem:[%s922 + $0x10] sm:$0xf]
        %v928 = vld [vmem:[%s922 + $0x14] sm:$0xf]
        %v929 = vld [vmem:[%s922 + $0x18] sm:$0xf]
        %v930 = vld [vmem:[%s922 + $0x1c] sm:$0xf]
        %v931 = vld [vmem:[%s922 + $0x20] sm:$0xf]
        %v932 = vld [vmem:[%s922 + $0x24] sm:$0xf]
        %v933 = vld [vmem:[%s922 + $0x28] sm:$0xf]
        %v934 = vld [vmem:[%s922 + $0x2c] sm:$0xf]
        %v935 = vld [vmem:[%s922 + $0x30] sm:$0xf]
        %v936 = vld [vmem:[%s922 + $0x34] sm:$0xf]
        %v937 = vld [vmem:[%s922 + $0x38] sm:$0xf]
        %v938 = vld [vmem:[%s922 + $0x3c] sm:$0xf]
        %v947 = vunpack.c.l.b16 %v914
        %v948 = vunpack.c.l.b16 %v915
        %v949 = vunpack.c.l.b16 %v916
        %v950 = vunpack.c.l.b16 %v917
        %v951 = vunpack.c.l.b16 %v918
        %v952 = vunpack.c.l.b16 %v919
        %v953 = vunpack.c.l.b16 %v920
        %v954 = vunpack.c.l.b16 %v921
        %v955 = vpack.c.b16 %v948, %v947
        %v956 = vpack.c.b16 %v950, %v949
        %v957 = vpack.c.b16 %v952, %v951
        %v958 = vpack.c.b16 %v954, %v953
        %v979 = vunpack.c.l.b16 %v923
        %v980 = vunpack.c.l.b16 %v924
        %v981 = vunpack.c.l.b16 %v925
        %v982 = vunpack.c.l.b16 %v926
        %v983 = vunpack.c.l.b16 %v927
        %v984 = vunpack.c.l.b16 %v928
        %v985 = vunpack.c.l.b16 %v929
        %v986 = vunpack.c.l.b16 %v930
        %v987 = vunpack.c.l.b16 %v931
        %v988 = vunpack.c.l.b16 %v932
        %v989 = vunpack.c.l.b16 %v933
        %v990 = vunpack.c.l.b16 %v934
        %v991 = vunpack.c.l.b16 %v935
        %v992 = vunpack.c.l.b16 %v936
        %v993 = vunpack.c.l.b16 %v937
        %v994 = vunpack.c.l.b16 %v938
        %v995 = vpack.c.b16 %v980, %v979
        %v996 = vpack.c.b16 %v982, %v981
        %v997 = vpack.c.b16 %v984, %v983
        %v998 = vpack.c.b16 %v986, %v985
        %v999 = vpack.c.b16 %v988, %v987
        %v1000 = vpack.c.b16 %v990, %v989
        %v1001 = vpack.c.b16 %v992, %v991
        %v1002 = vpack.c.b16 %v994, %v993
        %1011 = vmatpush.bf16.msra.mxu0 %v1002
        %1012 = vmatpush.bf16.msra.mxu0 %v1001
        %1013 = vmatpush.bf16.msra.mxu0 %v1000
        %1014 = vmatpush.bf16.msra.mxu0 %v999
        %1015 = vmatpush.bf16.msra.mxu0 %v998
        %1016 = vmatpush.bf16.msra.mxu0 %v997
        %1017 = vmatpush.bf16.msra.mxu0 %v996
        %1018 = vmatpush.bf16.msra.mxu0 %v995
        %1019 = vmatmul.bf16.gmra.mxu0 %v955
        %v1020 = vpop.f32.mrf.mxu0
        %v1021 = vadd.f32 0.0, %v1020
        %v1022 = vpop.f32.mrf.mxu0
        %v1023 = vadd.f32 0.0, %v1022
        %1024 = vmatmul.bf16.gmra.mxu0 %v956
        %v1025 = vpop.f32.mrf.mxu0
        %v1026 = vadd.f32 0.0, %v1025
        %v1027 = vpop.f32.mrf.mxu0
        %v1028 = vadd.f32 0.0, %v1027
        %1029 = vmatmul.bf16.gmra.mxu0 %v957
        %v1030 = vpop.f32.mrf.mxu0
        %v1031 = vadd.f32 0.0, %v1030
        %v1032 = vpop.f32.mrf.mxu0
        %v1033 = vadd.f32 0.0, %v1032
        %1034 = vmatmul.bf16.gmra.mxu0 %v958
        %v1035 = vpop.f32.mrf.mxu0
        %v1036 = vadd.f32 0.0, %v1035
        %v1037 = vpop.f32.mrf.mxu0
        %v1038 = vadd.f32 0.0, %v1037
        %1039 = vdwg.mxu0
        %v1040 = vadd.f32 %v905, %v1021
        %v1041 = vadd.f32 %v906, %v1023
        %v1042 = vadd.f32 %v907, %v1026
        %v1043 = vadd.f32 %v908, %v1028
        %v1044 = vadd.f32 %v909, %v1031
        %v1045 = vadd.f32 %v910, %v1033
        %v1046 = vadd.f32 %v911, %v1036
        %v1047 = vadd.f32 %v912, %v1038
        %s1048 = scalar_lea.vmem %s271, 324 [#allocation3]
        %v1049 = vld [vmem:[%s1048] sm:$0xf]
        %v1050 = vld [vmem:[%s1048 + $0x4] sm:$0xf]
        %v1051 = vld [vmem:[%s1048 + $0x8] sm:$0xf]
        %v1052 = vld [vmem:[%s1048 + $0xc] sm:$0xf]
        %v1053 = vld [vmem:[%s1048 + $0x10] sm:$0xf]
        %v1054 = vld [vmem:[%s1048 + $0x14] sm:$0xf]
        %v1055 = vld [vmem:[%s1048 + $0x18] sm:$0xf]
        %v1056 = vld [vmem:[%s1048 + $0x1c] sm:$0xf]
        %s1057 = scalar_lea.vmem %s281, 320 [#allocation5]
        %v1058 = vld [vmem:[%s1057] sm:$0xf]
        %v1059 = vld [vmem:[%s1057 + $0x4] sm:$0xf]
        %v1060 = vld [vmem:[%s1057 + $0x8] sm:$0xf]
        %v1061 = vld [vmem:[%s1057 + $0xc] sm:$0xf]
        %v1062 = vld [vmem:[%s1057 + $0x10] sm:$0xf]
        %v1063 = vld [vmem:[%s1057 + $0x14] sm:$0xf]
        %v1064 = vld [vmem:[%s1057 + $0x18] sm:$0xf]
        %v1065 = vld [vmem:[%s1057 + $0x1c] sm:$0xf]
        %v1066 = vld [vmem:[%s1057 + $0x20] sm:$0xf]
        %v1067 = vld [vmem:[%s1057 + $0x24] sm:$0xf]
        %v1068 = vld [vmem:[%s1057 + $0x28] sm:$0xf]
        %v1069 = vld [vmem:[%s1057 + $0x2c] sm:$0xf]
        %v1070 = vld [vmem:[%s1057 + $0x30] sm:$0xf]
        %v1071 = vld [vmem:[%s1057 + $0x34] sm:$0xf]
        %v1072 = vld [vmem:[%s1057 + $0x38] sm:$0xf]
        %v1073 = vld [vmem:[%s1057 + $0x3c] sm:$0xf]
        %v1082 = vunpack.c.l.b16 %v1049
        %v1083 = vunpack.c.l.b16 %v1050
        %v1084 = vunpack.c.l.b16 %v1051
        %v1085 = vunpack.c.l.b16 %v1052
        %v1086 = vunpack.c.l.b16 %v1053
        %v1087 = vunpack.c.l.b16 %v1054
        %v1088 = vunpack.c.l.b16 %v1055
        %v1089 = vunpack.c.l.b16 %v1056
        %v1090 = vpack.c.b16 %v1083, %v1082
        %v1091 = vpack.c.b16 %v1085, %v1084
        %v1092 = vpack.c.b16 %v1087, %v1086
        %v1093 = vpack.c.b16 %v1089, %v1088
        %v1114 = vunpack.c.l.b16 %v1058
        %v1115 = vunpack.c.l.b16 %v1059
        %v1116 = vunpack.c.l.b16 %v1060
        %v1117 = vunpack.c.l.b16 %v1061
        %v1118 = vunpack.c.l.b16 %v1062
        %v1119 = vunpack.c.l.b16 %v1063
        %v1120 = vunpack.c.l.b16 %v1064
        %v1121 = vunpack.c.l.b16 %v1065
        %v1122 = vunpack.c.l.b16 %v1066
        %v1123 = vunpack.c.l.b16 %v1067
        %v1124 = vunpack.c.l.b16 %v1068
        %v1125 = vunpack.c.l.b16 %v1069
        %v1126 = vunpack.c.l.b16 %v1070
        %v1127 = vunpack.c.l.b16 %v1071
        %v1128 = vunpack.c.l.b16 %v1072
        %v1129 = vunpack.c.l.b16 %v1073
        %v1130 = vpack.c.b16 %v1115, %v1114
        %v1131 = vpack.c.b16 %v1117, %v1116
        %v1132 = vpack.c.b16 %v1119, %v1118
        %v1133 = vpack.c.b16 %v1121, %v1120
        %v1134 = vpack.c.b16 %v1123, %v1122
        %v1135 = vpack.c.b16 %v1125, %v1124
        %v1136 = vpack.c.b16 %v1127, %v1126
        %v1137 = vpack.c.b16 %v1129, %v1128
        %1146 = vmatpush.bf16.msra.mxu0 %v1137
        %1147 = vmatpush.bf16.msra.mxu0 %v1136
        %1148 = vmatpush.bf16.msra.mxu0 %v1135
        %1149 = vmatpush.bf16.msra.mxu0 %v1134
        %1150 = vmatpush.bf16.msra.mxu0 %v1133
        %1151 = vmatpush.bf16.msra.mxu0 %v1132
        %1152 = vmatpush.bf16.msra.mxu0 %v1131
        %1153 = vmatpush.bf16.msra.mxu0 %v1130
        %1154 = vmatmul.bf16.gmra.mxu0 %v1090
        %v1155 = vpop.f32.mrf.mxu0
        %v1156 = vadd.f32 0.0, %v1155
        %v1157 = vpop.f32.mrf.mxu0
        %v1158 = vadd.f32 0.0, %v1157
        %1159 = vmatmul.bf16.gmra.mxu0 %v1091
        %v1160 = vpop.f32.mrf.mxu0
        %v1161 = vadd.f32 0.0, %v1160
        %v1162 = vpop.f32.mrf.mxu0
        %v1163 = vadd.f32 0.0, %v1162
        %1164 = vmatmul.bf16.gmra.mxu0 %v1092
        %v1165 = vpop.f32.mrf.mxu0
        %v1166 = vadd.f32 0.0, %v1165
        %v1167 = vpop.f32.mrf.mxu0
        %v1168 = vadd.f32 0.0, %v1167
        %1169 = vmatmul.bf16.gmra.mxu0 %v1093
        %v1170 = vpop.f32.mrf.mxu0
        %v1171 = vadd.f32 0.0, %v1170
        %v1172 = vpop.f32.mrf.mxu0
        %v1173 = vadd.f32 0.0, %v1172
        %1174 = vdwg.mxu0
        %v1175 = vadd.f32 %v1040, %v1156
        %v1176 = vadd.f32 %v1041, %v1158
        %v1177 = vadd.f32 %v1042, %v1161
        %v1178 = vadd.f32 %v1043, %v1163
        %v1179 = vadd.f32 %v1044, %v1166
        %v1180 = vadd.f32 %v1045, %v1168
        %v1181 = vadd.f32 %v1046, %v1171
        %v1182 = vadd.f32 %v1047, %v1173
        %s1183 = scalar_lea.vmem %s271, 8 [#allocation3]
        %v1184 = vld [vmem:[%s1183] sm:$0xf]
        %v1185 = vld [vmem:[%s1183 + $0x4] sm:$0xf]
        %v1186 = vld [vmem:[%s1183 + $0x8] sm:$0xf]
        %v1187 = vld [vmem:[%s1183 + $0xc] sm:$0xf]
        %v1188 = vld [vmem:[%s1183 + $0x10] sm:$0xf]
        %v1189 = vld [vmem:[%s1183 + $0x14] sm:$0xf]
        %v1190 = vld [vmem:[%s1183 + $0x18] sm:$0xf]
        %v1191 = vld [vmem:[%s1183 + $0x1c] sm:$0xf]
        %s1192 = scalar_lea.vmem %s281, 384 [#allocation5]
        %v1193 = vld [vmem:[%s1192] sm:$0xf]
        %v1194 = vld [vmem:[%s1192 + $0x4] sm:$0xf]
        %v1195 = vld [vmem:[%s1192 + $0x8] sm:$0xf]
        %v1196 = vld [vmem:[%s1192 + $0xc] sm:$0xf]
        %v1197 = vld [vmem:[%s1192 + $0x10] sm:$0xf]
        %v1198 = vld [vmem:[%s1192 + $0x14] sm:$0xf]
        %v1199 = vld [vmem:[%s1192 + $0x18] sm:$0xf]
        %v1200 = vld [vmem:[%s1192 + $0x1c] sm:$0xf]
        %v1201 = vld [vmem:[%s1192 + $0x20] sm:$0xf]
        %v1202 = vld [vmem:[%s1192 + $0x24] sm:$0xf]
        %v1203 = vld [vmem:[%s1192 + $0x28] sm:$0xf]
        %v1204 = vld [vmem:[%s1192 + $0x2c] sm:$0xf]
        %v1205 = vld [vmem:[%s1192 + $0x30] sm:$0xf]
        %v1206 = vld [vmem:[%s1192 + $0x34] sm:$0xf]
        %v1207 = vld [vmem:[%s1192 + $0x38] sm:$0xf]
        %v1208 = vld [vmem:[%s1192 + $0x3c] sm:$0xf]
        %v1217 = vunpack.c.l.b16 %v1184
        %v1218 = vunpack.c.l.b16 %v1185
        %v1219 = vunpack.c.l.b16 %v1186
        %v1220 = vunpack.c.l.b16 %v1187
        %v1221 = vunpack.c.l.b16 %v1188
        %v1222 = vunpack.c.l.b16 %v1189
        %v1223 = vunpack.c.l.b16 %v1190
        %v1224 = vunpack.c.l.b16 %v1191
        %v1225 = vpack.c.b16 %v1218, %v1217
        %v1226 = vpack.c.b16 %v1220, %v1219
        %v1227 = vpack.c.b16 %v1222, %v1221
        %v1228 = vpack.c.b16 %v1224, %v1223
        %v1249 = vunpack.c.l.b16 %v1193
        %v1250 = vunpack.c.l.b16 %v1194
        %v1251 = vunpack.c.l.b16 %v1195
        %v1252 = vunpack.c.l.b16 %v1196
        %v1253 = vunpack.c.l.b16 %v1197
        %v1254 = vunpack.c.l.b16 %v1198
        %v1255 = vunpack.c.l.b16 %v1199
        %v1256 = vunpack.c.l.b16 %v1200
        %v1257 = vunpack.c.l.b16 %v1201
        %v1258 = vunpack.c.l.b16 %v1202
        %v1259 = vunpack.c.l.b16 %v1203
        %v1260 = vunpack.c.l.b16 %v1204
        %v1261 = vunpack.c.l.b16 %v1205
        %v1262 = vunpack.c.l.b16 %v1206
        %v1263 = vunpack.c.l.b16 %v1207
        %v1264 = vunpack.c.l.b16 %v1208
        %v1265 = vpack.c.b16 %v1250, %v1249
        %v1266 = vpack.c.b16 %v1252, %v1251
        %v1267 = vpack.c.b16 %v1254, %v1253
        %v1268 = vpack.c.b16 %v1256, %v1255
        %v1269 = vpack.c.b16 %v1258, %v1257
        %v1270 = vpack.c.b16 %v1260, %v1259
        %v1271 = vpack.c.b16 %v1262, %v1261
        %v1272 = vpack.c.b16 %v1264, %v1263
        %1281 = vmatpush.bf16.msra.mxu0 %v1272
        %1282 = vmatpush.bf16.msra.mxu0 %v1271
        %1283 = vmatpush.bf16.msra.mxu0 %v1270
        %1284 = vmatpush.bf16.msra.mxu0 %v1269
        %1285 = vmatpush.bf16.msra.mxu0 %v1268
        %1286 = vmatpush.bf16.msra.mxu0 %v1267
        %1287 = vmatpush.bf16.msra.mxu0 %v1266
        %1288 = vmatpush.bf16.msra.mxu0 %v1265
        %1289 = vmatmul.bf16.gmra.mxu0 %v1225
        %v1290 = vpop.f32.mrf.mxu0
        %v1291 = vadd.f32 0.0, %v1290
        %v1292 = vpop.f32.mrf.mxu0
        %v1293 = vadd.f32 0.0, %v1292
        %1294 = vmatmul.bf16.gmra.mxu0 %v1226
        %v1295 = vpop.f32.mrf.mxu0
        %v1296 = vadd.f32 0.0, %v1295
        %v1297 = vpop.f32.mrf.mxu0
        %v1298 = vadd.f32 0.0, %v1297
        %1299 = vmatmul.bf16.gmra.mxu0 %v1227
        %v1300 = vpop.f32.mrf.mxu0
        %v1301 = vadd.f32 0.0, %v1300
        %v1302 = vpop.f32.mrf.mxu0
        %v1303 = vadd.f32 0.0, %v1302
        %1304 = vmatmul.bf16.gmra.mxu0 %v1228
        %v1305 = vpop.f32.mrf.mxu0
        %v1306 = vadd.f32 0.0, %v1305
        %v1307 = vpop.f32.mrf.mxu0
        %v1308 = vadd.f32 0.0, %v1307
        %1309 = vdwg.mxu0
        %v1310 = vadd.f32 %v1175, %v1291
        %v1311 = vadd.f32 %v1176, %v1293
        %v1312 = vadd.f32 %v1177, %v1296
        %v1313 = vadd.f32 %v1178, %v1298
        %v1314 = vadd.f32 %v1179, %v1301
        %v1315 = vadd.f32 %v1180, %v1303
        %v1316 = vadd.f32 %v1181, %v1306
        %v1317 = vadd.f32 %v1182, %v1308
        %s1318 = scalar_lea.vmem %s271, 168 [#allocation3]
        %v1319 = vld [vmem:[%s1318] sm:$0xf]
        %v1320 = vld [vmem:[%s1318 + $0x4] sm:$0xf]
        %v1321 = vld [vmem:[%s1318 + $0x8] sm:$0xf]
        %v1322 = vld [vmem:[%s1318 + $0xc] sm:$0xf]
        %v1323 = vld [vmem:[%s1318 + $0x10] sm:$0xf]
        %v1324 = vld [vmem:[%s1318 + $0x14] sm:$0xf]
        %v1325 = vld [vmem:[%s1318 + $0x18] sm:$0xf]
        %v1326 = vld [vmem:[%s1318 + $0x1c] sm:$0xf]
        %s1327 = scalar_lea.vmem %s281, 448 [#allocation5]
        %v1328 = vld [vmem:[%s1327] sm:$0xf]
        %v1329 = vld [vmem:[%s1327 + $0x4] sm:$0xf]
        %v1330 = vld [vmem:[%s1327 + $0x8] sm:$0xf]
        %v1331 = vld [vmem:[%s1327 + $0xc] sm:$0xf]
        %v1332 = vld [vmem:[%s1327 + $0x10] sm:$0xf]
        %v1333 = vld [vmem:[%s1327 + $0x14] sm:$0xf]
        %v1334 = vld [vmem:[%s1327 + $0x18] sm:$0xf]
        %v1335 = vld [vmem:[%s1327 + $0x1c] sm:$0xf]
        %v1336 = vld [vmem:[%s1327 + $0x20] sm:$0xf]
        %v1337 = vld [vmem:[%s1327 + $0x24] sm:$0xf]
        %v1338 = vld [vmem:[%s1327 + $0x28] sm:$0xf]
        %v1339 = vld [vmem:[%s1327 + $0x2c] sm:$0xf]
        %v1340 = vld [vmem:[%s1327 + $0x30] sm:$0xf]
        %v1341 = vld [vmem:[%s1327 + $0x34] sm:$0xf]
        %v1342 = vld [vmem:[%s1327 + $0x38] sm:$0xf]
        %v1343 = vld [vmem:[%s1327 + $0x3c] sm:$0xf]
        %v1352 = vunpack.c.l.b16 %v1319
        %v1353 = vunpack.c.l.b16 %v1320
        %v1354 = vunpack.c.l.b16 %v1321
        %v1355 = vunpack.c.l.b16 %v1322
        %v1356 = vunpack.c.l.b16 %v1323
        %v1357 = vunpack.c.l.b16 %v1324
        %v1358 = vunpack.c.l.b16 %v1325
        %v1359 = vunpack.c.l.b16 %v1326
        %v1360 = vpack.c.b16 %v1353, %v1352
        %v1361 = vpack.c.b16 %v1355, %v1354
        %v1362 = vpack.c.b16 %v1357, %v1356
        %v1363 = vpack.c.b16 %v1359, %v1358
        %v1384 = vunpack.c.l.b16 %v1328
        %v1385 = vunpack.c.l.b16 %v1329
        %v1386 = vunpack.c.l.b16 %v1330
        %v1387 = vunpack.c.l.b16 %v1331
        %v1388 = vunpack.c.l.b16 %v1332
        %v1389 = vunpack.c.l.b16 %v1333
        %v1390 = vunpack.c.l.b16 %v1334
        %v1391 = vunpack.c.l.b16 %v1335
        %v1392 = vunpack.c.l.b16 %v1336
        %v1393 = vunpack.c.l.b16 %v1337
        %v1394 = vunpack.c.l.b16 %v1338
        %v1395 = vunpack.c.l.b16 %v1339
        %v1396 = vunpack.c.l.b16 %v1340
        %v1397 = vunpack.c.l.b16 %v1341
        %v1398 = vunpack.c.l.b16 %v1342
        %v1399 = vunpack.c.l.b16 %v1343
        %v1400 = vpack.c.b16 %v1385, %v1384
        %v1401 = vpack.c.b16 %v1387, %v1386
        %v1402 = vpack.c.b16 %v1389, %v1388
        %v1403 = vpack.c.b16 %v1391, %v1390
        %v1404 = vpack.c.b16 %v1393, %v1392
        %v1405 = vpack.c.b16 %v1395, %v1394
        %v1406 = vpack.c.b16 %v1397, %v1396
        %v1407 = vpack.c.b16 %v1399, %v1398
        %1416 = vmatpush.bf16.msra.mxu0 %v1407
        %1417 = vmatpush.bf16.msra.mxu0 %v1406
        %1418 = vmatpush.bf16.msra.mxu0 %v1405
        %1419 = vmatpush.bf16.msra.mxu0 %v1404
        %1420 = vmatpush.bf16.msra.mxu0 %v1403
        %1421 = vmatpush.bf16.msra.mxu0 %v1402
        %1422 = vmatpush.bf16.msra.mxu0 %v1401
        %1423 = vmatpush.bf16.msra.mxu0 %v1400
        %1424 = vmatmul.bf16.gmra.mxu0 %v1360
        %v1425 = vpop.f32.mrf.mxu0
        %v1426 = vadd.f32 0.0, %v1425
        %v1427 = vpop.f32.mrf.mxu0
        %v1428 = vadd.f32 0.0, %v1427
        %1429 = vmatmul.bf16.gmra.mxu0 %v1361
        %v1430 = vpop.f32.mrf.mxu0
        %v1431 = vadd.f32 0.0, %v1430
        %v1432 = vpop.f32.mrf.mxu0
        %v1433 = vadd.f32 0.0, %v1432
        %1434 = vmatmul.bf16.gmra.mxu0 %v1362
        %v1435 = vpop.f32.mrf.mxu0
        %v1436 = vadd.f32 0.0, %v1435
        %v1437 = vpop.f32.mrf.mxu0
        %v1438 = vadd.f32 0.0, %v1437
        %1439 = vmatmul.bf16.gmra.mxu0 %v1363
        %v1440 = vpop.f32.mrf.mxu0
        %v1441 = vadd.f32 0.0, %v1440
        %v1442 = vpop.f32.mrf.mxu0
        %v1443 = vadd.f32 0.0, %v1442
        %1444 = vdwg.mxu0
        %v1445 = vadd.f32 %v1310, %v1426
        %v1446 = vadd.f32 %v1311, %v1428
        %v1447 = vadd.f32 %v1312, %v1431
        %v1448 = vadd.f32 %v1313, %v1433
        %v1449 = vadd.f32 %v1314, %v1436
        %v1450 = vadd.f32 %v1315, %v1438
        %v1451 = vadd.f32 %v1316, %v1441
        %v1452 = vadd.f32 %v1317, %v1443
        %s1453 = scalar_lea.vmem %s271, 328 [#allocation3]
        %v1454 = vld [vmem:[%s1453] sm:$0xf]
        %v1455 = vld [vmem:[%s1453 + $0x4] sm:$0xf]
        %v1456 = vld [vmem:[%s1453 + $0x8] sm:$0xf]
        %v1457 = vld [vmem:[%s1453 + $0xc] sm:$0xf]
        %v1458 = vld [vmem:[%s1453 + $0x10] sm:$0xf]
        %v1459 = vld [vmem:[%s1453 + $0x14] sm:$0xf]
        %v1460 = vld [vmem:[%s1453 + $0x18] sm:$0xf]
        %v1461 = vld [vmem:[%s1453 + $0x1c] sm:$0xf]
        %s1462 = scalar_lea.vmem %s281, 512 [#allocation5]
        %v1463 = vld [vmem:[%s1462] sm:$0xf]
        %v1464 = vld [vmem:[%s1462 + $0x4] sm:$0xf]
        %v1465 = vld [vmem:[%s1462 + $0x8] sm:$0xf]
        %v1466 = vld [vmem:[%s1462 + $0xc] sm:$0xf]
        %v1467 = vld [vmem:[%s1462 + $0x10] sm:$0xf]
        %v1468 = vld [vmem:[%s1462 + $0x14] sm:$0xf]
        %v1469 = vld [vmem:[%s1462 + $0x18] sm:$0xf]
        %v1470 = vld [vmem:[%s1462 + $0x1c] sm:$0xf]
        %v1471 = vld [vmem:[%s1462 + $0x20] sm:$0xf]
        %v1472 = vld [vmem:[%s1462 + $0x24] sm:$0xf]
        %v1473 = vld [vmem:[%s1462 + $0x28] sm:$0xf]
        %v1474 = vld [vmem:[%s1462 + $0x2c] sm:$0xf]
        %v1475 = vld [vmem:[%s1462 + $0x30] sm:$0xf]
        %v1476 = vld [vmem:[%s1462 + $0x34] sm:$0xf]
        %v1477 = vld [vmem:[%s1462 + $0x38] sm:$0xf]
        %v1478 = vld [vmem:[%s1462 + $0x3c] sm:$0xf]
        %v1487 = vunpack.c.l.b16 %v1454
        %v1488 = vunpack.c.l.b16 %v1455
        %v1489 = vunpack.c.l.b16 %v1456
        %v1490 = vunpack.c.l.b16 %v1457
        %v1491 = vunpack.c.l.b16 %v1458
        %v1492 = vunpack.c.l.b16 %v1459
        %v1493 = vunpack.c.l.b16 %v1460
        %v1494 = vunpack.c.l.b16 %v1461
        %v1495 = vpack.c.b16 %v1488, %v1487
        %v1496 = vpack.c.b16 %v1490, %v1489
        %v1497 = vpack.c.b16 %v1492, %v1491
        %v1498 = vpack.c.b16 %v1494, %v1493
        %v1519 = vunpack.c.l.b16 %v1463
        %v1520 = vunpack.c.l.b16 %v1464
        %v1521 = vunpack.c.l.b16 %v1465
        %v1522 = vunpack.c.l.b16 %v1466
        %v1523 = vunpack.c.l.b16 %v1467
        %v1524 = vunpack.c.l.b16 %v1468
        %v1525 = vunpack.c.l.b16 %v1469
        %v1526 = vunpack.c.l.b16 %v1470
        %v1527 = vunpack.c.l.b16 %v1471
        %v1528 = vunpack.c.l.b16 %v1472
        %v1529 = vunpack.c.l.b16 %v1473
        %v1530 = vunpack.c.l.b16 %v1474
        %v1531 = vunpack.c.l.b16 %v1475
        %v1532 = vunpack.c.l.b16 %v1476
        %v1533 = vunpack.c.l.b16 %v1477
        %v1534 = vunpack.c.l.b16 %v1478
        %v1535 = vpack.c.b16 %v1520, %v1519
        %v1536 = vpack.c.b16 %v1522, %v1521
        %v1537 = vpack.c.b16 %v1524, %v1523
        %v1538 = vpack.c.b16 %v1526, %v1525
        %v1539 = vpack.c.b16 %v1528, %v1527
        %v1540 = vpack.c.b16 %v1530, %v1529
        %v1541 = vpack.c.b16 %v1532, %v1531
        %v1542 = vpack.c.b16 %v1534, %v1533
        %1551 = vmatpush.bf16.msra.mxu0 %v1542
        %1552 = vmatpush.bf16.msra.mxu0 %v1541
        %1553 = vmatpush.bf16.msra.mxu0 %v1540
        %1554 = vmatpush.bf16.msra.mxu0 %v1539
        %1555 = vmatpush.bf16.msra.mxu0 %v1538
        %1556 = vmatpush.bf16.msra.mxu0 %v1537
        %1557 = vmatpush.bf16.msra.mxu0 %v1536
        %1558 = vmatpush.bf16.msra.mxu0 %v1535
        %1559 = vmatmul.bf16.gmra.mxu0 %v1495
        %v1560 = vpop.f32.mrf.mxu0
        %v1561 = vadd.f32 0.0, %v1560
        %v1562 = vpop.f32.mrf.mxu0
        %v1563 = vadd.f32 0.0, %v1562
        %1564 = vmatmul.bf16.gmra.mxu0 %v1496
        %v1565 = vpop.f32.mrf.mxu0
        %v1566 = vadd.f32 0.0, %v1565
        %v1567 = vpop.f32.mrf.mxu0
        %v1568 = vadd.f32 0.0, %v1567
        %1569 = vmatmul.bf16.gmra.mxu0 %v1497
        %v1570 = vpop.f32.mrf.mxu0
        %v1571 = vadd.f32 0.0, %v1570
        %v1572 = vpop.f32.mrf.mxu0
        %v1573 = vadd.f32 0.0, %v1572
        %1574 = vmatmul.bf16.gmra.mxu0 %v1498
        %v1575 = vpop.f32.mrf.mxu0
        %v1576 = vadd.f32 0.0, %v1575
        %v1577 = vpop.f32.mrf.mxu0
        %v1578 = vadd.f32 0.0, %v1577
        %1579 = vdwg.mxu0
        %v1580 = vadd.f32 %v1445, %v1561
        %v1581 = vadd.f32 %v1446, %v1563
        %v1582 = vadd.f32 %v1447, %v1566
        %v1583 = vadd.f32 %v1448, %v1568
        %v1584 = vadd.f32 %v1449, %v1571
        %v1585 = vadd.f32 %v1450, %v1573
        %v1586 = vadd.f32 %v1451, %v1576
        %v1587 = vadd.f32 %v1452, %v1578
        %1588 = vst [vmem:[#allocation2] sm:$0xff] %v1580
        %1589 = vst [vmem:[#allocation2 + $0x8] sm:$0xff] %v1581
        %1590 = vst [vmem:[#allocation2 + $0x10] sm:$0xff] %v1582
        %1591 = vst [vmem:[#allocation2 + $0x18] sm:$0xff] %v1583
        %1592 = vst [vmem:[#allocation2 + $0x20] sm:$0xff] %v1584
        %1593 = vst [vmem:[#allocation2 + $0x28] sm:$0xff] %v1585
        %1594 = vst [vmem:[#allocation2 + $0x30] sm:$0xff] %v1586
        %1595 = vst [vmem:[#allocation2 + $0x38] sm:$0xff] %v1587
        %v1596 = vld [vmem:[#allocation2 + $0x40] sm:$0xff]
        %v1597 = vld [vmem:[#allocation2 + $0x48] sm:$0xff]
        %v1598 = vld [vmem:[#allocation2 + $0x50] sm:$0xff]
        %v1599 = vld [vmem:[#allocation2 + $0x58] sm:$0xff]
        %v1600 = vld [vmem:[#allocation2 + $0x60] sm:$0xff]
        %v1601 = vld [vmem:[#allocation2 + $0x68] sm:$0xff]
        %v1602 = vld [vmem:[#allocation2 + $0x70] sm:$0xff]
        %v1603 = vld [vmem:[#allocation2 + $0x78] sm:$0xff]
        %s1604 = scalar_lea.vmem %s271, 40 [#allocation3]
        %v1605 = vld [vmem:[%s1604] sm:$0xf]
        %v1606 = vld [vmem:[%s1604 + $0x4] sm:$0xf]
        %v1607 = vld [vmem:[%s1604 + $0x8] sm:$0xf]
        %v1608 = vld [vmem:[%s1604 + $0xc] sm:$0xf]
        %v1609 = vld [vmem:[%s1604 + $0x10] sm:$0xf]
        %v1610 = vld [vmem:[%s1604 + $0x14] sm:$0xf]
        %v1611 = vld [vmem:[%s1604 + $0x18] sm:$0xf]
        %v1612 = vld [vmem:[%s1604 + $0x1c] sm:$0xf]
        %v1613 = vld [vmem:[%s281] sm:$0xf]
        %v1614 = vld [vmem:[%s281 + $0x4] sm:$0xf]
        %v1615 = vld [vmem:[%s281 + $0x8] sm:$0xf]
        %v1616 = vld [vmem:[%s281 + $0xc] sm:$0xf]
        %v1617 = vld [vmem:[%s281 + $0x10] sm:$0xf]
        %v1618 = vld [vmem:[%s281 + $0x14] sm:$0xf]
        %v1619 = vld [vmem:[%s281 + $0x18] sm:$0xf]
        %v1620 = vld [vmem:[%s281 + $0x1c] sm:$0xf]
        %v1621 = vld [vmem:[%s281 + $0x20] sm:$0xf]
        %v1622 = vld [vmem:[%s281 + $0x24] sm:$0xf]
        %v1623 = vld [vmem:[%s281 + $0x28] sm:$0xf]
        %v1624 = vld [vmem:[%s281 + $0x2c] sm:$0xf]
        %v1625 = vld [vmem:[%s281 + $0x30] sm:$0xf]
        %v1626 = vld [vmem:[%s281 + $0x34] sm:$0xf]
        %v1627 = vld [vmem:[%s281 + $0x38] sm:$0xf]
        %v1628 = vld [vmem:[%s281 + $0x3c] sm:$0xf]
        %v1637 = vunpack.c.l.b16 %v1605
        %v1638 = vunpack.c.l.b16 %v1606
        %v1639 = vunpack.c.l.b16 %v1607
        %v1640 = vunpack.c.l.b16 %v1608
        %v1641 = vunpack.c.l.b16 %v1609
        %v1642 = vunpack.c.l.b16 %v1610
        %v1643 = vunpack.c.l.b16 %v1611
        %v1644 = vunpack.c.l.b16 %v1612
        %v1645 = vpack.c.b16 %v1638, %v1637
        %v1646 = vpack.c.b16 %v1640, %v1639
        %v1647 = vpack.c.b16 %v1642, %v1641
        %v1648 = vpack.c.b16 %v1644, %v1643
        %v1669 = vunpack.c.l.b16 %v1613
        %v1670 = vunpack.c.l.b16 %v1614
        %v1671 = vunpack.c.l.b16 %v1615
        %v1672 = vunpack.c.l.b16 %v1616
        %v1673 = vunpack.c.l.b16 %v1617
        %v1674 = vunpack.c.l.b16 %v1618
        %v1675 = vunpack.c.l.b16 %v1619
        %v1676 = vunpack.c.l.b16 %v1620
        %v1677 = vunpack.c.l.b16 %v1621
        %v1678 = vunpack.c.l.b16 %v1622
        %v1679 = vunpack.c.l.b16 %v1623
        %v1680 = vunpack.c.l.b16 %v1624
        %v1681 = vunpack.c.l.b16 %v1625
        %v1682 = vunpack.c.l.b16 %v1626
        %v1683 = vunpack.c.l.b16 %v1627
        %v1684 = vunpack.c.l.b16 %v1628
        %v1685 = vpack.c.b16 %v1670, %v1669
        %v1686 = vpack.c.b16 %v1672, %v1671
        %v1687 = vpack.c.b16 %v1674, %v1673
        %v1688 = vpack.c.b16 %v1676, %v1675
        %v1689 = vpack.c.b16 %v1678, %v1677
        %v1690 = vpack.c.b16 %v1680, %v1679
        %v1691 = vpack.c.b16 %v1682, %v1681
        %v1692 = vpack.c.b16 %v1684, %v1683
        %1701 = vmatpush.bf16.msra.mxu0 %v1692
        %1702 = vmatpush.bf16.msra.mxu0 %v1691
        %1703 = vmatpush.bf16.msra.mxu0 %v1690
        %1704 = vmatpush.bf16.msra.mxu0 %v1689
        %1705 = vmatpush.bf16.msra.mxu0 %v1688
        %1706 = vmatpush.bf16.msra.mxu0 %v1687
        %1707 = vmatpush.bf16.msra.mxu0 %v1686
        %1708 = vmatpush.bf16.msra.mxu0 %v1685
        %1709 = vmatmul.bf16.gmra.mxu0 %v1645
        %v1710 = vpop.f32.mrf.mxu0
        %v1711 = vadd.f32 0.0, %v1710
        %v1712 = vpop.f32.mrf.mxu0
        %v1713 = vadd.f32 0.0, %v1712
        %1714 = vmatmul.bf16.gmra.mxu0 %v1646
        %v1715 = vpop.f32.mrf.mxu0
        %v1716 = vadd.f32 0.0, %v1715
        %v1717 = vpop.f32.mrf.mxu0
        %v1718 = vadd.f32 0.0, %v1717
        %1719 = vmatmul.bf16.gmra.mxu0 %v1647
        %v1720 = vpop.f32.mrf.mxu0
        %v1721 = vadd.f32 0.0, %v1720
        %v1722 = vpop.f32.mrf.mxu0
        %v1723 = vadd.f32 0.0, %v1722
        %1724 = vmatmul.bf16.gmra.mxu0 %v1648
        %v1725 = vpop.f32.mrf.mxu0
        %v1726 = vadd.f32 0.0, %v1725
        %v1727 = vpop.f32.mrf.mxu0
        %v1728 = vadd.f32 0.0, %v1727
        %1729 = vdwg.mxu0
        %v1730 = vadd.f32 %v1596, %v1711
        %v1731 = vadd.f32 %v1597, %v1713
        %v1732 = vadd.f32 %v1598, %v1716
        %v1733 = vadd.f32 %v1599, %v1718
        %v1734 = vadd.f32 %v1600, %v1721
        %v1735 = vadd.f32 %v1601, %v1723
        %v1736 = vadd.f32 %v1602, %v1726
        %v1737 = vadd.f32 %v1603, %v1728
        %s1738 = scalar_lea.vmem %s271, 200 [#allocation3]
        %v1739 = vld [vmem:[%s1738] sm:$0xf]
        %v1740 = vld [vmem:[%s1738 + $0x4] sm:$0xf]
        %v1741 = vld [vmem:[%s1738 + $0x8] sm:$0xf]
        %v1742 = vld [vmem:[%s1738 + $0xc] sm:$0xf]
        %v1743 = vld [vmem:[%s1738 + $0x10] sm:$0xf]
        %v1744 = vld [vmem:[%s1738 + $0x14] sm:$0xf]
        %v1745 = vld [vmem:[%s1738 + $0x18] sm:$0xf]
        %v1746 = vld [vmem:[%s1738 + $0x1c] sm:$0xf]
        %v1747 = vld [vmem:[%s517] sm:$0xf]
        %v1748 = vld [vmem:[%s517 + $0x4] sm:$0xf]
        %v1749 = vld [vmem:[%s517 + $0x8] sm:$0xf]
        %v1750 = vld [vmem:[%s517 + $0xc] sm:$0xf]
        %v1751 = vld [vmem:[%s517 + $0x10] sm:$0xf]
        %v1752 = vld [vmem:[%s517 + $0x14] sm:$0xf]
        %v1753 = vld [vmem:[%s517 + $0x18] sm:$0xf]
        %v1754 = vld [vmem:[%s517 + $0x1c] sm:$0xf]
        %v1755 = vld [vmem:[%s517 + $0x20] sm:$0xf]
        %v1756 = vld [vmem:[%s517 + $0x24] sm:$0xf]
        %v1757 = vld [vmem:[%s517 + $0x28] sm:$0xf]
        %v1758 = vld [vmem:[%s517 + $0x2c] sm:$0xf]
        %v1759 = vld [vmem:[%s517 + $0x30] sm:$0xf]
        %v1760 = vld [vmem:[%s517 + $0x34] sm:$0xf]
        %v1761 = vld [vmem:[%s517 + $0x38] sm:$0xf]
        %v1762 = vld [vmem:[%s517 + $0x3c] sm:$0xf]
        %v1771 = vunpack.c.l.b16 %v1739
        %v1772 = vunpack.c.l.b16 %v1740
        %v1773 = vunpack.c.l.b16 %v1741
        %v1774 = vunpack.c.l.b16 %v1742
        %v1775 = vunpack.c.l.b16 %v1743
        %v1776 = vunpack.c.l.b16 %v1744
        %v1777 = vunpack.c.l.b16 %v1745
        %v1778 = vunpack.c.l.b16 %v1746
        %v1779 = vpack.c.b16 %v1772, %v1771
        %v1780 = vpack.c.b16 %v1774, %v1773
        %v1781 = vpack.c.b16 %v1776, %v1775
        %v1782 = vpack.c.b16 %v1778, %v1777
        %v1803 = vunpack.c.l.b16 %v1747
        %v1804 = vunpack.c.l.b16 %v1748
        %v1805 = vunpack.c.l.b16 %v1749
        %v1806 = vunpack.c.l.b16 %v1750
        %v1807 = vunpack.c.l.b16 %v1751
        %v1808 = vunpack.c.l.b16 %v1752
        %v1809 = vunpack.c.l.b16 %v1753
        %v1810 = vunpack.c.l.b16 %v1754
        %v1811 = vunpack.c.l.b16 %v1755
        %v1812 = vunpack.c.l.b16 %v1756
        %v1813 = vunpack.c.l.b16 %v1757
        %v1814 = vunpack.c.l.b16 %v1758
        %v1815 = vunpack.c.l.b16 %v1759
        %v1816 = vunpack.c.l.b16 %v1760
        %v1817 = vunpack.c.l.b16 %v1761
        %v1818 = vunpack.c.l.b16 %v1762
        %v1819 = vpack.c.b16 %v1804, %v1803
        %v1820 = vpack.c.b16 %v1806, %v1805
        %v1821 = vpack.c.b16 %v1808, %v1807
        %v1822 = vpack.c.b16 %v1810, %v1809
        %v1823 = vpack.c.b16 %v1812, %v1811
        %v1824 = vpack.c.b16 %v1814, %v1813
        %v1825 = vpack.c.b16 %v1816, %v1815
        %v1826 = vpack.c.b16 %v1818, %v1817
        %1835 = vmatpush.bf16.msra.mxu0 %v1826
        %1836 = vmatpush.bf16.msra.mxu0 %v1825
        %1837 = vmatpush.bf16.msra.mxu0 %v1824
        %1838 = vmatpush.bf16.msra.mxu0 %v1823
        %1839 = vmatpush.bf16.msra.mxu0 %v1822
        %1840 = vmatpush.bf16.msra.mxu0 %v1821
        %1841 = vmatpush.bf16.msra.mxu0 %v1820
        %1842 = vmatpush.bf16.msra.mxu0 %v1819
        %1843 = vmatmul.bf16.gmra.mxu0 %v1779
        %v1844 = vpop.f32.mrf.mxu0
        %v1845 = vadd.f32 0.0, %v1844
        %v1846 = vpop.f32.mrf.mxu0
        %v1847 = vadd.f32 0.0, %v1846
        %1848 = vmatmul.bf16.gmra.mxu0 %v1780
        %v1849 = vpop.f32.mrf.mxu0
        %v1850 = vadd.f32 0.0, %v1849
        %v1851 = vpop.f32.mrf.mxu0
        %v1852 = vadd.f32 0.0, %v1851
        %1853 = vmatmul.bf16.gmra.mxu0 %v1781
        %v1854 = vpop.f32.mrf.mxu0
        %v1855 = vadd.f32 0.0, %v1854
        %v1856 = vpop.f32.mrf.mxu0
        %v1857 = vadd.f32 0.0, %v1856
        %1858 = vmatmul.bf16.gmra.mxu0 %v1782
        %v1859 = vpop.f32.mrf.mxu0
        %v1860 = vadd.f32 0.0, %v1859
        %v1861 = vpop.f32.mrf.mxu0
        %v1862 = vadd.f32 0.0, %v1861
        %1863 = vdwg.mxu0
        %v1864 = vadd.f32 %v1730, %v1845
        %v1865 = vadd.f32 %v1731, %v1847
        %v1866 = vadd.f32 %v1732, %v1850
        %v1867 = vadd.f32 %v1733, %v1852
        %v1868 = vadd.f32 %v1734, %v1855
        %v1869 = vadd.f32 %v1735, %v1857
        %v1870 = vadd.f32 %v1736, %v1860
        %v1871 = vadd.f32 %v1737, %v1862
        %s1872 = scalar_lea.vmem %s271, 360 [#allocation3]
        %v1873 = vld [vmem:[%s1872] sm:$0xf]
        %v1874 = vld [vmem:[%s1872 + $0x4] sm:$0xf]
        %v1875 = vld [vmem:[%s1872 + $0x8] sm:$0xf]
        %v1876 = vld [vmem:[%s1872 + $0xc] sm:$0xf]
        %v1877 = vld [vmem:[%s1872 + $0x10] sm:$0xf]
        %v1878 = vld [vmem:[%s1872 + $0x14] sm:$0xf]
        %v1879 = vld [vmem:[%s1872 + $0x18] sm:$0xf]
        %v1880 = vld [vmem:[%s1872 + $0x1c] sm:$0xf]
        %v1881 = vld [vmem:[%s652] sm:$0xf]
        %v1882 = vld [vmem:[%s652 + $0x4] sm:$0xf]
        %v1883 = vld [vmem:[%s652 + $0x8] sm:$0xf]
        %v1884 = vld [vmem:[%s652 + $0xc] sm:$0xf]
        %v1885 = vld [vmem:[%s652 + $0x10] sm:$0xf]
        %v1886 = vld [vmem:[%s652 + $0x14] sm:$0xf]
        %v1887 = vld [vmem:[%s652 + $0x18] sm:$0xf]
        %v1888 = vld [vmem:[%s652 + $0x1c] sm:$0xf]
        %v1889 = vld [vmem:[%s652 + $0x20] sm:$0xf]
        %v1890 = vld [vmem:[%s652 + $0x24] sm:$0xf]
        %v1891 = vld [vmem:[%s652 + $0x28] sm:$0xf]
        %v1892 = vld [vmem:[%s652 + $0x2c] sm:$0xf]
        %v1893 = vld [vmem:[%s652 + $0x30] sm:$0xf]
        %v1894 = vld [vmem:[%s652 + $0x34] sm:$0xf]
        %v1895 = vld [vmem:[%s652 + $0x38] sm:$0xf]
        %v1896 = vld [vmem:[%s652 + $0x3c] sm:$0xf]
        %v1905 = vunpack.c.l.b16 %v1873
        %v1906 = vunpack.c.l.b16 %v1874
        %v1907 = vunpack.c.l.b16 %v1875
        %v1908 = vunpack.c.l.b16 %v1876
        %v1909 = vunpack.c.l.b16 %v1877
        %v1910 = vunpack.c.l.b16 %v1878
        %v1911 = vunpack.c.l.b16 %v1879
        %v1912 = vunpack.c.l.b16 %v1880
        %v1913 = vpack.c.b16 %v1906, %v1905
        %v1914 = vpack.c.b16 %v1908, %v1907
        %v1915 = vpack.c.b16 %v1910, %v1909
        %v1916 = vpack.c.b16 %v1912, %v1911
        %v1937 = vunpack.c.l.b16 %v1881
        %v1938 = vunpack.c.l.b16 %v1882
        %v1939 = vunpack.c.l.b16 %v1883
        %v1940 = vunpack.c.l.b16 %v1884
        %v1941 = vunpack.c.l.b16 %v1885
        %v1942 = vunpack.c.l.b16 %v1886
        %v1943 = vunpack.c.l.b16 %v1887
        %v1944 = vunpack.c.l.b16 %v1888
        %v1945 = vunpack.c.l.b16 %v1889
        %v1946 = vunpack.c.l.b16 %v1890
        %v1947 = vunpack.c.l.b16 %v1891
        %v1948 = vunpack.c.l.b16 %v1892
        %v1949 = vunpack.c.l.b16 %v1893
        %v1950 = vunpack.c.l.b16 %v1894
        %v1951 = vunpack.c.l.b16 %v1895
        %v1952 = vunpack.c.l.b16 %v1896
        %v1953 = vpack.c.b16 %v1938, %v1937
        %v1954 = vpack.c.b16 %v1940, %v1939
        %v1955 = vpack.c.b16 %v1942, %v1941
        %v1956 = vpack.c.b16 %v1944, %v1943
        %v1957 = vpack.c.b16 %v1946, %v1945
        %v1958 = vpack.c.b16 %v1948, %v1947
        %v1959 = vpack.c.b16 %v1950, %v1949
        %v1960 = vpack.c.b16 %v1952, %v1951
        %1969 = vmatpush.bf16.msra.mxu0 %v1960
        %1970 = vmatpush.bf16.msra.mxu0 %v1959
        %1971 = vmatpush.bf16.msra.mxu0 %v1958
        %1972 = vmatpush.bf16.msra.mxu0 %v1957
        %1973 = vmatpush.bf16.msra.mxu0 %v1956
        %1974 = vmatpush.bf16.msra.mxu0 %v1955
        %1975 = vmatpush.bf16.msra.mxu0 %v1954
        %1976 = vmatpush.bf16.msra.mxu0 %v1953
        %1977 = vmatmul.bf16.gmra.mxu0 %v1913
        %v1978 = vpop.f32.mrf.mxu0
        %v1979 = vadd.f32 0.0, %v1978
        %v1980 = vpop.f32.mrf.mxu0
        %v1981 = vadd.f32 0.0, %v1980
        %1982 = vmatmul.bf16.gmra.mxu0 %v1914
        %v1983 = vpop.f32.mrf.mxu0
        %v1984 = vadd.f32 0.0, %v1983
        %v1985 = vpop.f32.mrf.mxu0
        %v1986 = vadd.f32 0.0, %v1985
        %1987 = vmatmul.bf16.gmra.mxu0 %v1915
        %v1988 = vpop.f32.mrf.mxu0
        %v1989 = vadd.f32 0.0, %v1988
        %v1990 = vpop.f32.mrf.mxu0
        %v1991 = vadd.f32 0.0, %v1990
        %1992 = vmatmul.bf16.gmra.mxu0 %v1916
        %v1993 = vpop.f32.mrf.mxu0
        %v1994 = vadd.f32 0.0, %v1993
        %v1995 = vpop.f32.mrf.mxu0
        %v1996 = vadd.f32 0.0, %v1995
        %1997 = vdwg.mxu0
        %v1998 = vadd.f32 %v1864, %v1979
        %v1999 = vadd.f32 %v1865, %v1981
        %v2000 = vadd.f32 %v1866, %v1984
        %v2001 = vadd.f32 %v1867, %v1986
        %v2002 = vadd.f32 %v1868, %v1989
        %v2003 = vadd.f32 %v1869, %v1991
        %v2004 = vadd.f32 %v1870, %v1994
        %v2005 = vadd.f32 %v1871, %v1996
        %s2006 = scalar_lea.vmem %s271, 44 [#allocation3]
        %v2007 = vld [vmem:[%s2006] sm:$0xf]
        %v2008 = vld [vmem:[%s2006 + $0x4] sm:$0xf]
        %v2009 = vld [vmem:[%s2006 + $0x8] sm:$0xf]
        %v2010 = vld [vmem:[%s2006 + $0xc] sm:$0xf]
        %v2011 = vld [vmem:[%s2006 + $0x10] sm:$0xf]
        %v2012 = vld [vmem:[%s2006 + $0x14] sm:$0xf]
        %v2013 = vld [vmem:[%s2006 + $0x18] sm:$0xf]
        %v2014 = vld [vmem:[%s2006 + $0x1c] sm:$0xf]
        %v2015 = vld [vmem:[%s787] sm:$0xf]
        %v2016 = vld [vmem:[%s787 + $0x4] sm:$0xf]
        %v2017 = vld [vmem:[%s787 + $0x8] sm:$0xf]
        %v2018 = vld [vmem:[%s787 + $0xc] sm:$0xf]
        %v2019 = vld [vmem:[%s787 + $0x10] sm:$0xf]
        %v2020 = vld [vmem:[%s787 + $0x14] sm:$0xf]
        %v2021 = vld [vmem:[%s787 + $0x18] sm:$0xf]
        %v2022 = vld [vmem:[%s787 + $0x1c] sm:$0xf]
        %v2023 = vld [vmem:[%s787 + $0x20] sm:$0xf]
        %v2024 = vld [vmem:[%s787 + $0x24] sm:$0xf]
        %v2025 = vld [vmem:[%s787 + $0x28] sm:$0xf]
        %v2026 = vld [vmem:[%s787 + $0x2c] sm:$0xf]
        %v2027 = vld [vmem:[%s787 + $0x30] sm:$0xf]
        %v2028 = vld [vmem:[%s787 + $0x34] sm:$0xf]
        %v2029 = vld [vmem:[%s787 + $0x38] sm:$0xf]
        %v2030 = vld [vmem:[%s787 + $0x3c] sm:$0xf]
        %v2039 = vunpack.c.l.b16 %v2007
        %v2040 = vunpack.c.l.b16 %v2008
        %v2041 = vunpack.c.l.b16 %v2009
        %v2042 = vunpack.c.l.b16 %v2010
        %v2043 = vunpack.c.l.b16 %v2011
        %v2044 = vunpack.c.l.b16 %v2012
        %v2045 = vunpack.c.l.b16 %v2013
        %v2046 = vunpack.c.l.b16 %v2014
        %v2047 = vpack.c.b16 %v2040, %v2039
        %v2048 = vpack.c.b16 %v2042, %v2041
        %v2049 = vpack.c.b16 %v2044, %v2043
        %v2050 = vpack.c.b16 %v2046, %v2045
        %v2071 = vunpack.c.l.b16 %v2015
        %v2072 = vunpack.c.l.b16 %v2016
        %v2073 = vunpack.c.l.b16 %v2017
        %v2074 = vunpack.c.l.b16 %v2018
        %v2075 = vunpack.c.l.b16 %v2019
        %v2076 = vunpack.c.l.b16 %v2020
        %v2077 = vunpack.c.l.b16 %v2021
        %v2078 = vunpack.c.l.b16 %v2022
        %v2079 = vunpack.c.l.b16 %v2023
        %v2080 = vunpack.c.l.b16 %v2024
        %v2081 = vunpack.c.l.b16 %v2025
        %v2082 = vunpack.c.l.b16 %v2026
        %v2083 = vunpack.c.l.b16 %v2027
        %v2084 = vunpack.c.l.b16 %v2028
        %v2085 = vunpack.c.l.b16 %v2029
        %v2086 = vunpack.c.l.b16 %v2030
        %v2087 = vpack.c.b16 %v2072, %v2071
        %v2088 = vpack.c.b16 %v2074, %v2073
        %v2089 = vpack.c.b16 %v2076, %v2075
        %v2090 = vpack.c.b16 %v2078, %v2077
        %v2091 = vpack.c.b16 %v2080, %v2079
        %v2092 = vpack.c.b16 %v2082, %v2081
        %v2093 = vpack.c.b16 %v2084, %v2083
        %v2094 = vpack.c.b16 %v2086, %v2085
        %2103 = vmatpush.bf16.msra.mxu0 %v2094
        %2104 = vmatpush.bf16.msra.mxu0 %v2093
        %2105 = vmatpush.bf16.msra.mxu0 %v2092
        %2106 = vmatpush.bf16.msra.mxu0 %v2091
        %2107 = vmatpush.bf16.msra.mxu0 %v2090
        %2108 = vmatpush.bf16.msra.mxu0 %v2089
        %2109 = vmatpush.bf16.msra.mxu0 %v2088
        %2110 = vmatpush.bf16.msra.mxu0 %v2087
        %2111 = vmatmul.bf16.gmra.mxu0 %v2047
        %v2112 = vpop.f32.mrf.mxu0
        %v2113 = vadd.f32 0.0, %v2112
        %v2114 = vpop.f32.mrf.mxu0
        %v2115 = vadd.f32 0.0, %v2114
        %2116 = vmatmul.bf16.gmra.mxu0 %v2048
        %v2117 = vpop.f32.mrf.mxu0
        %v2118 = vadd.f32 0.0, %v2117
        %v2119 = vpop.f32.mrf.mxu0
        %v2120 = vadd.f32 0.0, %v2119
        %2121 = vmatmul.bf16.gmra.mxu0 %v2049
        %v2122 = vpop.f32.mrf.mxu0
        %v2123 = vadd.f32 0.0, %v2122
        %v2124 = vpop.f32.mrf.mxu0
        %v2125 = vadd.f32 0.0, %v2124
        %2126 = vmatmul.bf16.gmra.mxu0 %v2050
        %v2127 = vpop.f32.mrf.mxu0
        %v2128 = vadd.f32 0.0, %v2127
        %v2129 = vpop.f32.mrf.mxu0
        %v2130 = vadd.f32 0.0, %v2129
        %2131 = vdwg.mxu0
        %v2132 = vadd.f32 %v1998, %v2113
        %v2133 = vadd.f32 %v1999, %v2115
        %v2134 = vadd.f32 %v2000, %v2118
        %v2135 = vadd.f32 %v2001, %v2120
        %v2136 = vadd.f32 %v2002, %v2123
        %v2137 = vadd.f32 %v2003, %v2125
        %v2138 = vadd.f32 %v2004, %v2128
        %v2139 = vadd.f32 %v2005, %v2130
        %s2140 = scalar_lea.vmem %s271, 204 [#allocation3]
        %v2141 = vld [vmem:[%s2140] sm:$0xf]
        %v2142 = vld [vmem:[%s2140 + $0x4] sm:$0xf]
        %v2143 = vld [vmem:[%s2140 + $0x8] sm:$0xf]
        %v2144 = vld [vmem:[%s2140 + $0xc] sm:$0xf]
        %v2145 = vld [vmem:[%s2140 + $0x10] sm:$0xf]
        %v2146 = vld [vmem:[%s2140 + $0x14] sm:$0xf]
        %v2147 = vld [vmem:[%s2140 + $0x18] sm:$0xf]
        %v2148 = vld [vmem:[%s2140 + $0x1c] sm:$0xf]
        %v2149 = vld [vmem:[%s922] sm:$0xf]
        %v2150 = vld [vmem:[%s922 + $0x4] sm:$0xf]
        %v2151 = vld [vmem:[%s922 + $0x8] sm:$0xf]
        %v2152 = vld [vmem:[%s922 + $0xc] sm:$0xf]
        %v2153 = vld [vmem:[%s922 + $0x10] sm:$0xf]
        %v2154 = vld [vmem:[%s922 + $0x14] sm:$0xf]
        %v2155 = vld [vmem:[%s922 + $0x18] sm:$0xf]
        %v2156 = vld [vmem:[%s922 + $0x1c] sm:$0xf]
        %v2157 = vld [vmem:[%s922 + $0x20] sm:$0xf]
        %v2158 = vld [vmem:[%s922 + $0x24] sm:$0xf]
        %v2159 = vld [vmem:[%s922 + $0x28] sm:$0xf]
        %v2160 = vld [vmem:[%s922 + $0x2c] sm:$0xf]
        %v2161 = vld [vmem:[%s922 + $0x30] sm:$0xf]
        %v2162 = vld [vmem:[%s922 + $0x34] sm:$0xf]
        %v2163 = vld [vmem:[%s922 + $0x38] sm:$0xf]
        %v2164 = vld [vmem:[%s922 + $0x3c] sm:$0xf]
        %v2173 = vunpack.c.l.b16 %v2141
        %v2174 = vunpack.c.l.b16 %v2142
        %v2175 = vunpack.c.l.b16 %v2143
        %v2176 = vunpack.c.l.b16 %v2144
        %v2177 = vunpack.c.l.b16 %v2145
        %v2178 = vunpack.c.l.b16 %v2146
        %v2179 = vunpack.c.l.b16 %v2147
        %v2180 = vunpack.c.l.b16 %v2148
        %v2181 = vpack.c.b16 %v2174, %v2173
        %v2182 = vpack.c.b16 %v2176, %v2175
        %v2183 = vpack.c.b16 %v2178, %v2177
        %v2184 = vpack.c.b16 %v2180, %v2179
        %v2205 = vunpack.c.l.b16 %v2149
        %v2206 = vunpack.c.l.b16 %v2150
        %v2207 = vunpack.c.l.b16 %v2151
        %v2208 = vunpack.c.l.b16 %v2152
        %v2209 = vunpack.c.l.b16 %v2153
        %v2210 = vunpack.c.l.b16 %v2154
        %v2211 = vunpack.c.l.b16 %v2155
        %v2212 = vunpack.c.l.b16 %v2156
        %v2213 = vunpack.c.l.b16 %v2157
        %v2214 = vunpack.c.l.b16 %v2158
        %v2215 = vunpack.c.l.b16 %v2159
        %v2216 = vunpack.c.l.b16 %v2160
        %v2217 = vunpack.c.l.b16 %v2161
        %v2218 = vunpack.c.l.b16 %v2162
        %v2219 = vunpack.c.l.b16 %v2163
        %v2220 = vunpack.c.l.b16 %v2164
        %v2221 = vpack.c.b16 %v2206, %v2205
        %v2222 = vpack.c.b16 %v2208, %v2207
        %v2223 = vpack.c.b16 %v2210, %v2209
        %v2224 = vpack.c.b16 %v2212, %v2211
        %v2225 = vpack.c.b16 %v2214, %v2213
        %v2226 = vpack.c.b16 %v2216, %v2215
        %v2227 = vpack.c.b16 %v2218, %v2217
        %v2228 = vpack.c.b16 %v2220, %v2219
        %2237 = vmatpush.bf16.msra.mxu0 %v2228
        %2238 = vmatpush.bf16.msra.mxu0 %v2227
        %2239 = vmatpush.bf16.msra.mxu0 %v2226
        %2240 = vmatpush.bf16.msra.mxu0 %v2225
        %2241 = vmatpush.bf16.msra.mxu0 %v2224
        %2242 = vmatpush.bf16.msra.mxu0 %v2223
        %2243 = vmatpush.bf16.msra.mxu0 %v2222
        %2244 = vmatpush.bf16.msra.mxu0 %v2221
        %2245 = vmatmul.bf16.gmra.mxu0 %v2181
        %v2246 = vpop.f32.mrf.mxu0
        %v2247 = vadd.f32 0.0, %v2246
        %v2248 = vpop.f32.mrf.mxu0
        %v2249 = vadd.f32 0.0, %v2248
        %2250 = vmatmul.bf16.gmra.mxu0 %v2182
        %v2251 = vpop.f32.mrf.mxu0
        %v2252 = vadd.f32 0.0, %v2251
        %v2253 = vpop.f32.mrf.mxu0
        %v2254 = vadd.f32 0.0, %v2253
        %2255 = vmatmul.bf16.gmra.mxu0 %v2183
        %v2256 = vpop.f32.mrf.mxu0
        %v2257 = vadd.f32 0.0, %v2256
        %v2258 = vpop.f32.mrf.mxu0
        %v2259 = vadd.f32 0.0, %v2258
        %2260 = vmatmul.bf16.gmra.mxu0 %v2184
        %v2261 = vpop.f32.mrf.mxu0
        %v2262 = vadd.f32 0.0, %v2261
        %v2263 = vpop.f32.mrf.mxu0
        %v2264 = vadd.f32 0.0, %v2263
        %2265 = vdwg.mxu0
        %v2266 = vadd.f32 %v2132, %v2247
        %v2267 = vadd.f32 %v2133, %v2249
        %v2268 = vadd.f32 %v2134, %v2252
        %v2269 = vadd.f32 %v2135, %v2254
        %v2270 = vadd.f32 %v2136, %v2257
        %v2271 = vadd.f32 %v2137, %v2259
        %v2272 = vadd.f32 %v2138, %v2262
        %v2273 = vadd.f32 %v2139, %v2264
        %s2274 = scalar_lea.vmem %s271, 364 [#allocation3]
        %v2275 = vld [vmem:[%s2274] sm:$0xf]
        %v2276 = vld [vmem:[%s2274 + $0x4] sm:$0xf]
        %v2277 = vld [vmem:[%s2274 + $0x8] sm:$0xf]
        %v2278 = vld [vmem:[%s2274 + $0xc] sm:$0xf]
        %v2279 = vld [vmem:[%s2274 + $0x10] sm:$0xf]
        %v2280 = vld [vmem:[%s2274 + $0x14] sm:$0xf]
        %v2281 = vld [vmem:[%s2274 + $0x18] sm:$0xf]
        %v2282 = vld [vmem:[%s2274 + $0x1c] sm:$0xf]
        %v2283 = vld [vmem:[%s1057] sm:$0xf]
        %v2284 = vld [vmem:[%s1057 + $0x4] sm:$0xf]
        %v2285 = vld [vmem:[%s1057 + $0x8] sm:$0xf]
        %v2286 = vld [vmem:[%s1057 + $0xc] sm:$0xf]
        %v2287 = vld [vmem:[%s1057 + $0x10] sm:$0xf]
        %v2288 = vld [vmem:[%s1057 + $0x14] sm:$0xf]
        %v2289 = vld [vmem:[%s1057 + $0x18] sm:$0xf]
        %v2290 = vld [vmem:[%s1057 + $0x1c] sm:$0xf]
        %v2291 = vld [vmem:[%s1057 + $0x20] sm:$0xf]
        %v2292 = vld [vmem:[%s1057 + $0x24] sm:$0xf]
        %v2293 = vld [vmem:[%s1057 + $0x28] sm:$0xf]
        %v2294 = vld [vmem:[%s1057 + $0x2c] sm:$0xf]
        %v2295 = vld [vmem:[%s1057 + $0x30] sm:$0xf]
        %v2296 = vld [vmem:[%s1057 + $0x34] sm:$0xf]
        %v2297 = vld [vmem:[%s1057 + $0x38] sm:$0xf]
        %v2298 = vld [vmem:[%s1057 + $0x3c] sm:$0xf]
        %v2307 = vunpack.c.l.b16 %v2275
        %v2308 = vunpack.c.l.b16 %v2276
        %v2309 = vunpack.c.l.b16 %v2277
        %v2310 = vunpack.c.l.b16 %v2278
        %v2311 = vunpack.c.l.b16 %v2279
        %v2312 = vunpack.c.l.b16 %v2280
        %v2313 = vunpack.c.l.b16 %v2281
        %v2314 = vunpack.c.l.b16 %v2282
        %v2315 = vpack.c.b16 %v2308, %v2307
        %v2316 = vpack.c.b16 %v2310, %v2309
        %v2317 = vpack.c.b16 %v2312, %v2311
        %v2318 = vpack.c.b16 %v2314, %v2313
        %v2339 = vunpack.c.l.b16 %v2283
        %v2340 = vunpack.c.l.b16 %v2284
        %v2341 = vunpack.c.l.b16 %v2285
        %v2342 = vunpack.c.l.b16 %v2286
        %v2343 = vunpack.c.l.b16 %v2287
        %v2344 = vunpack.c.l.b16 %v2288
        %v2345 = vunpack.c.l.b16 %v2289
        %v2346 = vunpack.c.l.b16 %v2290
        %v2347 = vunpack.c.l.b16 %v2291
        %v2348 = vunpack.c.l.b16 %v2292
        %v2349 = vunpack.c.l.b16 %v2293
        %v2350 = vunpack.c.l.b16 %v2294
        %v2351 = vunpack.c.l.b16 %v2295
        %v2352 = vunpack.c.l.b16 %v2296
        %v2353 = vunpack.c.l.b16 %v2297
        %v2354 = vunpack.c.l.b16 %v2298
        %v2355 = vpack.c.b16 %v2340, %v2339
        %v2356 = vpack.c.b16 %v2342, %v2341
        %v2357 = vpack.c.b16 %v2344, %v2343
        %v2358 = vpack.c.b16 %v2346, %v2345
        %v2359 = vpack.c.b16 %v2348, %v2347
        %v2360 = vpack.c.b16 %v2350, %v2349
        %v2361 = vpack.c.b16 %v2352, %v2351
        %v2362 = vpack.c.b16 %v2354, %v2353
        %2371 = vmatpush.bf16.msra.mxu0 %v2362
        %2372 = vmatpush.bf16.msra.mxu0 %v2361
        %2373 = vmatpush.bf16.msra.mxu0 %v2360
        %2374 = vmatpush.bf16.msra.mxu0 %v2359
        %2375 = vmatpush.bf16.msra.mxu0 %v2358
        %2376 = vmatpush.bf16.msra.mxu0 %v2357
        %2377 = vmatpush.bf16.msra.mxu0 %v2356
        %2378 = vmatpush.bf16.msra.mxu0 %v2355
        %2379 = vmatmul.bf16.gmra.mxu0 %v2315
        %v2380 = vpop.f32.mrf.mxu0
        %v2381 = vadd.f32 0.0, %v2380
        %v2382 = vpop.f32.mrf.mxu0
        %v2383 = vadd.f32 0.0, %v2382
        %2384 = vmatmul.bf16.gmra.mxu0 %v2316
        %v2385 = vpop.f32.mrf.mxu0
        %v2386 = vadd.f32 0.0, %v2385
        %v2387 = vpop.f32.mrf.mxu0
        %v2388 = vadd.f32 0.0, %v2387
        %2389 = vmatmul.bf16.gmra.mxu0 %v2317
        %v2390 = vpop.f32.mrf.mxu0
        %v2391 = vadd.f32 0.0, %v2390
        %v2392 = vpop.f32.mrf.mxu0
        %v2393 = vadd.f32 0.0, %v2392
        %2394 = vmatmul.bf16.gmra.mxu0 %v2318
        %v2395 = vpop.f32.mrf.mxu0
        %v2396 = vadd.f32 0.0, %v2395
        %v2397 = vpop.f32.mrf.mxu0
        %v2398 = vadd.f32 0.0, %v2397
        %2399 = vdwg.mxu0
        %v2400 = vadd.f32 %v2266, %v2381
        %v2401 = vadd.f32 %v2267, %v2383
        %v2402 = vadd.f32 %v2268, %v2386
        %v2403 = vadd.f32 %v2269, %v2388
        %v2404 = vadd.f32 %v2270, %v2391
        %v2405 = vadd.f32 %v2271, %v2393
        %v2406 = vadd.f32 %v2272, %v2396
        %v2407 = vadd.f32 %v2273, %v2398
        %s2408 = scalar_lea.vmem %s271, 48 [#allocation3]
        %v2409 = vld [vmem:[%s2408] sm:$0xf]
        %v2410 = vld [vmem:[%s2408 + $0x4] sm:$0xf]
        %v2411 = vld [vmem:[%s2408 + $0x8] sm:$0xf]
        %v2412 = vld [vmem:[%s2408 + $0xc] sm:$0xf]
        %v2413 = vld [vmem:[%s2408 + $0x10] sm:$0xf]
        %v2414 = vld [vmem:[%s2408 + $0x14] sm:$0xf]
        %v2415 = vld [vmem:[%s2408 + $0x18] sm:$0xf]
        %v2416 = vld [vmem:[%s2408 + $0x1c] sm:$0xf]
        %v2417 = vld [vmem:[%s1192] sm:$0xf]
        %v2418 = vld [vmem:[%s1192 + $0x4] sm:$0xf]
        %v2419 = vld [vmem:[%s1192 + $0x8] sm:$0xf]
        %v2420 = vld [vmem:[%s1192 + $0xc] sm:$0xf]
        %v2421 = vld [vmem:[%s1192 + $0x10] sm:$0xf]
        %v2422 = vld [vmem:[%s1192 + $0x14] sm:$0xf]
        %v2423 = vld [vmem:[%s1192 + $0x18] sm:$0xf]
        %v2424 = vld [vmem:[%s1192 + $0x1c] sm:$0xf]
        %v2425 = vld [vmem:[%s1192 + $0x20] sm:$0xf]
        %v2426 = vld [vmem:[%s1192 + $0x24] sm:$0xf]
        %v2427 = vld [vmem:[%s1192 + $0x28] sm:$0xf]
        %v2428 = vld [vmem:[%s1192 + $0x2c] sm:$0xf]
        %v2429 = vld [vmem:[%s1192 + $0x30] sm:$0xf]
        %v2430 = vld [vmem:[%s1192 + $0x34] sm:$0xf]
        %v2431 = vld [vmem:[%s1192 + $0x38] sm:$0xf]
        %v2432 = vld [vmem:[%s1192 + $0x3c] sm:$0xf]
        %v2441 = vunpack.c.l.b16 %v2409
        %v2442 = vunpack.c.l.b16 %v2410
        %v2443 = vunpack.c.l.b16 %v2411
        %v2444 = vunpack.c.l.b16 %v2412
        %v2445 = vunpack.c.l.b16 %v2413
        %v2446 = vunpack.c.l.b16 %v2414
        %v2447 = vunpack.c.l.b16 %v2415
        %v2448 = vunpack.c.l.b16 %v2416
        %v2449 = vpack.c.b16 %v2442, %v2441
        %v2450 = vpack.c.b16 %v2444, %v2443
        %v2451 = vpack.c.b16 %v2446, %v2445
        %v2452 = vpack.c.b16 %v2448, %v2447
        %v2473 = vunpack.c.l.b16 %v2417
        %v2474 = vunpack.c.l.b16 %v2418
        %v2475 = vunpack.c.l.b16 %v2419
        %v2476 = vunpack.c.l.b16 %v2420
        %v2477 = vunpack.c.l.b16 %v2421
        %v2478 = vunpack.c.l.b16 %v2422
        %v2479 = vunpack.c.l.b16 %v2423
        %v2480 = vunpack.c.l.b16 %v2424
        %v2481 = vunpack.c.l.b16 %v2425
        %v2482 = vunpack.c.l.b16 %v2426
        %v2483 = vunpack.c.l.b16 %v2427
        %v2484 = vunpack.c.l.b16 %v2428
        %v2485 = vunpack.c.l.b16 %v2429
        %v2486 = vunpack.c.l.b16 %v2430
        %v2487 = vunpack.c.l.b16 %v2431
        %v2488 = vunpack.c.l.b16 %v2432
        %v2489 = vpack.c.b16 %v2474, %v2473
        %v2490 = vpack.c.b16 %v2476, %v2475
        %v2491 = vpack.c.b16 %v2478, %v2477
        %v2492 = vpack.c.b16 %v2480, %v2479
        %v2493 = vpack.c.b16 %v2482, %v2481
        %v2494 = vpack.c.b16 %v2484, %v2483
        %v2495 = vpack.c.b16 %v2486, %v2485
        %v2496 = vpack.c.b16 %v2488, %v2487
        %2505 = vmatpush.bf16.msra.mxu0 %v2496
        %2506 = vmatpush.bf16.msra.mxu0 %v2495
        %2507 = vmatpush.bf16.msra.mxu0 %v2494
        %2508 = vmatpush.bf16.msra.mxu0 %v2493
        %2509 = vmatpush.bf16.msra.mxu0 %v2492
        %2510 = vmatpush.bf16.msra.mxu0 %v2491
        %2511 = vmatpush.bf16.msra.mxu0 %v2490
        %2512 = vmatpush.bf16.msra.mxu0 %v2489
        %2513 = vmatmul.bf16.gmra.mxu0 %v2449
        %v2514 = vpop.f32.mrf.mxu0
        %v2515 = vadd.f32 0.0, %v2514
        %v2516 = vpop.f32.mrf.mxu0
        %v2517 = vadd.f32 0.0, %v2516
        %2518 = vmatmul.bf16.gmra.mxu0 %v2450
        %v2519 = vpop.f32.mrf.mxu0
        %v2520 = vadd.f32 0.0, %v2519
        %v2521 = vpop.f32.mrf.mxu0
        %v2522 = vadd.f32 0.0, %v2521
        %2523 = vmatmul.bf16.gmra.mxu0 %v2451
        %v2524 = vpop.f32.mrf.mxu0
        %v2525 = vadd.f32 0.0, %v2524
        %v2526 = vpop.f32.mrf.mxu0
        %v2527 = vadd.f32 0.0, %v2526
        %2528 = vmatmul.bf16.gmra.mxu0 %v2452
        %v2529 = vpop.f32.mrf.mxu0
        %v2530 = vadd.f32 0.0, %v2529
        %v2531 = vpop.f32.mrf.mxu0
        %v2532 = vadd.f32 0.0, %v2531
        %2533 = vdwg.mxu0
        %v2534 = vadd.f32 %v2400, %v2515
        %v2535 = vadd.f32 %v2401, %v2517
        %v2536 = vadd.f32 %v2402, %v2520
        %v2537 = vadd.f32 %v2403, %v2522
        %v2538 = vadd.f32 %v2404, %v2525
        %v2539 = vadd.f32 %v2405, %v2527
        %v2540 = vadd.f32 %v2406, %v2530
        %v2541 = vadd.f32 %v2407, %v2532
        %s2542 = scalar_lea.vmem %s271, 208 [#allocation3]
        %v2543 = vld [vmem:[%s2542] sm:$0xf]
        %v2544 = vld [vmem:[%s2542 + $0x4] sm:$0xf]
        %v2545 = vld [vmem:[%s2542 + $0x8] sm:$0xf]
        %v2546 = vld [vmem:[%s2542 + $0xc] sm:$0xf]
        %v2547 = vld [vmem:[%s2542 + $0x10] sm:$0xf]
        %v2548 = vld [vmem:[%s2542 + $0x14] sm:$0xf]
        %v2549 = vld [vmem:[%s2542 + $0x18] sm:$0xf]
        %v2550 = vld [vmem:[%s2542 + $0x1c] sm:$0xf]
        %v2551 = vld [vmem:[%s1327] sm:$0xf]
        %v2552 = vld [vmem:[%s1327 + $0x4] sm:$0xf]
        %v2553 = vld [vmem:[%s1327 + $0x8] sm:$0xf]
        %v2554 = vld [vmem:[%s1327 + $0xc] sm:$0xf]
        %v2555 = vld [vmem:[%s1327 + $0x10] sm:$0xf]
        %v2556 = vld [vmem:[%s1327 + $0x14] sm:$0xf]
        %v2557 = vld [vmem:[%s1327 + $0x18] sm:$0xf]
        %v2558 = vld [vmem:[%s1327 + $0x1c] sm:$0xf]
        %v2559 = vld [vmem:[%s1327 + $0x20] sm:$0xf]
        %v2560 = vld [vmem:[%s1327 + $0x24] sm:$0xf]
        %v2561 = vld [vmem:[%s1327 + $0x28] sm:$0xf]
        %v2562 = vld [vmem:[%s1327 + $0x2c] sm:$0xf]
        %v2563 = vld [vmem:[%s1327 + $0x30] sm:$0xf]
        %v2564 = vld [vmem:[%s1327 + $0x34] sm:$0xf]
        %v2565 = vld [vmem:[%s1327 + $0x38] sm:$0xf]
        %v2566 = vld [vmem:[%s1327 + $0x3c] sm:$0xf]
        %v2575 = vunpack.c.l.b16 %v2543
        %v2576 = vunpack.c.l.b16 %v2544
        %v2577 = vunpack.c.l.b16 %v2545
        %v2578 = vunpack.c.l.b16 %v2546
        %v2579 = vunpack.c.l.b16 %v2547
        %v2580 = vunpack.c.l.b16 %v2548
        %v2581 = vunpack.c.l.b16 %v2549
        %v2582 = vunpack.c.l.b16 %v2550
        %v2583 = vpack.c.b16 %v2576, %v2575
        %v2584 = vpack.c.b16 %v2578, %v2577
        %v2585 = vpack.c.b16 %v2580, %v2579
        %v2586 = vpack.c.b16 %v2582, %v2581
        %v2607 = vunpack.c.l.b16 %v2551
        %v2608 = vunpack.c.l.b16 %v2552
        %v2609 = vunpack.c.l.b16 %v2553
        %v2610 = vunpack.c.l.b16 %v2554
        %v2611 = vunpack.c.l.b16 %v2555
        %v2612 = vunpack.c.l.b16 %v2556
        %v2613 = vunpack.c.l.b16 %v2557
        %v2614 = vunpack.c.l.b16 %v2558
        %v2615 = vunpack.c.l.b16 %v2559
        %v2616 = vunpack.c.l.b16 %v2560
        %v2617 = vunpack.c.l.b16 %v2561
        %v2618 = vunpack.c.l.b16 %v2562
        %v2619 = vunpack.c.l.b16 %v2563
        %v2620 = vunpack.c.l.b16 %v2564
        %v2621 = vunpack.c.l.b16 %v2565
        %v2622 = vunpack.c.l.b16 %v2566
        %v2623 = vpack.c.b16 %v2608, %v2607
        %v2624 = vpack.c.b16 %v2610, %v2609
        %v2625 = vpack.c.b16 %v2612, %v2611
        %v2626 = vpack.c.b16 %v2614, %v2613
        %v2627 = vpack.c.b16 %v2616, %v2615
        %v2628 = vpack.c.b16 %v2618, %v2617
        %v2629 = vpack.c.b16 %v2620, %v2619
        %v2630 = vpack.c.b16 %v2622, %v2621
        %2639 = vmatpush.bf16.msra.mxu0 %v2630
        %2640 = vmatpush.bf16.msra.mxu0 %v2629
        %2641 = vmatpush.bf16.msra.mxu0 %v2628
        %2642 = vmatpush.bf16.msra.mxu0 %v2627
        %2643 = vmatpush.bf16.msra.mxu0 %v2626
        %2644 = vmatpush.bf16.msra.mxu0 %v2625
        %2645 = vmatpush.bf16.msra.mxu0 %v2624
        %2646 = vmatpush.bf16.msra.mxu0 %v2623
        %2647 = vmatmul.bf16.gmra.mxu0 %v2583
        %v2648 = vpop.f32.mrf.mxu0
        %v2649 = vadd.f32 0.0, %v2648
        %v2650 = vpop.f32.mrf.mxu0
        %v2651 = vadd.f32 0.0, %v2650
        %2652 = vmatmul.bf16.gmra.mxu0 %v2584
        %v2653 = vpop.f32.mrf.mxu0
        %v2654 = vadd.f32 0.0, %v2653
        %v2655 = vpop.f32.mrf.mxu0
        %v2656 = vadd.f32 0.0, %v2655
        %2657 = vmatmul.bf16.gmra.mxu0 %v2585
        %v2658 = vpop.f32.mrf.mxu0
        %v2659 = vadd.f32 0.0, %v2658
        %v2660 = vpop.f32.mrf.mxu0
        %v2661 = vadd.f32 0.0, %v2660
        %2662 = vmatmul.bf16.gmra.mxu0 %v2586
        %v2663 = vpop.f32.mrf.mxu0
        %v2664 = vadd.f32 0.0, %v2663
        %v2665 = vpop.f32.mrf.mxu0
        %v2666 = vadd.f32 0.0, %v2665
        %2667 = vdwg.mxu0
        %v2668 = vadd.f32 %v2534, %v2649
        %v2669 = vadd.f32 %v2535, %v2651
        %v2670 = vadd.f32 %v2536, %v2654
        %v2671 = vadd.f32 %v2537, %v2656
        %v2672 = vadd.f32 %v2538, %v2659
        %v2673 = vadd.f32 %v2539, %v2661
        %v2674 = vadd.f32 %v2540, %v2664
        %v2675 = vadd.f32 %v2541, %v2666
        %s2676 = scalar_lea.vmem %s271, 368 [#allocation3]
        %v2677 = vld [vmem:[%s2676] sm:$0xf]
        %v2678 = vld [vmem:[%s2676 + $0x4] sm:$0xf]
        %v2679 = vld [vmem:[%s2676 + $0x8] sm:$0xf]
        %v2680 = vld [vmem:[%s2676 + $0xc] sm:$0xf]
        %v2681 = vld [vmem:[%s2676 + $0x10] sm:$0xf]
        %v2682 = vld [vmem:[%s2676 + $0x14] sm:$0xf]
        %v2683 = vld [vmem:[%s2676 + $0x18] sm:$0xf]
        %v2684 = vld [vmem:[%s2676 + $0x1c] sm:$0xf]
        %v2685 = vld [vmem:[%s1462] sm:$0xf]
        %v2686 = vld [vmem:[%s1462 + $0x4] sm:$0xf]
        %v2687 = vld [vmem:[%s1462 + $0x8] sm:$0xf]
        %v2688 = vld [vmem:[%s1462 + $0xc] sm:$0xf]
        %v2689 = vld [vmem:[%s1462 + $0x10] sm:$0xf]
        %v2690 = vld [vmem:[%s1462 + $0x14] sm:$0xf]
        %v2691 = vld [vmem:[%s1462 + $0x18] sm:$0xf]
        %v2692 = vld [vmem:[%s1462 + $0x1c] sm:$0xf]
        %v2693 = vld [vmem:[%s1462 + $0x20] sm:$0xf]
        %v2694 = vld [vmem:[%s1462 + $0x24] sm:$0xf]
        %v2695 = vld [vmem:[%s1462 + $0x28] sm:$0xf]
        %v2696 = vld [vmem:[%s1462 + $0x2c] sm:$0xf]
        %v2697 = vld [vmem:[%s1462 + $0x30] sm:$0xf]
        %v2698 = vld [vmem:[%s1462 + $0x34] sm:$0xf]
        %v2699 = vld [vmem:[%s1462 + $0x38] sm:$0xf]
        %v2700 = vld [vmem:[%s1462 + $0x3c] sm:$0xf]
        %v2709 = vunpack.c.l.b16 %v2677
        %v2710 = vunpack.c.l.b16 %v2678
        %v2711 = vunpack.c.l.b16 %v2679
        %v2712 = vunpack.c.l.b16 %v2680
        %v2713 = vunpack.c.l.b16 %v2681
        %v2714 = vunpack.c.l.b16 %v2682
        %v2715 = vunpack.c.l.b16 %v2683
        %v2716 = vunpack.c.l.b16 %v2684
        %v2717 = vpack.c.b16 %v2710, %v2709
        %v2718 = vpack.c.b16 %v2712, %v2711
        %v2719 = vpack.c.b16 %v2714, %v2713
        %v2720 = vpack.c.b16 %v2716, %v2715
        %v2741 = vunpack.c.l.b16 %v2685
        %v2742 = vunpack.c.l.b16 %v2686
        %v2743 = vunpack.c.l.b16 %v2687
        %v2744 = vunpack.c.l.b16 %v2688
        %v2745 = vunpack.c.l.b16 %v2689
        %v2746 = vunpack.c.l.b16 %v2690
        %v2747 = vunpack.c.l.b16 %v2691
        %v2748 = vunpack.c.l.b16 %v2692
        %v2749 = vunpack.c.l.b16 %v2693
        %v2750 = vunpack.c.l.b16 %v2694
        %v2751 = vunpack.c.l.b16 %v2695
        %v2752 = vunpack.c.l.b16 %v2696
        %v2753 = vunpack.c.l.b16 %v2697
        %v2754 = vunpack.c.l.b16 %v2698
        %v2755 = vunpack.c.l.b16 %v2699
        %v2756 = vunpack.c.l.b16 %v2700
        %v2757 = vpack.c.b16 %v2742, %v2741
        %v2758 = vpack.c.b16 %v2744, %v2743
        %v2759 = vpack.c.b16 %v2746, %v2745
        %v2760 = vpack.c.b16 %v2748, %v2747
        %v2761 = vpack.c.b16 %v2750, %v2749
        %v2762 = vpack.c.b16 %v2752, %v2751
        %v2763 = vpack.c.b16 %v2754, %v2753
        %v2764 = vpack.c.b16 %v2756, %v2755
        %2773 = vmatpush.bf16.msra.mxu0 %v2764
        %2774 = vmatpush.bf16.msra.mxu0 %v2763
        %2775 = vmatpush.bf16.msra.mxu0 %v2762
        %2776 = vmatpush.bf16.msra.mxu0 %v2761
        %2777 = vmatpush.bf16.msra.mxu0 %v2760
        %2778 = vmatpush.bf16.msra.mxu0 %v2759
        %2779 = vmatpush.bf16.msra.mxu0 %v2758
        %2780 = vmatpush.bf16.msra.mxu0 %v2757
        %2781 = vmatmul.bf16.gmra.mxu0 %v2717
        %v2782 = vpop.f32.mrf.mxu0
        %v2783 = vadd.f32 0.0, %v2782
        %v2784 = vpop.f32.mrf.mxu0
        %v2785 = vadd.f32 0.0, %v2784
        %2786 = vmatmul.bf16.gmra.mxu0 %v2718
        %v2787 = vpop.f32.mrf.mxu0
        %v2788 = vadd.f32 0.0, %v2787
        %v2789 = vpop.f32.mrf.mxu0
        %v2790 = vadd.f32 0.0, %v2789
        %2791 = vmatmul.bf16.gmra.mxu0 %v2719
        %v2792 = vpop.f32.mrf.mxu0
        %v2793 = vadd.f32 0.0, %v2792
        %v2794 = vpop.f32.mrf.mxu0
        %v2795 = vadd.f32 0.0, %v2794
        %2796 = vmatmul.bf16.gmra.mxu0 %v2720
        %v2797 = vpop.f32.mrf.mxu0
        %v2798 = vadd.f32 0.0, %v2797
        %v2799 = vpop.f32.mrf.mxu0
        %v2800 = vadd.f32 0.0, %v2799
        %2801 = vdwg.mxu0
        %v2802 = vadd.f32 %v2668, %v2783
        %v2803 = vadd.f32 %v2669, %v2785
        %v2804 = vadd.f32 %v2670, %v2788
        %v2805 = vadd.f32 %v2671, %v2790
        %v2806 = vadd.f32 %v2672, %v2793
        %v2807 = vadd.f32 %v2673, %v2795
        %v2808 = vadd.f32 %v2674, %v2798
        %v2809 = vadd.f32 %v2675, %v2800
        %2810 = vst [vmem:[#allocation2 + $0x40] sm:$0xff] %v2802
        %2811 = vst [vmem:[#allocation2 + $0x48] sm:$0xff] %v2803
        %2812 = vst [vmem:[#allocation2 + $0x50] sm:$0xff] %v2804
        %2813 = vst [vmem:[#allocation2 + $0x58] sm:$0xff] %v2805
        %2814 = vst [vmem:[#allocation2 + $0x60] sm:$0xff] %v2806
        %2815 = vst [vmem:[#allocation2 + $0x68] sm:$0xff] %v2807
        %2816 = vst [vmem:[#allocation2 + $0x70] sm:$0xff] %v2808
        %2817 = vst [vmem:[#allocation2 + $0x78] sm:$0xff] %v2809
        %v2818 = vld [vmem:[#allocation2 + $0x80] sm:$0xff]
        %v2819 = vld [vmem:[#allocation2 + $0x88] sm:$0xff]
        %v2820 = vld [vmem:[#allocation2 + $0x90] sm:$0xff]
        %v2821 = vld [vmem:[#allocation2 + $0x98] sm:$0xff]
        %v2822 = vld [vmem:[#allocation2 + $0xa0] sm:$0xff]
        %v2823 = vld [vmem:[#allocation2 + $0xa8] sm:$0xff]
        %v2824 = vld [vmem:[#allocation2 + $0xb0] sm:$0xff]
        %v2825 = vld [vmem:[#allocation2 + $0xb8] sm:$0xff]
        %s2826 = scalar_lea.vmem %s271, 80 [#allocation3]
        %v2827 = vld [vmem:[%s2826] sm:$0xf]
        %v2828 = vld [vmem:[%s2826 + $0x4] sm:$0xf]
        %v2829 = vld [vmem:[%s2826 + $0x8] sm:$0xf]
        %v2830 = vld [vmem:[%s2826 + $0xc] sm:$0xf]
        %v2831 = vld [vmem:[%s2826 + $0x10] sm:$0xf]
        %v2832 = vld [vmem:[%s2826 + $0x14] sm:$0xf]
        %v2833 = vld [vmem:[%s2826 + $0x18] sm:$0xf]
        %v2834 = vld [vmem:[%s2826 + $0x1c] sm:$0xf]
        %v2835 = vld [vmem:[%s281] sm:$0xf]
        %v2836 = vld [vmem:[%s281 + $0x4] sm:$0xf]
        %v2837 = vld [vmem:[%s281 + $0x8] sm:$0xf]
        %v2838 = vld [vmem:[%s281 + $0xc] sm:$0xf]
        %v2839 = vld [vmem:[%s281 + $0x10] sm:$0xf]
        %v2840 = vld [vmem:[%s281 + $0x14] sm:$0xf]
        %v2841 = vld [vmem:[%s281 + $0x18] sm:$0xf]
        %v2842 = vld [vmem:[%s281 + $0x1c] sm:$0xf]
        %v2843 = vld [vmem:[%s281 + $0x20] sm:$0xf]
        %v2844 = vld [vmem:[%s281 + $0x24] sm:$0xf]
        %v2845 = vld [vmem:[%s281 + $0x28] sm:$0xf]
        %v2846 = vld [vmem:[%s281 + $0x2c] sm:$0xf]
        %v2847 = vld [vmem:[%s281 + $0x30] sm:$0xf]
        %v2848 = vld [vmem:[%s281 + $0x34] sm:$0xf]
        %v2849 = vld [vmem:[%s281 + $0x38] sm:$0xf]
        %v2850 = vld [vmem:[%s281 + $0x3c] sm:$0xf]
        %v2859 = vunpack.c.l.b16 %v2827
        %v2860 = vunpack.c.l.b16 %v2828
        %v2861 = vunpack.c.l.b16 %v2829
        %v2862 = vunpack.c.l.b16 %v2830
        %v2863 = vunpack.c.l.b16 %v2831
        %v2864 = vunpack.c.l.b16 %v2832
        %v2865 = vunpack.c.l.b16 %v2833
        %v2866 = vunpack.c.l.b16 %v2834
        %v2867 = vpack.c.b16 %v2860, %v2859
        %v2868 = vpack.c.b16 %v2862, %v2861
        %v2869 = vpack.c.b16 %v2864, %v2863
        %v2870 = vpack.c.b16 %v2866, %v2865
        %v2891 = vunpack.c.l.b16 %v2835
        %v2892 = vunpack.c.l.b16 %v2836
        %v2893 = vunpack.c.l.b16 %v2837
        %v2894 = vunpack.c.l.b16 %v2838
        %v2895 = vunpack.c.l.b16 %v2839
        %v2896 = vunpack.c.l.b16 %v2840
        %v2897 = vunpack.c.l.b16 %v2841
        %v2898 = vunpack.c.l.b16 %v2842
        %v2899 = vunpack.c.l.b16 %v2843
        %v2900 = vunpack.c.l.b16 %v2844
        %v2901 = vunpack.c.l.b16 %v2845
        %v2902 = vunpack.c.l.b16 %v2846
        %v2903 = vunpack.c.l.b16 %v2847
        %v2904 = vunpack.c.l.b16 %v2848
        %v2905 = vunpack.c.l.b16 %v2849
        %v2906 = vunpack.c.l.b16 %v2850
        %v2907 = vpack.c.b16 %v2892, %v2891
        %v2908 = vpack.c.b16 %v2894, %v2893
        %v2909 = vpack.c.b16 %v2896, %v2895
        %v2910 = vpack.c.b16 %v2898, %v2897
        %v2911 = vpack.c.b16 %v2900, %v2899
        %v2912 = vpack.c.b16 %v2902, %v2901
        %v2913 = vpack.c.b16 %v2904, %v2903
        %v2914 = vpack.c.b16 %v2906, %v2905
        %2923 = vmatpush.bf16.msra.mxu0 %v2914
        %2924 = vmatpush.bf16.msra.mxu0 %v2913
        %2925 = vmatpush.bf16.msra.mxu0 %v2912
        %2926 = vmatpush.bf16.msra.mxu0 %v2911
        %2927 = vmatpush.bf16.msra.mxu0 %v2910
        %2928 = vmatpush.bf16.msra.mxu0 %v2909
        %2929 = vmatpush.bf16.msra.mxu0 %v2908
        %2930 = vmatpush.bf16.msra.mxu0 %v2907
        %2931 = vmatmul.bf16.gmra.mxu0 %v2867
        %v2932 = vpop.f32.mrf.mxu0
        %v2933 = vadd.f32 0.0, %v2932
        %v2934 = vpop.f32.mrf.mxu0
        %v2935 = vadd.f32 0.0, %v2934
        %2936 = vmatmul.bf16.gmra.mxu0 %v2868
        %v2937 = vpop.f32.mrf.mxu0
        %v2938 = vadd.f32 0.0, %v2937
        %v2939 = vpop.f32.mrf.mxu0
        %v2940 = vadd.f32 0.0, %v2939
        %2941 = vmatmul.bf16.gmra.mxu0 %v2869
        %v2942 = vpop.f32.mrf.mxu0
        %v2943 = vadd.f32 0.0, %v2942
        %v2944 = vpop.f32.mrf.mxu0
        %v2945 = vadd.f32 0.0, %v2944
        %2946 = vmatmul.bf16.gmra.mxu0 %v2870
        %v2947 = vpop.f32.mrf.mxu0
        %v2948 = vadd.f32 0.0, %v2947
        %v2949 = vpop.f32.mrf.mxu0
        %v2950 = vadd.f32 0.0, %v2949
        %2951 = vdwg.mxu0
        %v2952 = vadd.f32 %v2818, %v2933
        %v2953 = vadd.f32 %v2819, %v2935
        %v2954 = vadd.f32 %v2820, %v2938
        %v2955 = vadd.f32 %v2821, %v2940
        %v2956 = vadd.f32 %v2822, %v2943
        %v2957 = vadd.f32 %v2823, %v2945
        %v2958 = vadd.f32 %v2824, %v2948
        %v2959 = vadd.f32 %v2825, %v2950
        %s2960 = scalar_lea.vmem %s271, 240 [#allocation3]
        %v2961 = vld [vmem:[%s2960] sm:$0xf]
        %v2962 = vld [vmem:[%s2960 + $0x4] sm:$0xf]
        %v2963 = vld [vmem:[%s2960 + $0x8] sm:$0xf]
        %v2964 = vld [vmem:[%s2960 + $0xc] sm:$0xf]
        %v2965 = vld [vmem:[%s2960 + $0x10] sm:$0xf]
        %v2966 = vld [vmem:[%s2960 + $0x14] sm:$0xf]
        %v2967 = vld [vmem:[%s2960 + $0x18] sm:$0xf]
        %v2968 = vld [vmem:[%s2960 + $0x1c] sm:$0xf]
        %v2969 = vld [vmem:[%s517] sm:$0xf]
        %v2970 = vld [vmem:[%s517 + $0x4] sm:$0xf]
        %v2971 = vld [vmem:[%s517 + $0x8] sm:$0xf]
        %v2972 = vld [vmem:[%s517 + $0xc] sm:$0xf]
        %v2973 = vld [vmem:[%s517 + $0x10] sm:$0xf]
        %v2974 = vld [vmem:[%s517 + $0x14] sm:$0xf]
        %v2975 = vld [vmem:[%s517 + $0x18] sm:$0xf]
        %v2976 = vld [vmem:[%s517 + $0x1c] sm:$0xf]
        %v2977 = vld [vmem:[%s517 + $0x20] sm:$0xf]
        %v2978 = vld [vmem:[%s517 + $0x24] sm:$0xf]
        %v2979 = vld [vmem:[%s517 + $0x28] sm:$0xf]
        %v2980 = vld [vmem:[%s517 + $0x2c] sm:$0xf]
        %v2981 = vld [vmem:[%s517 + $0x30] sm:$0xf]
        %v2982 = vld [vmem:[%s517 + $0x34] sm:$0xf]
        %v2983 = vld [vmem:[%s517 + $0x38] sm:$0xf]
        %v2984 = vld [vmem:[%s517 + $0x3c] sm:$0xf]
        %v2993 = vunpack.c.l.b16 %v2961
        %v2994 = vunpack.c.l.b16 %v2962
        %v2995 = vunpack.c.l.b16 %v2963
        %v2996 = vunpack.c.l.b16 %v2964
        %v2997 = vunpack.c.l.b16 %v2965
        %v2998 = vunpack.c.l.b16 %v2966
        %v2999 = vunpack.c.l.b16 %v2967
        %v3000 = vunpack.c.l.b16 %v2968
        %v3001 = vpack.c.b16 %v2994, %v2993
        %v3002 = vpack.c.b16 %v2996, %v2995
        %v3003 = vpack.c.b16 %v2998, %v2997
        %v3004 = vpack.c.b16 %v3000, %v2999
        %v3025 = vunpack.c.l.b16 %v2969
        %v3026 = vunpack.c.l.b16 %v2970
        %v3027 = vunpack.c.l.b16 %v2971
        %v3028 = vunpack.c.l.b16 %v2972
        %v3029 = vunpack.c.l.b16 %v2973
        %v3030 = vunpack.c.l.b16 %v2974
        %v3031 = vunpack.c.l.b16 %v2975
        %v3032 = vunpack.c.l.b16 %v2976
        %v3033 = vunpack.c.l.b16 %v2977
        %v3034 = vunpack.c.l.b16 %v2978
        %v3035 = vunpack.c.l.b16 %v2979
        %v3036 = vunpack.c.l.b16 %v2980
        %v3037 = vunpack.c.l.b16 %v2981
        %v3038 = vunpack.c.l.b16 %v2982
        %v3039 = vunpack.c.l.b16 %v2983
        %v3040 = vunpack.c.l.b16 %v2984
        %v3041 = vpack.c.b16 %v3026, %v3025
        %v3042 = vpack.c.b16 %v3028, %v3027
        %v3043 = vpack.c.b16 %v3030, %v3029
        %v3044 = vpack.c.b16 %v3032, %v3031
        %v3045 = vpack.c.b16 %v3034, %v3033
        %v3046 = vpack.c.b16 %v3036, %v3035
        %v3047 = vpack.c.b16 %v3038, %v3037
        %v3048 = vpack.c.b16 %v3040, %v3039
        %3057 = vmatpush.bf16.msra.mxu0 %v3048
        %3058 = vmatpush.bf16.msra.mxu0 %v3047
        %3059 = vmatpush.bf16.msra.mxu0 %v3046
        %3060 = vmatpush.bf16.msra.mxu0 %v3045
        %3061 = vmatpush.bf16.msra.mxu0 %v3044
        %3062 = vmatpush.bf16.msra.mxu0 %v3043
        %3063 = vmatpush.bf16.msra.mxu0 %v3042
        %3064 = vmatpush.bf16.msra.mxu0 %v3041
        %3065 = vmatmul.bf16.gmra.mxu0 %v3001
        %v3066 = vpop.f32.mrf.mxu0
        %v3067 = vadd.f32 0.0, %v3066
        %v3068 = vpop.f32.mrf.mxu0
        %v3069 = vadd.f32 0.0, %v3068
        %3070 = vmatmul.bf16.gmra.mxu0 %v3002
        %v3071 = vpop.f32.mrf.mxu0
        %v3072 = vadd.f32 0.0, %v3071
        %v3073 = vpop.f32.mrf.mxu0
        %v3074 = vadd.f32 0.0, %v3073
        %3075 = vmatmul.bf16.gmra.mxu0 %v3003
        %v3076 = vpop.f32.mrf.mxu0
        %v3077 = vadd.f32 0.0, %v3076
        %v3078 = vpop.f32.mrf.mxu0
        %v3079 = vadd.f32 0.0, %v3078
        %3080 = vmatmul.bf16.gmra.mxu0 %v3004
        %v3081 = vpop.f32.mrf.mxu0
        %v3082 = vadd.f32 0.0, %v3081
        %v3083 = vpop.f32.mrf.mxu0
        %v3084 = vadd.f32 0.0, %v3083
        %3085 = vdwg.mxu0
        %v3086 = vadd.f32 %v2952, %v3067
        %v3087 = vadd.f32 %v2953, %v3069
        %v3088 = vadd.f32 %v2954, %v3072
        %v3089 = vadd.f32 %v2955, %v3074
        %v3090 = vadd.f32 %v2956, %v3077
        %v3091 = vadd.f32 %v2957, %v3079
        %v3092 = vadd.f32 %v2958, %v3082
        %v3093 = vadd.f32 %v2959, %v3084
        %s3094 = scalar_lea.vmem %s271, 400 [#allocation3]
        %v3095 = vld [vmem:[%s3094] sm:$0xf]
        %v3096 = vld [vmem:[%s3094 + $0x4] sm:$0xf]
        %v3097 = vld [vmem:[%s3094 + $0x8] sm:$0xf]
        %v3098 = vld [vmem:[%s3094 + $0xc] sm:$0xf]
        %v3099 = vld [vmem:[%s3094 + $0x10] sm:$0xf]
        %v3100 = vld [vmem:[%s3094 + $0x14] sm:$0xf]
        %v3101 = vld [vmem:[%s3094 + $0x18] sm:$0xf]
        %v3102 = vld [vmem:[%s3094 + $0x1c] sm:$0xf]
        %v3103 = vld [vmem:[%s652] sm:$0xf]
        %v3104 = vld [vmem:[%s652 + $0x4] sm:$0xf]
        %v3105 = vld [vmem:[%s652 + $0x8] sm:$0xf]
        %v3106 = vld [vmem:[%s652 + $0xc] sm:$0xf]
        %v3107 = vld [vmem:[%s652 + $0x10] sm:$0xf]
        %v3108 = vld [vmem:[%s652 + $0x14] sm:$0xf]
        %v3109 = vld [vmem:[%s652 + $0x18] sm:$0xf]
        %v3110 = vld [vmem:[%s652 + $0x1c] sm:$0xf]
        %v3111 = vld [vmem:[%s652 + $0x20] sm:$0xf]
        %v3112 = vld [vmem:[%s652 + $0x24] sm:$0xf]
        %v3113 = vld [vmem:[%s652 + $0x28] sm:$0xf]
        %v3114 = vld [vmem:[%s652 + $0x2c] sm:$0xf]
        %v3115 = vld [vmem:[%s652 + $0x30] sm:$0xf]
        %v3116 = vld [vmem:[%s652 + $0x34] sm:$0xf]
        %v3117 = vld [vmem:[%s652 + $0x38] sm:$0xf]
        %v3118 = vld [vmem:[%s652 + $0x3c] sm:$0xf]
        %v3127 = vunpack.c.l.b16 %v3095
        %v3128 = vunpack.c.l.b16 %v3096
        %v3129 = vunpack.c.l.b16 %v3097
        %v3130 = vunpack.c.l.b16 %v3098
        %v3131 = vunpack.c.l.b16 %v3099
        %v3132 = vunpack.c.l.b16 %v3100
        %v3133 = vunpack.c.l.b16 %v3101
        %v3134 = vunpack.c.l.b16 %v3102
        %v3135 = vpack.c.b16 %v3128, %v3127
        %v3136 = vpack.c.b16 %v3130, %v3129
        %v3137 = vpack.c.b16 %v3132, %v3131
        %v3138 = vpack.c.b16 %v3134, %v3133
        %v3159 = vunpack.c.l.b16 %v3103
        %v3160 = vunpack.c.l.b16 %v3104
        %v3161 = vunpack.c.l.b16 %v3105
        %v3162 = vunpack.c.l.b16 %v3106
        %v3163 = vunpack.c.l.b16 %v3107
        %v3164 = vunpack.c.l.b16 %v3108
        %v3165 = vunpack.c.l.b16 %v3109
        %v3166 = vunpack.c.l.b16 %v3110
        %v3167 = vunpack.c.l.b16 %v3111
        %v3168 = vunpack.c.l.b16 %v3112
        %v3169 = vunpack.c.l.b16 %v3113
        %v3170 = vunpack.c.l.b16 %v3114
        %v3171 = vunpack.c.l.b16 %v3115
        %v3172 = vunpack.c.l.b16 %v3116
        %v3173 = vunpack.c.l.b16 %v3117
        %v3174 = vunpack.c.l.b16 %v3118
        %v3175 = vpack.c.b16 %v3160, %v3159
        %v3176 = vpack.c.b16 %v3162, %v3161
        %v3177 = vpack.c.b16 %v3164, %v3163
        %v3178 = vpack.c.b16 %v3166, %v3165
        %v3179 = vpack.c.b16 %v3168, %v3167
        %v3180 = vpack.c.b16 %v3170, %v3169
        %v3181 = vpack.c.b16 %v3172, %v3171
        %v3182 = vpack.c.b16 %v3174, %v3173
        %3191 = vmatpush.bf16.msra.mxu0 %v3182
        %3192 = vmatpush.bf16.msra.mxu0 %v3181
        %3193 = vmatpush.bf16.msra.mxu0 %v3180
        %3194 = vmatpush.bf16.msra.mxu0 %v3179
        %3195 = vmatpush.bf16.msra.mxu0 %v3178
        %3196 = vmatpush.bf16.msra.mxu0 %v3177
        %3197 = vmatpush.bf16.msra.mxu0 %v3176
        %3198 = vmatpush.bf16.msra.mxu0 %v3175
        %3199 = vmatmul.bf16.gmra.mxu0 %v3135
        %v3200 = vpop.f32.mrf.mxu0
        %v3201 = vadd.f32 0.0, %v3200
        %v3202 = vpop.f32.mrf.mxu0
        %v3203 = vadd.f32 0.0, %v3202
        %3204 = vmatmul.bf16.gmra.mxu0 %v3136
        %v3205 = vpop.f32.mrf.mxu0
        %v3206 = vadd.f32 0.0, %v3205
        %v3207 = vpop.f32.mrf.mxu0
        %v3208 = vadd.f32 0.0, %v3207
        %3209 = vmatmul.bf16.gmra.mxu0 %v3137
        %v3210 = vpop.f32.mrf.mxu0
        %v3211 = vadd.f32 0.0, %v3210
        %v3212 = vpop.f32.mrf.mxu0
        %v3213 = vadd.f32 0.0, %v3212
        %3214 = vmatmul.bf16.gmra.mxu0 %v3138
        %v3215 = vpop.f32.mrf.mxu0
        %v3216 = vadd.f32 0.0, %v3215
        %v3217 = vpop.f32.mrf.mxu0
        %v3218 = vadd.f32 0.0, %v3217
        %3219 = vdwg.mxu0
        %v3220 = vadd.f32 %v3086, %v3201
        %v3221 = vadd.f32 %v3087, %v3203
        %v3222 = vadd.f32 %v3088, %v3206
        %v3223 = vadd.f32 %v3089, %v3208
        %v3224 = vadd.f32 %v3090, %v3211
        %v3225 = vadd.f32 %v3091, %v3213
        %v3226 = vadd.f32 %v3092, %v3216
        %v3227 = vadd.f32 %v3093, %v3218
        %s3228 = scalar_lea.vmem %s271, 84 [#allocation3]
        %v3229 = vld [vmem:[%s3228] sm:$0xf]
        %v3230 = vld [vmem:[%s3228 + $0x4] sm:$0xf]
        %v3231 = vld [vmem:[%s3228 + $0x8] sm:$0xf]
        %v3232 = vld [vmem:[%s3228 + $0xc] sm:$0xf]
        %v3233 = vld [vmem:[%s3228 + $0x10] sm:$0xf]
        %v3234 = vld [vmem:[%s3228 + $0x14] sm:$0xf]
        %v3235 = vld [vmem:[%s3228 + $0x18] sm:$0xf]
        %v3236 = vld [vmem:[%s3228 + $0x1c] sm:$0xf]
        %v3237 = vld [vmem:[%s787] sm:$0xf]
        %v3238 = vld [vmem:[%s787 + $0x4] sm:$0xf]
        %v3239 = vld [vmem:[%s787 + $0x8] sm:$0xf]
        %v3240 = vld [vmem:[%s787 + $0xc] sm:$0xf]
        %v3241 = vld [vmem:[%s787 + $0x10] sm:$0xf]
        %v3242 = vld [vmem:[%s787 + $0x14] sm:$0xf]
        %v3243 = vld [vmem:[%s787 + $0x18] sm:$0xf]
        %v3244 = vld [vmem:[%s787 + $0x1c] sm:$0xf]
        %v3245 = vld [vmem:[%s787 + $0x20] sm:$0xf]
        %v3246 = vld [vmem:[%s787 + $0x24] sm:$0xf]
        %v3247 = vld [vmem:[%s787 + $0x28] sm:$0xf]
        %v3248 = vld [vmem:[%s787 + $0x2c] sm:$0xf]
        %v3249 = vld [vmem:[%s787 + $0x30] sm:$0xf]
        %v3250 = vld [vmem:[%s787 + $0x34] sm:$0xf]
        %v3251 = vld [vmem:[%s787 + $0x38] sm:$0xf]
        %v3252 = vld [vmem:[%s787 + $0x3c] sm:$0xf]
        %v3261 = vunpack.c.l.b16 %v3229
        %v3262 = vunpack.c.l.b16 %v3230
        %v3263 = vunpack.c.l.b16 %v3231
        %v3264 = vunpack.c.l.b16 %v3232
        %v3265 = vunpack.c.l.b16 %v3233
        %v3266 = vunpack.c.l.b16 %v3234
        %v3267 = vunpack.c.l.b16 %v3235
        %v3268 = vunpack.c.l.b16 %v3236
        %v3269 = vpack.c.b16 %v3262, %v3261
        %v3270 = vpack.c.b16 %v3264, %v3263
        %v3271 = vpack.c.b16 %v3266, %v3265
        %v3272 = vpack.c.b16 %v3268, %v3267
        %v3293 = vunpack.c.l.b16 %v3237
        %v3294 = vunpack.c.l.b16 %v3238
        %v3295 = vunpack.c.l.b16 %v3239
        %v3296 = vunpack.c.l.b16 %v3240
        %v3297 = vunpack.c.l.b16 %v3241
        %v3298 = vunpack.c.l.b16 %v3242
        %v3299 = vunpack.c.l.b16 %v3243
        %v3300 = vunpack.c.l.b16 %v3244
        %v3301 = vunpack.c.l.b16 %v3245
        %v3302 = vunpack.c.l.b16 %v3246
        %v3303 = vunpack.c.l.b16 %v3247
        %v3304 = vunpack.c.l.b16 %v3248
        %v3305 = vunpack.c.l.b16 %v3249
        %v3306 = vunpack.c.l.b16 %v3250
        %v3307 = vunpack.c.l.b16 %v3251
        %v3308 = vunpack.c.l.b16 %v3252
        %v3309 = vpack.c.b16 %v3294, %v3293
        %v3310 = vpack.c.b16 %v3296, %v3295
        %v3311 = vpack.c.b16 %v3298, %v3297
        %v3312 = vpack.c.b16 %v3300, %v3299
        %v3313 = vpack.c.b16 %v3302, %v3301
        %v3314 = vpack.c.b16 %v3304, %v3303
        %v3315 = vpack.c.b16 %v3306, %v3305
        %v3316 = vpack.c.b16 %v3308, %v3307
        %3325 = vmatpush.bf16.msra.mxu0 %v3316
        %3326 = vmatpush.bf16.msra.mxu0 %v3315
        %3327 = vmatpush.bf16.msra.mxu0 %v3314
        %3328 = vmatpush.bf16.msra.mxu0 %v3313
        %3329 = vmatpush.bf16.msra.mxu0 %v3312
        %3330 = vmatpush.bf16.msra.mxu0 %v3311
        %3331 = vmatpush.bf16.msra.mxu0 %v3310
        %3332 = vmatpush.bf16.msra.mxu0 %v3309
        %3333 = vmatmul.bf16.gmra.mxu0 %v3269
        %v3334 = vpop.f32.mrf.mxu0
        %v3335 = vadd.f32 0.0, %v3334
        %v3336 = vpop.f32.mrf.mxu0
        %v3337 = vadd.f32 0.0, %v3336
        %3338 = vmatmul.bf16.gmra.mxu0 %v3270
        %v3339 = vpop.f32.mrf.mxu0
        %v3340 = vadd.f32 0.0, %v3339
        %v3341 = vpop.f32.mrf.mxu0
        %v3342 = vadd.f32 0.0, %v3341
        %3343 = vmatmul.bf16.gmra.mxu0 %v3271
        %v3344 = vpop.f32.mrf.mxu0
        %v3345 = vadd.f32 0.0, %v3344
        %v3346 = vpop.f32.mrf.mxu0
        %v3347 = vadd.f32 0.0, %v3346
        %3348 = vmatmul.bf16.gmra.mxu0 %v3272
        %v3349 = vpop.f32.mrf.mxu0
        %v3350 = vadd.f32 0.0, %v3349
        %v3351 = vpop.f32.mrf.mxu0
        %v3352 = vadd.f32 0.0, %v3351
        %3353 = vdwg.mxu0
        %v3354 = vadd.f32 %v3220, %v3335
        %v3355 = vadd.f32 %v3221, %v3337
        %v3356 = vadd.f32 %v3222, %v3340
        %v3357 = vadd.f32 %v3223, %v3342
        %v3358 = vadd.f32 %v3224, %v3345
        %v3359 = vadd.f32 %v3225, %v3347
        %v3360 = vadd.f32 %v3226, %v3350
        %v3361 = vadd.f32 %v3227, %v3352
        %s3362 = scalar_lea.vmem %s271, 244 [#allocation3]
        %v3363 = vld [vmem:[%s3362] sm:$0xf]
        %v3364 = vld [vmem:[%s3362 + $0x4] sm:$0xf]
        %v3365 = vld [vmem:[%s3362 + $0x8] sm:$0xf]
        %v3366 = vld [vmem:[%s3362 + $0xc] sm:$0xf]
        %v3367 = vld [vmem:[%s3362 + $0x10] sm:$0xf]
        %v3368 = vld [vmem:[%s3362 + $0x14] sm:$0xf]
        %v3369 = vld [vmem:[%s3362 + $0x18] sm:$0xf]
        %v3370 = vld [vmem:[%s3362 + $0x1c] sm:$0xf]
        %v3371 = vld [vmem:[%s922] sm:$0xf]
        %v3372 = vld [vmem:[%s922 + $0x4] sm:$0xf]
        %v3373 = vld [vmem:[%s922 + $0x8] sm:$0xf]
        %v3374 = vld [vmem:[%s922 + $0xc] sm:$0xf]
        %v3375 = vld [vmem:[%s922 + $0x10] sm:$0xf]
        %v3376 = vld [vmem:[%s922 + $0x14] sm:$0xf]
        %v3377 = vld [vmem:[%s922 + $0x18] sm:$0xf]
        %v3378 = vld [vmem:[%s922 + $0x1c] sm:$0xf]
        %v3379 = vld [vmem:[%s922 + $0x20] sm:$0xf]
        %v3380 = vld [vmem:[%s922 + $0x24] sm:$0xf]
        %v3381 = vld [vmem:[%s922 + $0x28] sm:$0xf]
        %v3382 = vld [vmem:[%s922 + $0x2c] sm:$0xf]
        %v3383 = vld [vmem:[%s922 + $0x30] sm:$0xf]
        %v3384 = vld [vmem:[%s922 + $0x34] sm:$0xf]
        %v3385 = vld [vmem:[%s922 + $0x38] sm:$0xf]
        %v3386 = vld [vmem:[%s922 + $0x3c] sm:$0xf]
        %v3395 = vunpack.c.l.b16 %v3363
        %v3396 = vunpack.c.l.b16 %v3364
        %v3397 = vunpack.c.l.b16 %v3365
        %v3398 = vunpack.c.l.b16 %v3366
        %v3399 = vunpack.c.l.b16 %v3367
        %v3400 = vunpack.c.l.b16 %v3368
        %v3401 = vunpack.c.l.b16 %v3369
        %v3402 = vunpack.c.l.b16 %v3370
        %v3403 = vpack.c.b16 %v3396, %v3395
        %v3404 = vpack.c.b16 %v3398, %v3397
        %v3405 = vpack.c.b16 %v3400, %v3399
        %v3406 = vpack.c.b16 %v3402, %v3401
        %v3427 = vunpack.c.l.b16 %v3371
        %v3428 = vunpack.c.l.b16 %v3372
        %v3429 = vunpack.c.l.b16 %v3373
        %v3430 = vunpack.c.l.b16 %v3374
        %v3431 = vunpack.c.l.b16 %v3375
        %v3432 = vunpack.c.l.b16 %v3376
        %v3433 = vunpack.c.l.b16 %v3377
        %v3434 = vunpack.c.l.b16 %v3378
        %v3435 = vunpack.c.l.b16 %v3379
        %v3436 = vunpack.c.l.b16 %v3380
        %v3437 = vunpack.c.l.b16 %v3381
        %v3438 = vunpack.c.l.b16 %v3382
        %v3439 = vunpack.c.l.b16 %v3383
        %v3440 = vunpack.c.l.b16 %v3384
        %v3441 = vunpack.c.l.b16 %v3385
        %v3442 = vunpack.c.l.b16 %v3386
        %v3443 = vpack.c.b16 %v3428, %v3427
        %v3444 = vpack.c.b16 %v3430, %v3429
        %v3445 = vpack.c.b16 %v3432, %v3431
        %v3446 = vpack.c.b16 %v3434, %v3433
        %v3447 = vpack.c.b16 %v3436, %v3435
        %v3448 = vpack.c.b16 %v3438, %v3437
        %v3449 = vpack.c.b16 %v3440, %v3439
        %v3450 = vpack.c.b16 %v3442, %v3441
        %3459 = vmatpush.bf16.msra.mxu0 %v3450
        %3460 = vmatpush.bf16.msra.mxu0 %v3449
        %3461 = vmatpush.bf16.msra.mxu0 %v3448
        %3462 = vmatpush.bf16.msra.mxu0 %v3447
        %3463 = vmatpush.bf16.msra.mxu0 %v3446
        %3464 = vmatpush.bf16.msra.mxu0 %v3445
        %3465 = vmatpush.bf16.msra.mxu0 %v3444
        %3466 = vmatpush.bf16.msra.mxu0 %v3443
        %3467 = vmatmul.bf16.gmra.mxu0 %v3403
        %v3468 = vpop.f32.mrf.mxu0
        %v3469 = vadd.f32 0.0, %v3468
        %v3470 = vpop.f32.mrf.mxu0
        %v3471 = vadd.f32 0.0, %v3470
        %3472 = vmatmul.bf16.gmra.mxu0 %v3404
        %v3473 = vpop.f32.mrf.mxu0
        %v3474 = vadd.f32 0.0, %v3473
        %v3475 = vpop.f32.mrf.mxu0
        %v3476 = vadd.f32 0.0, %v3475
        %3477 = vmatmul.bf16.gmra.mxu0 %v3405
        %v3478 = vpop.f32.mrf.mxu0
        %v3479 = vadd.f32 0.0, %v3478
        %v3480 = vpop.f32.mrf.mxu0
        %v3481 = vadd.f32 0.0, %v3480
        %3482 = vmatmul.bf16.gmra.mxu0 %v3406
        %v3483 = vpop.f32.mrf.mxu0
        %v3484 = vadd.f32 0.0, %v3483
        %v3485 = vpop.f32.mrf.mxu0
        %v3486 = vadd.f32 0.0, %v3485
        %3487 = vdwg.mxu0
        %v3488 = vadd.f32 %v3354, %v3469
        %v3489 = vadd.f32 %v3355, %v3471
        %v3490 = vadd.f32 %v3356, %v3474
        %v3491 = vadd.f32 %v3357, %v3476
        %v3492 = vadd.f32 %v3358, %v3479
        %v3493 = vadd.f32 %v3359, %v3481
        %v3494 = vadd.f32 %v3360, %v3484
        %v3495 = vadd.f32 %v3361, %v3486
        %s3496 = scalar_lea.vmem %s271, 404 [#allocation3]
        %v3497 = vld [vmem:[%s3496] sm:$0xf]
        %v3498 = vld [vmem:[%s3496 + $0x4] sm:$0xf]
        %v3499 = vld [vmem:[%s3496 + $0x8] sm:$0xf]
        %v3500 = vld [vmem:[%s3496 + $0xc] sm:$0xf]
        %v3501 = vld [vmem:[%s3496 + $0x10] sm:$0xf]
        %v3502 = vld [vmem:[%s3496 + $0x14] sm:$0xf]
        %v3503 = vld [vmem:[%s3496 + $0x18] sm:$0xf]
        %v3504 = vld [vmem:[%s3496 + $0x1c] sm:$0xf]
        %v3505 = vld [vmem:[%s1057] sm:$0xf]
        %v3506 = vld [vmem:[%s1057 + $0x4] sm:$0xf]
        %v3507 = vld [vmem:[%s1057 + $0x8] sm:$0xf]
        %v3508 = vld [vmem:[%s1057 + $0xc] sm:$0xf]
        %v3509 = vld [vmem:[%s1057 + $0x10] sm:$0xf]
        %v3510 = vld [vmem:[%s1057 + $0x14] sm:$0xf]
        %v3511 = vld [vmem:[%s1057 + $0x18] sm:$0xf]
        %v3512 = vld [vmem:[%s1057 + $0x1c] sm:$0xf]
        %v3513 = vld [vmem:[%s1057 + $0x20] sm:$0xf]
        %v3514 = vld [vmem:[%s1057 + $0x24] sm:$0xf]
        %v3515 = vld [vmem:[%s1057 + $0x28] sm:$0xf]
        %v3516 = vld [vmem:[%s1057 + $0x2c] sm:$0xf]
        %v3517 = vld [vmem:[%s1057 + $0x30] sm:$0xf]
        %v3518 = vld [vmem:[%s1057 + $0x34] sm:$0xf]
        %v3519 = vld [vmem:[%s1057 + $0x38] sm:$0xf]
        %v3520 = vld [vmem:[%s1057 + $0x3c] sm:$0xf]
        %v3529 = vunpack.c.l.b16 %v3497
        %v3530 = vunpack.c.l.b16 %v3498
        %v3531 = vunpack.c.l.b16 %v3499
        %v3532 = vunpack.c.l.b16 %v3500
        %v3533 = vunpack.c.l.b16 %v3501
        %v3534 = vunpack.c.l.b16 %v3502
        %v3535 = vunpack.c.l.b16 %v3503
        %v3536 = vunpack.c.l.b16 %v3504
        %v3537 = vpack.c.b16 %v3530, %v3529
        %v3538 = vpack.c.b16 %v3532, %v3531
        %v3539 = vpack.c.b16 %v3534, %v3533
        %v3540 = vpack.c.b16 %v3536, %v3535
        %v3561 = vunpack.c.l.b16 %v3505
        %v3562 = vunpack.c.l.b16 %v3506
        %v3563 = vunpack.c.l.b16 %v3507
        %v3564 = vunpack.c.l.b16 %v3508
        %v3565 = vunpack.c.l.b16 %v3509
        %v3566 = vunpack.c.l.b16 %v3510
        %v3567 = vunpack.c.l.b16 %v3511
        %v3568 = vunpack.c.l.b16 %v3512
        %v3569 = vunpack.c.l.b16 %v3513
        %v3570 = vunpack.c.l.b16 %v3514
        %v3571 = vunpack.c.l.b16 %v3515
        %v3572 = vunpack.c.l.b16 %v3516
        %v3573 = vunpack.c.l.b16 %v3517
        %v3574 = vunpack.c.l.b16 %v3518
        %v3575 = vunpack.c.l.b16 %v3519
        %v3576 = vunpack.c.l.b16 %v3520
        %v3577 = vpack.c.b16 %v3562, %v3561
        %v3578 = vpack.c.b16 %v3564, %v3563
        %v3579 = vpack.c.b16 %v3566, %v3565
        %v3580 = vpack.c.b16 %v3568, %v3567
        %v3581 = vpack.c.b16 %v3570, %v3569
        %v3582 = vpack.c.b16 %v3572, %v3571
        %v3583 = vpack.c.b16 %v3574, %v3573
        %v3584 = vpack.c.b16 %v3576, %v3575
        %3593 = vmatpush.bf16.msra.mxu0 %v3584
        %3594 = vmatpush.bf16.msra.mxu0 %v3583
        %3595 = vmatpush.bf16.msra.mxu0 %v3582
        %3596 = vmatpush.bf16.msra.mxu0 %v3581
        %3597 = vmatpush.bf16.msra.mxu0 %v3580
        %3598 = vmatpush.bf16.msra.mxu0 %v3579
        %3599 = vmatpush.bf16.msra.mxu0 %v3578
        %3600 = vmatpush.bf16.msra.mxu0 %v3577
        %3601 = vmatmul.bf16.gmra.mxu0 %v3537
        %v3602 = vpop.f32.mrf.mxu0
        %v3603 = vadd.f32 0.0, %v3602
        %v3604 = vpop.f32.mrf.mxu0
        %v3605 = vadd.f32 0.0, %v3604
        %3606 = vmatmul.bf16.gmra.mxu0 %v3538
        %v3607 = vpop.f32.mrf.mxu0
        %v3608 = vadd.f32 0.0, %v3607
        %v3609 = vpop.f32.mrf.mxu0
        %v3610 = vadd.f32 0.0, %v3609
        %3611 = vmatmul.bf16.gmra.mxu0 %v3539
        %v3612 = vpop.f32.mrf.mxu0
        %v3613 = vadd.f32 0.0, %v3612
        %v3614 = vpop.f32.mrf.mxu0
        %v3615 = vadd.f32 0.0, %v3614
        %3616 = vmatmul.bf16.gmra.mxu0 %v3540
        %v3617 = vpop.f32.mrf.mxu0
        %v3618 = vadd.f32 0.0, %v3617
        %v3619 = vpop.f32.mrf.mxu0
        %v3620 = vadd.f32 0.0, %v3619
        %3621 = vdwg.mxu0
        %v3622 = vadd.f32 %v3488, %v3603
        %v3623 = vadd.f32 %v3489, %v3605
        %v3624 = vadd.f32 %v3490, %v3608
        %v3625 = vadd.f32 %v3491, %v3610
        %v3626 = vadd.f32 %v3492, %v3613
        %v3627 = vadd.f32 %v3493, %v3615
        %v3628 = vadd.f32 %v3494, %v3618
        %v3629 = vadd.f32 %v3495, %v3620
        %s3630 = scalar_lea.vmem %s271, 88 [#allocation3]
        %v3631 = vld [vmem:[%s3630] sm:$0xf]
        %v3632 = vld [vmem:[%s3630 + $0x4] sm:$0xf]
        %v3633 = vld [vmem:[%s3630 + $0x8] sm:$0xf]
        %v3634 = vld [vmem:[%s3630 + $0xc] sm:$0xf]
        %v3635 = vld [vmem:[%s3630 + $0x10] sm:$0xf]
        %v3636 = vld [vmem:[%s3630 + $0x14] sm:$0xf]
        %v3637 = vld [vmem:[%s3630 + $0x18] sm:$0xf]
        %v3638 = vld [vmem:[%s3630 + $0x1c] sm:$0xf]
        %v3639 = vld [vmem:[%s1192] sm:$0xf]
        %v3640 = vld [vmem:[%s1192 + $0x4] sm:$0xf]
        %v3641 = vld [vmem:[%s1192 + $0x8] sm:$0xf]
        %v3642 = vld [vmem:[%s1192 + $0xc] sm:$0xf]
        %v3643 = vld [vmem:[%s1192 + $0x10] sm:$0xf]
        %v3644 = vld [vmem:[%s1192 + $0x14] sm:$0xf]
        %v3645 = vld [vmem:[%s1192 + $0x18] sm:$0xf]
        %v3646 = vld [vmem:[%s1192 + $0x1c] sm:$0xf]
        %v3647 = vld [vmem:[%s1192 + $0x20] sm:$0xf]
        %v3648 = vld [vmem:[%s1192 + $0x24] sm:$0xf]
        %v3649 = vld [vmem:[%s1192 + $0x28] sm:$0xf]
        %v3650 = vld [vmem:[%s1192 + $0x2c] sm:$0xf]
        %v3651 = vld [vmem:[%s1192 + $0x30] sm:$0xf]
        %v3652 = vld [vmem:[%s1192 + $0x34] sm:$0xf]
        %v3653 = vld [vmem:[%s1192 + $0x38] sm:$0xf]
        %v3654 = vld [vmem:[%s1192 + $0x3c] sm:$0xf]
        %v3663 = vunpack.c.l.b16 %v3631
        %v3664 = vunpack.c.l.b16 %v3632
        %v3665 = vunpack.c.l.b16 %v3633
        %v3666 = vunpack.c.l.b16 %v3634
        %v3667 = vunpack.c.l.b16 %v3635
        %v3668 = vunpack.c.l.b16 %v3636
        %v3669 = vunpack.c.l.b16 %v3637
        %v3670 = vunpack.c.l.b16 %v3638
        %v3671 = vpack.c.b16 %v3664, %v3663
        %v3672 = vpack.c.b16 %v3666, %v3665
        %v3673 = vpack.c.b16 %v3668, %v3667
        %v3674 = vpack.c.b16 %v3670, %v3669
        %v3695 = vunpack.c.l.b16 %v3639
        %v3696 = vunpack.c.l.b16 %v3640
        %v3697 = vunpack.c.l.b16 %v3641
        %v3698 = vunpack.c.l.b16 %v3642
        %v3699 = vunpack.c.l.b16 %v3643
        %v3700 = vunpack.c.l.b16 %v3644
        %v3701 = vunpack.c.l.b16 %v3645
        %v3702 = vunpack.c.l.b16 %v3646
        %v3703 = vunpack.c.l.b16 %v3647
        %v3704 = vunpack.c.l.b16 %v3648
        %v3705 = vunpack.c.l.b16 %v3649
        %v3706 = vunpack.c.l.b16 %v3650
        %v3707 = vunpack.c.l.b16 %v3651
        %v3708 = vunpack.c.l.b16 %v3652
        %v3709 = vunpack.c.l.b16 %v3653
        %v3710 = vunpack.c.l.b16 %v3654
        %v3711 = vpack.c.b16 %v3696, %v3695
        %v3712 = vpack.c.b16 %v3698, %v3697
        %v3713 = vpack.c.b16 %v3700, %v3699
        %v3714 = vpack.c.b16 %v3702, %v3701
        %v3715 = vpack.c.b16 %v3704, %v3703
        %v3716 = vpack.c.b16 %v3706, %v3705
        %v3717 = vpack.c.b16 %v3708, %v3707
        %v3718 = vpack.c.b16 %v3710, %v3709
        %3727 = vmatpush.bf16.msra.mxu0 %v3718
        %3728 = vmatpush.bf16.msra.mxu0 %v3717
        %3729 = vmatpush.bf16.msra.mxu0 %v3716
        %3730 = vmatpush.bf16.msra.mxu0 %v3715
        %3731 = vmatpush.bf16.msra.mxu0 %v3714
        %3732 = vmatpush.bf16.msra.mxu0 %v3713
        %3733 = vmatpush.bf16.msra.mxu0 %v3712
        %3734 = vmatpush.bf16.msra.mxu0 %v3711
        %3735 = vmatmul.bf16.gmra.mxu0 %v3671
        %v3736 = vpop.f32.mrf.mxu0
        %v3737 = vadd.f32 0.0, %v3736
        %v3738 = vpop.f32.mrf.mxu0
        %v3739 = vadd.f32 0.0, %v3738
        %3740 = vmatmul.bf16.gmra.mxu0 %v3672
        %v3741 = vpop.f32.mrf.mxu0
        %v3742 = vadd.f32 0.0, %v3741
        %v3743 = vpop.f32.mrf.mxu0
        %v3744 = vadd.f32 0.0, %v3743
        %3745 = vmatmul.bf16.gmra.mxu0 %v3673
        %v3746 = vpop.f32.mrf.mxu0
        %v3747 = vadd.f32 0.0, %v3746
        %v3748 = vpop.f32.mrf.mxu0
        %v3749 = vadd.f32 0.0, %v3748
        %3750 = vmatmul.bf16.gmra.mxu0 %v3674
        %v3751 = vpop.f32.mrf.mxu0
        %v3752 = vadd.f32 0.0, %v3751
        %v3753 = vpop.f32.mrf.mxu0
        %v3754 = vadd.f32 0.0, %v3753
        %3755 = vdwg.mxu0
        %v3756 = vadd.f32 %v3622, %v3737
        %v3757 = vadd.f32 %v3623, %v3739
        %v3758 = vadd.f32 %v3624, %v3742
        %v3759 = vadd.f32 %v3625, %v3744
        %v3760 = vadd.f32 %v3626, %v3747
        %v3761 = vadd.f32 %v3627, %v3749
        %v3762 = vadd.f32 %v3628, %v3752
        %v3763 = vadd.f32 %v3629, %v3754
        %s3764 = scalar_lea.vmem %s271, 248 [#allocation3]
        %v3765 = vld [vmem:[%s3764] sm:$0xf]
        %v3766 = vld [vmem:[%s3764 + $0x4] sm:$0xf]
        %v3767 = vld [vmem:[%s3764 + $0x8] sm:$0xf]
        %v3768 = vld [vmem:[%s3764 + $0xc] sm:$0xf]
        %v3769 = vld [vmem:[%s3764 + $0x10] sm:$0xf]
        %v3770 = vld [vmem:[%s3764 + $0x14] sm:$0xf]
        %v3771 = vld [vmem:[%s3764 + $0x18] sm:$0xf]
        %v3772 = vld [vmem:[%s3764 + $0x1c] sm:$0xf]
        %v3773 = vld [vmem:[%s1327] sm:$0xf]
        %v3774 = vld [vmem:[%s1327 + $0x4] sm:$0xf]
        %v3775 = vld [vmem:[%s1327 + $0x8] sm:$0xf]
        %v3776 = vld [vmem:[%s1327 + $0xc] sm:$0xf]
        %v3777 = vld [vmem:[%s1327 + $0x10] sm:$0xf]
        %v3778 = vld [vmem:[%s1327 + $0x14] sm:$0xf]
        %v3779 = vld [vmem:[%s1327 + $0x18] sm:$0xf]
        %v3780 = vld [vmem:[%s1327 + $0x1c] sm:$0xf]
        %v3781 = vld [vmem:[%s1327 + $0x20] sm:$0xf]
        %v3782 = vld [vmem:[%s1327 + $0x24] sm:$0xf]
        %v3783 = vld [vmem:[%s1327 + $0x28] sm:$0xf]
        %v3784 = vld [vmem:[%s1327 + $0x2c] sm:$0xf]
        %v3785 = vld [vmem:[%s1327 + $0x30] sm:$0xf]
        %v3786 = vld [vmem:[%s1327 + $0x34] sm:$0xf]
        %v3787 = vld [vmem:[%s1327 + $0x38] sm:$0xf]
        %v3788 = vld [vmem:[%s1327 + $0x3c] sm:$0xf]
        %v3797 = vunpack.c.l.b16 %v3765
        %v3798 = vunpack.c.l.b16 %v3766
        %v3799 = vunpack.c.l.b16 %v3767
        %v3800 = vunpack.c.l.b16 %v3768
        %v3801 = vunpack.c.l.b16 %v3769
        %v3802 = vunpack.c.l.b16 %v3770
        %v3803 = vunpack.c.l.b16 %v3771
        %v3804 = vunpack.c.l.b16 %v3772
        %v3805 = vpack.c.b16 %v3798, %v3797
        %v3806 = vpack.c.b16 %v3800, %v3799
        %v3807 = vpack.c.b16 %v3802, %v3801
        %v3808 = vpack.c.b16 %v3804, %v3803
        %v3829 = vunpack.c.l.b16 %v3773
        %v3830 = vunpack.c.l.b16 %v3774
        %v3831 = vunpack.c.l.b16 %v3775
        %v3832 = vunpack.c.l.b16 %v3776
        %v3833 = vunpack.c.l.b16 %v3777
        %v3834 = vunpack.c.l.b16 %v3778
        %v3835 = vunpack.c.l.b16 %v3779
        %v3836 = vunpack.c.l.b16 %v3780
        %v3837 = vunpack.c.l.b16 %v3781
        %v3838 = vunpack.c.l.b16 %v3782
        %v3839 = vunpack.c.l.b16 %v3783
        %v3840 = vunpack.c.l.b16 %v3784
        %v3841 = vunpack.c.l.b16 %v3785
        %v3842 = vunpack.c.l.b16 %v3786
        %v3843 = vunpack.c.l.b16 %v3787
        %v3844 = vunpack.c.l.b16 %v3788
        %v3845 = vpack.c.b16 %v3830, %v3829
        %v3846 = vpack.c.b16 %v3832, %v3831
        %v3847 = vpack.c.b16 %v3834, %v3833
        %v3848 = vpack.c.b16 %v3836, %v3835
        %v3849 = vpack.c.b16 %v3838, %v3837
        %v3850 = vpack.c.b16 %v3840, %v3839
        %v3851 = vpack.c.b16 %v3842, %v3841
        %v3852 = vpack.c.b16 %v3844, %v3843
        %3861 = vmatpush.bf16.msra.mxu0 %v3852
        %3862 = vmatpush.bf16.msra.mxu0 %v3851
        %3863 = vmatpush.bf16.msra.mxu0 %v3850
        %3864 = vmatpush.bf16.msra.mxu0 %v3849
        %3865 = vmatpush.bf16.msra.mxu0 %v3848
        %3866 = vmatpush.bf16.msra.mxu0 %v3847
        %3867 = vmatpush.bf16.msra.mxu0 %v3846
        %3868 = vmatpush.bf16.msra.mxu0 %v3845
        %3869 = vmatmul.bf16.gmra.mxu0 %v3805
        %v3870 = vpop.f32.mrf.mxu0
        %v3871 = vadd.f32 0.0, %v3870
        %v3872 = vpop.f32.mrf.mxu0
        %v3873 = vadd.f32 0.0, %v3872
        %3874 = vmatmul.bf16.gmra.mxu0 %v3806
        %v3875 = vpop.f32.mrf.mxu0
        %v3876 = vadd.f32 0.0, %v3875
        %v3877 = vpop.f32.mrf.mxu0
        %v3878 = vadd.f32 0.0, %v3877
        %3879 = vmatmul.bf16.gmra.mxu0 %v3807
        %v3880 = vpop.f32.mrf.mxu0
        %v3881 = vadd.f32 0.0, %v3880
        %v3882 = vpop.f32.mrf.mxu0
        %v3883 = vadd.f32 0.0, %v3882
        %3884 = vmatmul.bf16.gmra.mxu0 %v3808
        %v3885 = vpop.f32.mrf.mxu0
        %v3886 = vadd.f32 0.0, %v3885
        %v3887 = vpop.f32.mrf.mxu0
        %v3888 = vadd.f32 0.0, %v3887
        %3889 = vdwg.mxu0
        %v3890 = vadd.f32 %v3756, %v3871
        %v3891 = vadd.f32 %v3757, %v3873
        %v3892 = vadd.f32 %v3758, %v3876
        %v3893 = vadd.f32 %v3759, %v3878
        %v3894 = vadd.f32 %v3760, %v3881
        %v3895 = vadd.f32 %v3761, %v3883
        %v3896 = vadd.f32 %v3762, %v3886
        %v3897 = vadd.f32 %v3763, %v3888
        %s3898 = scalar_lea.vmem %s271, 408 [#allocation3]
        %v3899 = vld [vmem:[%s3898] sm:$0xf]
        %v3900 = vld [vmem:[%s3898 + $0x4] sm:$0xf]
        %v3901 = vld [vmem:[%s3898 + $0x8] sm:$0xf]
        %v3902 = vld [vmem:[%s3898 + $0xc] sm:$0xf]
        %v3903 = vld [vmem:[%s3898 + $0x10] sm:$0xf]
        %v3904 = vld [vmem:[%s3898 + $0x14] sm:$0xf]
        %v3905 = vld [vmem:[%s3898 + $0x18] sm:$0xf]
        %v3906 = vld [vmem:[%s3898 + $0x1c] sm:$0xf]
        %v3907 = vld [vmem:[%s1462] sm:$0xf]
        %v3908 = vld [vmem:[%s1462 + $0x4] sm:$0xf]
        %v3909 = vld [vmem:[%s1462 + $0x8] sm:$0xf]
        %v3910 = vld [vmem:[%s1462 + $0xc] sm:$0xf]
        %v3911 = vld [vmem:[%s1462 + $0x10] sm:$0xf]
        %v3912 = vld [vmem:[%s1462 + $0x14] sm:$0xf]
        %v3913 = vld [vmem:[%s1462 + $0x18] sm:$0xf]
        %v3914 = vld [vmem:[%s1462 + $0x1c] sm:$0xf]
        %v3915 = vld [vmem:[%s1462 + $0x20] sm:$0xf]
        %v3916 = vld [vmem:[%s1462 + $0x24] sm:$0xf]
        %v3917 = vld [vmem:[%s1462 + $0x28] sm:$0xf]
        %v3918 = vld [vmem:[%s1462 + $0x2c] sm:$0xf]
        %v3919 = vld [vmem:[%s1462 + $0x30] sm:$0xf]
        %v3920 = vld [vmem:[%s1462 + $0x34] sm:$0xf]
        %v3921 = vld [vmem:[%s1462 + $0x38] sm:$0xf]
        %v3922 = vld [vmem:[%s1462 + $0x3c] sm:$0xf]
        %v3931 = vunpack.c.l.b16 %v3899
        %v3932 = vunpack.c.l.b16 %v3900
        %v3933 = vunpack.c.l.b16 %v3901
        %v3934 = vunpack.c.l.b16 %v3902
        %v3935 = vunpack.c.l.b16 %v3903
        %v3936 = vunpack.c.l.b16 %v3904
        %v3937 = vunpack.c.l.b16 %v3905
        %v3938 = vunpack.c.l.b16 %v3906
        %v3939 = vpack.c.b16 %v3932, %v3931
        %v3940 = vpack.c.b16 %v3934, %v3933
        %v3941 = vpack.c.b16 %v3936, %v3935
        %v3942 = vpack.c.b16 %v3938, %v3937
        %v3963 = vunpack.c.l.b16 %v3907
        %v3964 = vunpack.c.l.b16 %v3908
        %v3965 = vunpack.c.l.b16 %v3909
        %v3966 = vunpack.c.l.b16 %v3910
        %v3967 = vunpack.c.l.b16 %v3911
        %v3968 = vunpack.c.l.b16 %v3912
        %v3969 = vunpack.c.l.b16 %v3913
        %v3970 = vunpack.c.l.b16 %v3914
        %v3971 = vunpack.c.l.b16 %v3915
        %v3972 = vunpack.c.l.b16 %v3916
        %v3973 = vunpack.c.l.b16 %v3917
        %v3974 = vunpack.c.l.b16 %v3918
        %v3975 = vunpack.c.l.b16 %v3919
        %v3976 = vunpack.c.l.b16 %v3920
        %v3977 = vunpack.c.l.b16 %v3921
        %v3978 = vunpack.c.l.b16 %v3922
        %v3979 = vpack.c.b16 %v3964, %v3963
        %v3980 = vpack.c.b16 %v3966, %v3965
        %v3981 = vpack.c.b16 %v3968, %v3967
        %v3982 = vpack.c.b16 %v3970, %v3969
        %v3983 = vpack.c.b16 %v3972, %v3971
        %v3984 = vpack.c.b16 %v3974, %v3973
        %v3985 = vpack.c.b16 %v3976, %v3975
        %v3986 = vpack.c.b16 %v3978, %v3977
        %3995 = vmatpush.bf16.msra.mxu0 %v3986
        %3996 = vmatpush.bf16.msra.mxu0 %v3985
        %3997 = vmatpush.bf16.msra.mxu0 %v3984
        %3998 = vmatpush.bf16.msra.mxu0 %v3983
        %3999 = vmatpush.bf16.msra.mxu0 %v3982
        %4000 = vmatpush.bf16.msra.mxu0 %v3981
        %4001 = vmatpush.bf16.msra.mxu0 %v3980
        %4002 = vmatpush.bf16.msra.mxu0 %v3979
        %4003 = vmatmul.bf16.gmra.mxu0 %v3939
        %v4004 = vpop.f32.mrf.mxu0
        %v4005 = vadd.f32 0.0, %v4004
        %v4006 = vpop.f32.mrf.mxu0
        %v4007 = vadd.f32 0.0, %v4006
        %4008 = vmatmul.bf16.gmra.mxu0 %v3940
        %v4009 = vpop.f32.mrf.mxu0
        %v4010 = vadd.f32 0.0, %v4009
        %v4011 = vpop.f32.mrf.mxu0
        %v4012 = vadd.f32 0.0, %v4011
        %4013 = vmatmul.bf16.gmra.mxu0 %v3941
        %v4014 = vpop.f32.mrf.mxu0
        %v4015 = vadd.f32 0.0, %v4014
        %v4016 = vpop.f32.mrf.mxu0
        %v4017 = vadd.f32 0.0, %v4016
        %4018 = vmatmul.bf16.gmra.mxu0 %v3942
        %v4019 = vpop.f32.mrf.mxu0
        %v4020 = vadd.f32 0.0, %v4019
        %v4021 = vpop.f32.mrf.mxu0
        %v4022 = vadd.f32 0.0, %v4021
        %4023 = vdwg.mxu0
        %v4024 = vadd.f32 %v3890, %v4005
        %v4025 = vadd.f32 %v3891, %v4007
        %v4026 = vadd.f32 %v3892, %v4010
        %v4027 = vadd.f32 %v3893, %v4012
        %v4028 = vadd.f32 %v3894, %v4015
        %v4029 = vadd.f32 %v3895, %v4017
        %v4030 = vadd.f32 %v3896, %v4020
        %v4031 = vadd.f32 %v3897, %v4022
        %4032 = vst [vmem:[#allocation2 + $0x80] sm:$0xff] %v4024
        %4033 = vst [vmem:[#allocation2 + $0x88] sm:$0xff] %v4025
        %4034 = vst [vmem:[#allocation2 + $0x90] sm:$0xff] %v4026
        %4035 = vst [vmem:[#allocation2 + $0x98] sm:$0xff] %v4027
        %4036 = vst [vmem:[#allocation2 + $0xa0] sm:$0xff] %v4028
        %4037 = vst [vmem:[#allocation2 + $0xa8] sm:$0xff] %v4029
        %4038 = vst [vmem:[#allocation2 + $0xb0] sm:$0xff] %v4030
        %4039 = vst [vmem:[#allocation2 + $0xb8] sm:$0xff] %v4031
        %v4040 = vld [vmem:[#allocation2 + $0xc0] sm:$0xff]
        %v4041 = vld [vmem:[#allocation2 + $0xc8] sm:$0xff]
        %v4042 = vld [vmem:[#allocation2 + $0xd0] sm:$0xff]
        %v4043 = vld [vmem:[#allocation2 + $0xd8] sm:$0xff]
        %v4044 = vld [vmem:[#allocation2 + $0xe0] sm:$0xff]
        %v4045 = vld [vmem:[#allocation2 + $0xe8] sm:$0xff]
        %v4046 = vld [vmem:[#allocation2 + $0xf0] sm:$0xff]
        %v4047 = vld [vmem:[#allocation2 + $0xf8] sm:$0xff]
        %s4048 = scalar_lea.vmem %s271, 120 [#allocation3]
        %v4049 = vld [vmem:[%s4048] sm:$0xf]
        %v4050 = vld [vmem:[%s4048 + $0x4] sm:$0xf]
        %v4051 = vld [vmem:[%s4048 + $0x8] sm:$0xf]
        %v4052 = vld [vmem:[%s4048 + $0xc] sm:$0xf]
        %v4053 = vld [vmem:[%s4048 + $0x10] sm:$0xf]
        %v4054 = vld [vmem:[%s4048 + $0x14] sm:$0xf]
        %v4055 = vld [vmem:[%s4048 + $0x18] sm:$0xf]
        %v4056 = vld [vmem:[%s4048 + $0x1c] sm:$0xf]
        %v4057 = vld [vmem:[%s281] sm:$0xf]
        %v4058 = vld [vmem:[%s281 + $0x4] sm:$0xf]
        %v4059 = vld [vmem:[%s281 + $0x8] sm:$0xf]
        %v4060 = vld [vmem:[%s281 + $0xc] sm:$0xf]
        %v4061 = vld [vmem:[%s281 + $0x10] sm:$0xf]
        %v4062 = vld [vmem:[%s281 + $0x14] sm:$0xf]
        %v4063 = vld [vmem:[%s281 + $0x18] sm:$0xf]
        %v4064 = vld [vmem:[%s281 + $0x1c] sm:$0xf]
        %v4065 = vld [vmem:[%s281 + $0x20] sm:$0xf]
        %v4066 = vld [vmem:[%s281 + $0x24] sm:$0xf]
        %v4067 = vld [vmem:[%s281 + $0x28] sm:$0xf]
        %v4068 = vld [vmem:[%s281 + $0x2c] sm:$0xf]
        %v4069 = vld [vmem:[%s281 + $0x30] sm:$0xf]
        %v4070 = vld [vmem:[%s281 + $0x34] sm:$0xf]
        %v4071 = vld [vmem:[%s281 + $0x38] sm:$0xf]
        %v4072 = vld [vmem:[%s281 + $0x3c] sm:$0xf]
        %v4081 = vunpack.c.l.b16 %v4049
        %v4082 = vunpack.c.l.b16 %v4050
        %v4083 = vunpack.c.l.b16 %v4051
        %v4084 = vunpack.c.l.b16 %v4052
        %v4085 = vunpack.c.l.b16 %v4053
        %v4086 = vunpack.c.l.b16 %v4054
        %v4087 = vunpack.c.l.b16 %v4055
        %v4088 = vunpack.c.l.b16 %v4056
        %v4089 = vpack.c.b16 %v4082, %v4081
        %v4090 = vpack.c.b16 %v4084, %v4083
        %v4091 = vpack.c.b16 %v4086, %v4085
        %v4092 = vpack.c.b16 %v4088, %v4087
        %v4113 = vunpack.c.l.b16 %v4057
        %v4114 = vunpack.c.l.b16 %v4058
        %v4115 = vunpack.c.l.b16 %v4059
        %v4116 = vunpack.c.l.b16 %v4060
        %v4117 = vunpack.c.l.b16 %v4061
        %v4118 = vunpack.c.l.b16 %v4062
        %v4119 = vunpack.c.l.b16 %v4063
        %v4120 = vunpack.c.l.b16 %v4064
        %v4121 = vunpack.c.l.b16 %v4065
        %v4122 = vunpack.c.l.b16 %v4066
        %v4123 = vunpack.c.l.b16 %v4067
        %v4124 = vunpack.c.l.b16 %v4068
        %v4125 = vunpack.c.l.b16 %v4069
        %v4126 = vunpack.c.l.b16 %v4070
        %v4127 = vunpack.c.l.b16 %v4071
        %v4128 = vunpack.c.l.b16 %v4072
        %v4129 = vpack.c.b16 %v4114, %v4113
        %v4130 = vpack.c.b16 %v4116, %v4115
        %v4131 = vpack.c.b16 %v4118, %v4117
        %v4132 = vpack.c.b16 %v4120, %v4119
        %v4133 = vpack.c.b16 %v4122, %v4121
        %v4134 = vpack.c.b16 %v4124, %v4123
        %v4135 = vpack.c.b16 %v4126, %v4125
        %v4136 = vpack.c.b16 %v4128, %v4127
        %4145 = vmatpush.bf16.msra.mxu0 %v4136
        %4146 = vmatpush.bf16.msra.mxu0 %v4135
        %4147 = vmatpush.bf16.msra.mxu0 %v4134
        %4148 = vmatpush.bf16.msra.mxu0 %v4133
        %4149 = vmatpush.bf16.msra.mxu0 %v4132
        %4150 = vmatpush.bf16.msra.mxu0 %v4131
        %4151 = vmatpush.bf16.msra.mxu0 %v4130
        %4152 = vmatpush.bf16.msra.mxu0 %v4129
        %4153 = vmatmul.bf16.gmra.mxu0 %v4089
        %v4154 = vpop.f32.mrf.mxu0
        %v4155 = vadd.f32 0.0, %v4154
        %v4156 = vpop.f32.mrf.mxu0
        %v4157 = vadd.f32 0.0, %v4156
        %4158 = vmatmul.bf16.gmra.mxu0 %v4090
        %v4159 = vpop.f32.mrf.mxu0
        %v4160 = vadd.f32 0.0, %v4159
        %v4161 = vpop.f32.mrf.mxu0
        %v4162 = vadd.f32 0.0, %v4161
        %4163 = vmatmul.bf16.gmra.mxu0 %v4091
        %v4164 = vpop.f32.mrf.mxu0
        %v4165 = vadd.f32 0.0, %v4164
        %v4166 = vpop.f32.mrf.mxu0
        %v4167 = vadd.f32 0.0, %v4166
        %4168 = vmatmul.bf16.gmra.mxu0 %v4092
        %v4169 = vpop.f32.mrf.mxu0
        %v4170 = vadd.f32 0.0, %v4169
        %v4171 = vpop.f32.mrf.mxu0
        %v4172 = vadd.f32 0.0, %v4171
        %4173 = vdwg.mxu0
        %v4174 = vadd.f32 %v4040, %v4155
        %v4175 = vadd.f32 %v4041, %v4157
        %v4176 = vadd.f32 %v4042, %v4160
        %v4177 = vadd.f32 %v4043, %v4162
        %v4178 = vadd.f32 %v4044, %v4165
        %v4179 = vadd.f32 %v4045, %v4167
        %v4180 = vadd.f32 %v4046, %v4170
        %v4181 = vadd.f32 %v4047, %v4172
        %s4182 = scalar_lea.vmem %s271, 280 [#allocation3]
        %v4183 = vld [vmem:[%s4182] sm:$0xf]
        %v4184 = vld [vmem:[%s4182 + $0x4] sm:$0xf]
        %v4185 = vld [vmem:[%s4182 + $0x8] sm:$0xf]
        %v4186 = vld [vmem:[%s4182 + $0xc] sm:$0xf]
        %v4187 = vld [vmem:[%s4182 + $0x10] sm:$0xf]
        %v4188 = vld [vmem:[%s4182 + $0x14] sm:$0xf]
        %v4189 = vld [vmem:[%s4182 + $0x18] sm:$0xf]
        %v4190 = vld [vmem:[%s4182 + $0x1c] sm:$0xf]
        %v4191 = vld [vmem:[%s517] sm:$0xf]
        %v4192 = vld [vmem:[%s517 + $0x4] sm:$0xf]
        %v4193 = vld [vmem:[%s517 + $0x8] sm:$0xf]
        %v4194 = vld [vmem:[%s517 + $0xc] sm:$0xf]
        %v4195 = vld [vmem:[%s517 + $0x10] sm:$0xf]
        %v4196 = vld [vmem:[%s517 + $0x14] sm:$0xf]
        %v4197 = vld [vmem:[%s517 + $0x18] sm:$0xf]
        %v4198 = vld [vmem:[%s517 + $0x1c] sm:$0xf]
        %v4199 = vld [vmem:[%s517 + $0x20] sm:$0xf]
        %v4200 = vld [vmem:[%s517 + $0x24] sm:$0xf]
        %v4201 = vld [vmem:[%s517 + $0x28] sm:$0xf]
        %v4202 = vld [vmem:[%s517 + $0x2c] sm:$0xf]
        %v4203 = vld [vmem:[%s517 + $0x30] sm:$0xf]
        %v4204 = vld [vmem:[%s517 + $0x34] sm:$0xf]
        %v4205 = vld [vmem:[%s517 + $0x38] sm:$0xf]
        %v4206 = vld [vmem:[%s517 + $0x3c] sm:$0xf]
        %v4215 = vunpack.c.l.b16 %v4183
        %v4216 = vunpack.c.l.b16 %v4184
        %v4217 = vunpack.c.l.b16 %v4185
        %v4218 = vunpack.c.l.b16 %v4186
        %v4219 = vunpack.c.l.b16 %v4187
        %v4220 = vunpack.c.l.b16 %v4188
        %v4221 = vunpack.c.l.b16 %v4189
        %v4222 = vunpack.c.l.b16 %v4190
        %v4223 = vpack.c.b16 %v4216, %v4215
        %v4224 = vpack.c.b16 %v4218, %v4217
        %v4225 = vpack.c.b16 %v4220, %v4219
        %v4226 = vpack.c.b16 %v4222, %v4221
        %v4247 = vunpack.c.l.b16 %v4191
        %v4248 = vunpack.c.l.b16 %v4192
        %v4249 = vunpack.c.l.b16 %v4193
        %v4250 = vunpack.c.l.b16 %v4194
        %v4251 = vunpack.c.l.b16 %v4195
        %v4252 = vunpack.c.l.b16 %v4196
        %v4253 = vunpack.c.l.b16 %v4197
        %v4254 = vunpack.c.l.b16 %v4198
        %v4255 = vunpack.c.l.b16 %v4199
        %v4256 = vunpack.c.l.b16 %v4200
        %v4257 = vunpack.c.l.b16 %v4201
        %v4258 = vunpack.c.l.b16 %v4202
        %v4259 = vunpack.c.l.b16 %v4203
        %v4260 = vunpack.c.l.b16 %v4204
        %v4261 = vunpack.c.l.b16 %v4205
        %v4262 = vunpack.c.l.b16 %v4206
        %v4263 = vpack.c.b16 %v4248, %v4247
        %v4264 = vpack.c.b16 %v4250, %v4249
        %v4265 = vpack.c.b16 %v4252, %v4251
        %v4266 = vpack.c.b16 %v4254, %v4253
        %v4267 = vpack.c.b16 %v4256, %v4255
        %v4268 = vpack.c.b16 %v4258, %v4257
        %v4269 = vpack.c.b16 %v4260, %v4259
        %v4270 = vpack.c.b16 %v4262, %v4261
        %4279 = vmatpush.bf16.msra.mxu0 %v4270
        %4280 = vmatpush.bf16.msra.mxu0 %v4269
        %4281 = vmatpush.bf16.msra.mxu0 %v4268
        %4282 = vmatpush.bf16.msra.mxu0 %v4267
        %4283 = vmatpush.bf16.msra.mxu0 %v4266
        %4284 = vmatpush.bf16.msra.mxu0 %v4265
        %4285 = vmatpush.bf16.msra.mxu0 %v4264
        %4286 = vmatpush.bf16.msra.mxu0 %v4263
        %4287 = vmatmul.bf16.gmra.mxu0 %v4223
        %v4288 = vpop.f32.mrf.mxu0
        %v4289 = vadd.f32 0.0, %v4288
        %v4290 = vpop.f32.mrf.mxu0
        %v4291 = vadd.f32 0.0, %v4290
        %4292 = vmatmul.bf16.gmra.mxu0 %v4224
        %v4293 = vpop.f32.mrf.mxu0
        %v4294 = vadd.f32 0.0, %v4293
        %v4295 = vpop.f32.mrf.mxu0
        %v4296 = vadd.f32 0.0, %v4295
        %4297 = vmatmul.bf16.gmra.mxu0 %v4225
        %v4298 = vpop.f32.mrf.mxu0
        %v4299 = vadd.f32 0.0, %v4298
        %v4300 = vpop.f32.mrf.mxu0
        %v4301 = vadd.f32 0.0, %v4300
        %4302 = vmatmul.bf16.gmra.mxu0 %v4226
        %v4303 = vpop.f32.mrf.mxu0
        %v4304 = vadd.f32 0.0, %v4303
        %v4305 = vpop.f32.mrf.mxu0
        %v4306 = vadd.f32 0.0, %v4305
        %4307 = vdwg.mxu0
        %v4308 = vadd.f32 %v4174, %v4289
        %v4309 = vadd.f32 %v4175, %v4291
        %v4310 = vadd.f32 %v4176, %v4294
        %v4311 = vadd.f32 %v4177, %v4296
        %v4312 = vadd.f32 %v4178, %v4299
        %v4313 = vadd.f32 %v4179, %v4301
        %v4314 = vadd.f32 %v4180, %v4304
        %v4315 = vadd.f32 %v4181, %v4306
        %s4316 = scalar_lea.vmem %s271, 440 [#allocation3]
        %v4317 = vld [vmem:[%s4316] sm:$0xf]
        %v4318 = vld [vmem:[%s4316 + $0x4] sm:$0xf]
        %v4319 = vld [vmem:[%s4316 + $0x8] sm:$0xf]
        %v4320 = vld [vmem:[%s4316 + $0xc] sm:$0xf]
        %v4321 = vld [vmem:[%s4316 + $0x10] sm:$0xf]
        %v4322 = vld [vmem:[%s4316 + $0x14] sm:$0xf]
        %v4323 = vld [vmem:[%s4316 + $0x18] sm:$0xf]
        %v4324 = vld [vmem:[%s4316 + $0x1c] sm:$0xf]
        %v4325 = vld [vmem:[%s652] sm:$0xf]
        %v4326 = vld [vmem:[%s652 + $0x4] sm:$0xf]
        %v4327 = vld [vmem:[%s652 + $0x8] sm:$0xf]
        %v4328 = vld [vmem:[%s652 + $0xc] sm:$0xf]
        %v4329 = vld [vmem:[%s652 + $0x10] sm:$0xf]
        %v4330 = vld [vmem:[%s652 + $0x14] sm:$0xf]
        %v4331 = vld [vmem:[%s652 + $0x18] sm:$0xf]
        %v4332 = vld [vmem:[%s652 + $0x1c] sm:$0xf]
        %v4333 = vld [vmem:[%s652 + $0x20] sm:$0xf]
        %v4334 = vld [vmem:[%s652 + $0x24] sm:$0xf]
        %v4335 = vld [vmem:[%s652 + $0x28] sm:$0xf]
        %v4336 = vld [vmem:[%s652 + $0x2c] sm:$0xf]
        %v4337 = vld [vmem:[%s652 + $0x30] sm:$0xf]
        %v4338 = vld [vmem:[%s652 + $0x34] sm:$0xf]
        %v4339 = vld [vmem:[%s652 + $0x38] sm:$0xf]
        %v4340 = vld [vmem:[%s652 + $0x3c] sm:$0xf]
        %v4349 = vunpack.c.l.b16 %v4317
        %v4350 = vunpack.c.l.b16 %v4318
        %v4351 = vunpack.c.l.b16 %v4319
        %v4352 = vunpack.c.l.b16 %v4320
        %v4353 = vunpack.c.l.b16 %v4321
        %v4354 = vunpack.c.l.b16 %v4322
        %v4355 = vunpack.c.l.b16 %v4323
        %v4356 = vunpack.c.l.b16 %v4324
        %v4357 = vpack.c.b16 %v4350, %v4349
        %v4358 = vpack.c.b16 %v4352, %v4351
        %v4359 = vpack.c.b16 %v4354, %v4353
        %v4360 = vpack.c.b16 %v4356, %v4355
        %v4381 = vunpack.c.l.b16 %v4325
        %v4382 = vunpack.c.l.b16 %v4326
        %v4383 = vunpack.c.l.b16 %v4327
        %v4384 = vunpack.c.l.b16 %v4328
        %v4385 = vunpack.c.l.b16 %v4329
        %v4386 = vunpack.c.l.b16 %v4330
        %v4387 = vunpack.c.l.b16 %v4331
        %v4388 = vunpack.c.l.b16 %v4332
        %v4389 = vunpack.c.l.b16 %v4333
        %v4390 = vunpack.c.l.b16 %v4334
        %v4391 = vunpack.c.l.b16 %v4335
        %v4392 = vunpack.c.l.b16 %v4336
        %v4393 = vunpack.c.l.b16 %v4337
        %v4394 = vunpack.c.l.b16 %v4338
        %v4395 = vunpack.c.l.b16 %v4339
        %v4396 = vunpack.c.l.b16 %v4340
        %v4397 = vpack.c.b16 %v4382, %v4381
        %v4398 = vpack.c.b16 %v4384, %v4383
        %v4399 = vpack.c.b16 %v4386, %v4385
        %v4400 = vpack.c.b16 %v4388, %v4387
        %v4401 = vpack.c.b16 %v4390, %v4389
        %v4402 = vpack.c.b16 %v4392, %v4391
        %v4403 = vpack.c.b16 %v4394, %v4393
        %v4404 = vpack.c.b16 %v4396, %v4395
        %4413 = vmatpush.bf16.msra.mxu0 %v4404
        %4414 = vmatpush.bf16.msra.mxu0 %v4403
        %4415 = vmatpush.bf16.msra.mxu0 %v4402
        %4416 = vmatpush.bf16.msra.mxu0 %v4401
        %4417 = vmatpush.bf16.msra.mxu0 %v4400
        %4418 = vmatpush.bf16.msra.mxu0 %v4399
        %4419 = vmatpush.bf16.msra.mxu0 %v4398
        %4420 = vmatpush.bf16.msra.mxu0 %v4397
        %4421 = vmatmul.bf16.gmra.mxu0 %v4357
        %v4422 = vpop.f32.mrf.mxu0
        %v4423 = vadd.f32 0.0, %v4422
        %v4424 = vpop.f32.mrf.mxu0
        %v4425 = vadd.f32 0.0, %v4424
        %4426 = vmatmul.bf16.gmra.mxu0 %v4358
        %v4427 = vpop.f32.mrf.mxu0
        %v4428 = vadd.f32 0.0, %v4427
        %v4429 = vpop.f32.mrf.mxu0
        %v4430 = vadd.f32 0.0, %v4429
        %4431 = vmatmul.bf16.gmra.mxu0 %v4359
        %v4432 = vpop.f32.mrf.mxu0
        %v4433 = vadd.f32 0.0, %v4432
        %v4434 = vpop.f32.mrf.mxu0
        %v4435 = vadd.f32 0.0, %v4434
        %4436 = vmatmul.bf16.gmra.mxu0 %v4360
        %v4437 = vpop.f32.mrf.mxu0
        %v4438 = vadd.f32 0.0, %v4437
        %v4439 = vpop.f32.mrf.mxu0
        %v4440 = vadd.f32 0.0, %v4439
        %4441 = vdwg.mxu0
        %v4442 = vadd.f32 %v4308, %v4423
        %v4443 = vadd.f32 %v4309, %v4425
        %v4444 = vadd.f32 %v4310, %v4428
        %v4445 = vadd.f32 %v4311, %v4430
        %v4446 = vadd.f32 %v4312, %v4433
        %v4447 = vadd.f32 %v4313, %v4435
        %v4448 = vadd.f32 %v4314, %v4438
        %v4449 = vadd.f32 %v4315, %v4440
        %s4450 = scalar_lea.vmem %s271, 124 [#allocation3]
        %v4451 = vld [vmem:[%s4450] sm:$0xf]
        %v4452 = vld [vmem:[%s4450 + $0x4] sm:$0xf]
        %v4453 = vld [vmem:[%s4450 + $0x8] sm:$0xf]
        %v4454 = vld [vmem:[%s4450 + $0xc] sm:$0xf]
        %v4455 = vld [vmem:[%s4450 + $0x10] sm:$0xf]
        %v4456 = vld [vmem:[%s4450 + $0x14] sm:$0xf]
        %v4457 = vld [vmem:[%s4450 + $0x18] sm:$0xf]
        %v4458 = vld [vmem:[%s4450 + $0x1c] sm:$0xf]
        %v4459 = vld [vmem:[%s787] sm:$0xf]
        %v4460 = vld [vmem:[%s787 + $0x4] sm:$0xf]
        %v4461 = vld [vmem:[%s787 + $0x8] sm:$0xf]
        %v4462 = vld [vmem:[%s787 + $0xc] sm:$0xf]
        %v4463 = vld [vmem:[%s787 + $0x10] sm:$0xf]
        %v4464 = vld [vmem:[%s787 + $0x14] sm:$0xf]
        %v4465 = vld [vmem:[%s787 + $0x18] sm:$0xf]
        %v4466 = vld [vmem:[%s787 + $0x1c] sm:$0xf]
        %v4467 = vld [vmem:[%s787 + $0x20] sm:$0xf]
        %v4468 = vld [vmem:[%s787 + $0x24] sm:$0xf]
        %v4469 = vld [vmem:[%s787 + $0x28] sm:$0xf]
        %v4470 = vld [vmem:[%s787 + $0x2c] sm:$0xf]
        %v4471 = vld [vmem:[%s787 + $0x30] sm:$0xf]
        %v4472 = vld [vmem:[%s787 + $0x34] sm:$0xf]
        %v4473 = vld [vmem:[%s787 + $0x38] sm:$0xf]
        %v4474 = vld [vmem:[%s787 + $0x3c] sm:$0xf]
        %v4483 = vunpack.c.l.b16 %v4451
        %v4484 = vunpack.c.l.b16 %v4452
        %v4485 = vunpack.c.l.b16 %v4453
        %v4486 = vunpack.c.l.b16 %v4454
        %v4487 = vunpack.c.l.b16 %v4455
        %v4488 = vunpack.c.l.b16 %v4456
        %v4489 = vunpack.c.l.b16 %v4457
        %v4490 = vunpack.c.l.b16 %v4458
        %v4491 = vpack.c.b16 %v4484, %v4483
        %v4492 = vpack.c.b16 %v4486, %v4485
        %v4493 = vpack.c.b16 %v4488, %v4487
        %v4494 = vpack.c.b16 %v4490, %v4489
        %v4515 = vunpack.c.l.b16 %v4459
        %v4516 = vunpack.c.l.b16 %v4460
        %v4517 = vunpack.c.l.b16 %v4461
        %v4518 = vunpack.c.l.b16 %v4462
        %v4519 = vunpack.c.l.b16 %v4463
        %v4520 = vunpack.c.l.b16 %v4464
        %v4521 = vunpack.c.l.b16 %v4465
        %v4522 = vunpack.c.l.b16 %v4466
        %v4523 = vunpack.c.l.b16 %v4467
        %v4524 = vunpack.c.l.b16 %v4468
        %v4525 = vunpack.c.l.b16 %v4469
        %v4526 = vunpack.c.l.b16 %v4470
        %v4527 = vunpack.c.l.b16 %v4471
        %v4528 = vunpack.c.l.b16 %v4472
        %v4529 = vunpack.c.l.b16 %v4473
        %v4530 = vunpack.c.l.b16 %v4474
        %v4531 = vpack.c.b16 %v4516, %v4515
        %v4532 = vpack.c.b16 %v4518, %v4517
        %v4533 = vpack.c.b16 %v4520, %v4519
        %v4534 = vpack.c.b16 %v4522, %v4521
        %v4535 = vpack.c.b16 %v4524, %v4523
        %v4536 = vpack.c.b16 %v4526, %v4525
        %v4537 = vpack.c.b16 %v4528, %v4527
        %v4538 = vpack.c.b16 %v4530, %v4529
        %4547 = vmatpush.bf16.msra.mxu0 %v4538
        %4548 = vmatpush.bf16.msra.mxu0 %v4537
        %4549 = vmatpush.bf16.msra.mxu0 %v4536
        %4550 = vmatpush.bf16.msra.mxu0 %v4535
        %4551 = vmatpush.bf16.msra.mxu0 %v4534
        %4552 = vmatpush.bf16.msra.mxu0 %v4533
        %4553 = vmatpush.bf16.msra.mxu0 %v4532
        %4554 = vmatpush.bf16.msra.mxu0 %v4531
        %4555 = vmatmul.bf16.gmra.mxu0 %v4491
        %v4556 = vpop.f32.mrf.mxu0
        %v4557 = vadd.f32 0.0, %v4556
        %v4558 = vpop.f32.mrf.mxu0
        %v4559 = vadd.f32 0.0, %v4558
        %4560 = vmatmul.bf16.gmra.mxu0 %v4492
        %v4561 = vpop.f32.mrf.mxu0
        %v4562 = vadd.f32 0.0, %v4561
        %v4563 = vpop.f32.mrf.mxu0
        %v4564 = vadd.f32 0.0, %v4563
        %4565 = vmatmul.bf16.gmra.mxu0 %v4493
        %v4566 = vpop.f32.mrf.mxu0
        %v4567 = vadd.f32 0.0, %v4566
        %v4568 = vpop.f32.mrf.mxu0
        %v4569 = vadd.f32 0.0, %v4568
        %4570 = vmatmul.bf16.gmra.mxu0 %v4494
        %v4571 = vpop.f32.mrf.mxu0
        %v4572 = vadd.f32 0.0, %v4571
        %v4573 = vpop.f32.mrf.mxu0
        %v4574 = vadd.f32 0.0, %v4573
        %4575 = vdwg.mxu0
        %v4576 = vadd.f32 %v4442, %v4557
        %v4577 = vadd.f32 %v4443, %v4559
        %v4578 = vadd.f32 %v4444, %v4562
        %v4579 = vadd.f32 %v4445, %v4564
        %v4580 = vadd.f32 %v4446, %v4567
        %v4581 = vadd.f32 %v4447, %v4569
        %v4582 = vadd.f32 %v4448, %v4572
        %v4583 = vadd.f32 %v4449, %v4574
        %s4584 = scalar_lea.vmem %s271, 284 [#allocation3]
        %v4585 = vld [vmem:[%s4584] sm:$0xf]
        %v4586 = vld [vmem:[%s4584 + $0x4] sm:$0xf]
        %v4587 = vld [vmem:[%s4584 + $0x8] sm:$0xf]
        %v4588 = vld [vmem:[%s4584 + $0xc] sm:$0xf]
        %v4589 = vld [vmem:[%s4584 + $0x10] sm:$0xf]
        %v4590 = vld [vmem:[%s4584 + $0x14] sm:$0xf]
        %v4591 = vld [vmem:[%s4584 + $0x18] sm:$0xf]
        %v4592 = vld [vmem:[%s4584 + $0x1c] sm:$0xf]
        %v4593 = vld [vmem:[%s922] sm:$0xf]
        %v4594 = vld [vmem:[%s922 + $0x4] sm:$0xf]
        %v4595 = vld [vmem:[%s922 + $0x8] sm:$0xf]
        %v4596 = vld [vmem:[%s922 + $0xc] sm:$0xf]
        %v4597 = vld [vmem:[%s922 + $0x10] sm:$0xf]
        %v4598 = vld [vmem:[%s922 + $0x14] sm:$0xf]
        %v4599 = vld [vmem:[%s922 + $0x18] sm:$0xf]
        %v4600 = vld [vmem:[%s922 + $0x1c] sm:$0xf]
        %v4601 = vld [vmem:[%s922 + $0x20] sm:$0xf]
        %v4602 = vld [vmem:[%s922 + $0x24] sm:$0xf]
        %v4603 = vld [vmem:[%s922 + $0x28] sm:$0xf]
        %v4604 = vld [vmem:[%s922 + $0x2c] sm:$0xf]
        %v4605 = vld [vmem:[%s922 + $0x30] sm:$0xf]
        %v4606 = vld [vmem:[%s922 + $0x34] sm:$0xf]
        %v4607 = vld [vmem:[%s922 + $0x38] sm:$0xf]
        %v4608 = vld [vmem:[%s922 + $0x3c] sm:$0xf]
        %v4617 = vunpack.c.l.b16 %v4585
        %v4618 = vunpack.c.l.b16 %v4586
        %v4619 = vunpack.c.l.b16 %v4587
        %v4620 = vunpack.c.l.b16 %v4588
        %v4621 = vunpack.c.l.b16 %v4589
        %v4622 = vunpack.c.l.b16 %v4590
        %v4623 = vunpack.c.l.b16 %v4591
        %v4624 = vunpack.c.l.b16 %v4592
        %v4625 = vpack.c.b16 %v4618, %v4617
        %v4626 = vpack.c.b16 %v4620, %v4619
        %v4627 = vpack.c.b16 %v4622, %v4621
        %v4628 = vpack.c.b16 %v4624, %v4623
        %v4649 = vunpack.c.l.b16 %v4593
        %v4650 = vunpack.c.l.b16 %v4594
        %v4651 = vunpack.c.l.b16 %v4595
        %v4652 = vunpack.c.l.b16 %v4596
        %v4653 = vunpack.c.l.b16 %v4597
        %v4654 = vunpack.c.l.b16 %v4598
        %v4655 = vunpack.c.l.b16 %v4599
        %v4656 = vunpack.c.l.b16 %v4600
        %v4657 = vunpack.c.l.b16 %v4601
        %v4658 = vunpack.c.l.b16 %v4602
        %v4659 = vunpack.c.l.b16 %v4603
        %v4660 = vunpack.c.l.b16 %v4604
        %v4661 = vunpack.c.l.b16 %v4605
        %v4662 = vunpack.c.l.b16 %v4606
        %v4663 = vunpack.c.l.b16 %v4607
        %v4664 = vunpack.c.l.b16 %v4608
        %v4665 = vpack.c.b16 %v4650, %v4649
        %v4666 = vpack.c.b16 %v4652, %v4651
        %v4667 = vpack.c.b16 %v4654, %v4653
        %v4668 = vpack.c.b16 %v4656, %v4655
        %v4669 = vpack.c.b16 %v4658, %v4657
        %v4670 = vpack.c.b16 %v4660, %v4659
        %v4671 = vpack.c.b16 %v4662, %v4661
        %v4672 = vpack.c.b16 %v4664, %v4663
        %4681 = vmatpush.bf16.msra.mxu0 %v4672
        %4682 = vmatpush.bf16.msra.mxu0 %v4671
        %4683 = vmatpush.bf16.msra.mxu0 %v4670
        %4684 = vmatpush.bf16.msra.mxu0 %v4669
        %4685 = vmatpush.bf16.msra.mxu0 %v4668
        %4686 = vmatpush.bf16.msra.mxu0 %v4667
        %4687 = vmatpush.bf16.msra.mxu0 %v4666
        %4688 = vmatpush.bf16.msra.mxu0 %v4665
        %4689 = vmatmul.bf16.gmra.mxu0 %v4625
        %v4690 = vpop.f32.mrf.mxu0
        %v4691 = vadd.f32 0.0, %v4690
        %v4692 = vpop.f32.mrf.mxu0
        %v4693 = vadd.f32 0.0, %v4692
        %4694 = vmatmul.bf16.gmra.mxu0 %v4626
        %v4695 = vpop.f32.mrf.mxu0
        %v4696 = vadd.f32 0.0, %v4695
        %v4697 = vpop.f32.mrf.mxu0
        %v4698 = vadd.f32 0.0, %v4697
        %4699 = vmatmul.bf16.gmra.mxu0 %v4627
        %v4700 = vpop.f32.mrf.mxu0
        %v4701 = vadd.f32 0.0, %v4700
        %v4702 = vpop.f32.mrf.mxu0
        %v4703 = vadd.f32 0.0, %v4702
        %4704 = vmatmul.bf16.gmra.mxu0 %v4628
        %v4705 = vpop.f32.mrf.mxu0
        %v4706 = vadd.f32 0.0, %v4705
        %v4707 = vpop.f32.mrf.mxu0
        %v4708 = vadd.f32 0.0, %v4707
        %4709 = vdwg.mxu0
        %v4710 = vadd.f32 %v4576, %v4691
        %v4711 = vadd.f32 %v4577, %v4693
        %v4712 = vadd.f32 %v4578, %v4696
        %v4713 = vadd.f32 %v4579, %v4698
        %v4714 = vadd.f32 %v4580, %v4701
        %v4715 = vadd.f32 %v4581, %v4703
        %v4716 = vadd.f32 %v4582, %v4706
        %v4717 = vadd.f32 %v4583, %v4708
        %s4718 = scalar_lea.vmem %s271, 444 [#allocation3]
        %v4719 = vld [vmem:[%s4718] sm:$0xf]
        %v4720 = vld [vmem:[%s4718 + $0x4] sm:$0xf]
        %v4721 = vld [vmem:[%s4718 + $0x8] sm:$0xf]
        %v4722 = vld [vmem:[%s4718 + $0xc] sm:$0xf]
        %v4723 = vld [vmem:[%s4718 + $0x10] sm:$0xf]
        %v4724 = vld [vmem:[%s4718 + $0x14] sm:$0xf]
        %v4725 = vld [vmem:[%s4718 + $0x18] sm:$0xf]
        %v4726 = vld [vmem:[%s4718 + $0x1c] sm:$0xf]
        %v4727 = vld [vmem:[%s1057] sm:$0xf]
        %v4728 = vld [vmem:[%s1057 + $0x4] sm:$0xf]
        %v4729 = vld [vmem:[%s1057 + $0x8] sm:$0xf]
        %v4730 = vld [vmem:[%s1057 + $0xc] sm:$0xf]
        %v4731 = vld [vmem:[%s1057 + $0x10] sm:$0xf]
        %v4732 = vld [vmem:[%s1057 + $0x14] sm:$0xf]
        %v4733 = vld [vmem:[%s1057 + $0x18] sm:$0xf]
        %v4734 = vld [vmem:[%s1057 + $0x1c] sm:$0xf]
        %v4735 = vld [vmem:[%s1057 + $0x20] sm:$0xf]
        %v4736 = vld [vmem:[%s1057 + $0x24] sm:$0xf]
        %v4737 = vld [vmem:[%s1057 + $0x28] sm:$0xf]
        %v4738 = vld [vmem:[%s1057 + $0x2c] sm:$0xf]
        %v4739 = vld [vmem:[%s1057 + $0x30] sm:$0xf]
        %v4740 = vld [vmem:[%s1057 + $0x34] sm:$0xf]
        %v4741 = vld [vmem:[%s1057 + $0x38] sm:$0xf]
        %v4742 = vld [vmem:[%s1057 + $0x3c] sm:$0xf]
        %v4751 = vunpack.c.l.b16 %v4719
        %v4752 = vunpack.c.l.b16 %v4720
        %v4753 = vunpack.c.l.b16 %v4721
        %v4754 = vunpack.c.l.b16 %v4722
        %v4755 = vunpack.c.l.b16 %v4723
        %v4756 = vunpack.c.l.b16 %v4724
        %v4757 = vunpack.c.l.b16 %v4725
        %v4758 = vunpack.c.l.b16 %v4726
        %v4759 = vpack.c.b16 %v4752, %v4751
        %v4760 = vpack.c.b16 %v4754, %v4753
        %v4761 = vpack.c.b16 %v4756, %v4755
        %v4762 = vpack.c.b16 %v4758, %v4757
        %v4783 = vunpack.c.l.b16 %v4727
        %v4784 = vunpack.c.l.b16 %v4728
        %v4785 = vunpack.c.l.b16 %v4729
        %v4786 = vunpack.c.l.b16 %v4730
        %v4787 = vunpack.c.l.b16 %v4731
        %v4788 = vunpack.c.l.b16 %v4732
        %v4789 = vunpack.c.l.b16 %v4733
        %v4790 = vunpack.c.l.b16 %v4734
        %v4791 = vunpack.c.l.b16 %v4735
        %v4792 = vunpack.c.l.b16 %v4736
        %v4793 = vunpack.c.l.b16 %v4737
        %v4794 = vunpack.c.l.b16 %v4738
        %v4795 = vunpack.c.l.b16 %v4739
        %v4796 = vunpack.c.l.b16 %v4740
        %v4797 = vunpack.c.l.b16 %v4741
        %v4798 = vunpack.c.l.b16 %v4742
        %v4799 = vpack.c.b16 %v4784, %v4783
        %v4800 = vpack.c.b16 %v4786, %v4785
        %v4801 = vpack.c.b16 %v4788, %v4787
        %v4802 = vpack.c.b16 %v4790, %v4789
        %v4803 = vpack.c.b16 %v4792, %v4791
        %v4804 = vpack.c.b16 %v4794, %v4793
        %v4805 = vpack.c.b16 %v4796, %v4795
        %v4806 = vpack.c.b16 %v4798, %v4797
        %4815 = vmatpush.bf16.msra.mxu0 %v4806
        %4816 = vmatpush.bf16.msra.mxu0 %v4805
        %4817 = vmatpush.bf16.msra.mxu0 %v4804
        %4818 = vmatpush.bf16.msra.mxu0 %v4803
        %4819 = vmatpush.bf16.msra.mxu0 %v4802
        %4820 = vmatpush.bf16.msra.mxu0 %v4801
        %4821 = vmatpush.bf16.msra.mxu0 %v4800
        %4822 = vmatpush.bf16.msra.mxu0 %v4799
        %4823 = vmatmul.bf16.gmra.mxu0 %v4759
        %v4824 = vpop.f32.mrf.mxu0
        %v4825 = vadd.f32 0.0, %v4824
        %v4826 = vpop.f32.mrf.mxu0
        %v4827 = vadd.f32 0.0, %v4826
        %4828 = vmatmul.bf16.gmra.mxu0 %v4760
        %v4829 = vpop.f32.mrf.mxu0
        %v4830 = vadd.f32 0.0, %v4829
        %v4831 = vpop.f32.mrf.mxu0
        %v4832 = vadd.f32 0.0, %v4831
        %4833 = vmatmul.bf16.gmra.mxu0 %v4761
        %v4834 = vpop.f32.mrf.mxu0
        %v4835 = vadd.f32 0.0, %v4834
        %v4836 = vpop.f32.mrf.mxu0
        %v4837 = vadd.f32 0.0, %v4836
        %4838 = vmatmul.bf16.gmra.mxu0 %v4762
        %v4839 = vpop.f32.mrf.mxu0
        %v4840 = vadd.f32 0.0, %v4839
        %v4841 = vpop.f32.mrf.mxu0
        %v4842 = vadd.f32 0.0, %v4841
        %4843 = vdwg.mxu0
        %v4844 = vadd.f32 %v4710, %v4825
        %v4845 = vadd.f32 %v4711, %v4827
        %v4846 = vadd.f32 %v4712, %v4830
        %v4847 = vadd.f32 %v4713, %v4832
        %v4848 = vadd.f32 %v4714, %v4835
        %v4849 = vadd.f32 %v4715, %v4837
        %v4850 = vadd.f32 %v4716, %v4840
        %v4851 = vadd.f32 %v4717, %v4842
        %s4852 = scalar_lea.vmem %s271, 128 [#allocation3]
        %v4853 = vld [vmem:[%s4852] sm:$0xf]
        %v4854 = vld [vmem:[%s4852 + $0x4] sm:$0xf]
        %v4855 = vld [vmem:[%s4852 + $0x8] sm:$0xf]
        %v4856 = vld [vmem:[%s4852 + $0xc] sm:$0xf]
        %v4857 = vld [vmem:[%s4852 + $0x10] sm:$0xf]
        %v4858 = vld [vmem:[%s4852 + $0x14] sm:$0xf]
        %v4859 = vld [vmem:[%s4852 + $0x18] sm:$0xf]
        %v4860 = vld [vmem:[%s4852 + $0x1c] sm:$0xf]
        %v4861 = vld [vmem:[%s1192] sm:$0xf]
        %v4862 = vld [vmem:[%s1192 + $0x4] sm:$0xf]
        %v4863 = vld [vmem:[%s1192 + $0x8] sm:$0xf]
        %v4864 = vld [vmem:[%s1192 + $0xc] sm:$0xf]
        %v4865 = vld [vmem:[%s1192 + $0x10] sm:$0xf]
        %v4866 = vld [vmem:[%s1192 + $0x14] sm:$0xf]
        %v4867 = vld [vmem:[%s1192 + $0x18] sm:$0xf]
        %v4868 = vld [vmem:[%s1192 + $0x1c] sm:$0xf]
        %v4869 = vld [vmem:[%s1192 + $0x20] sm:$0xf]
        %v4870 = vld [vmem:[%s1192 + $0x24] sm:$0xf]
        %v4871 = vld [vmem:[%s1192 + $0x28] sm:$0xf]
        %v4872 = vld [vmem:[%s1192 + $0x2c] sm:$0xf]
        %v4873 = vld [vmem:[%s1192 + $0x30] sm:$0xf]
        %v4874 = vld [vmem:[%s1192 + $0x34] sm:$0xf]
        %v4875 = vld [vmem:[%s1192 + $0x38] sm:$0xf]
        %v4876 = vld [vmem:[%s1192 + $0x3c] sm:$0xf]
        %v4885 = vunpack.c.l.b16 %v4853
        %v4886 = vunpack.c.l.b16 %v4854
        %v4887 = vunpack.c.l.b16 %v4855
        %v4888 = vunpack.c.l.b16 %v4856
        %v4889 = vunpack.c.l.b16 %v4857
        %v4890 = vunpack.c.l.b16 %v4858
        %v4891 = vunpack.c.l.b16 %v4859
        %v4892 = vunpack.c.l.b16 %v4860
        %v4893 = vpack.c.b16 %v4886, %v4885
        %v4894 = vpack.c.b16 %v4888, %v4887
        %v4895 = vpack.c.b16 %v4890, %v4889
        %v4896 = vpack.c.b16 %v4892, %v4891
        %v4917 = vunpack.c.l.b16 %v4861
        %v4918 = vunpack.c.l.b16 %v4862
        %v4919 = vunpack.c.l.b16 %v4863
        %v4920 = vunpack.c.l.b16 %v4864
        %v4921 = vunpack.c.l.b16 %v4865
        %v4922 = vunpack.c.l.b16 %v4866
        %v4923 = vunpack.c.l.b16 %v4867
        %v4924 = vunpack.c.l.b16 %v4868
        %v4925 = vunpack.c.l.b16 %v4869
        %v4926 = vunpack.c.l.b16 %v4870
        %v4927 = vunpack.c.l.b16 %v4871
        %v4928 = vunpack.c.l.b16 %v4872
        %v4929 = vunpack.c.l.b16 %v4873
        %v4930 = vunpack.c.l.b16 %v4874
        %v4931 = vunpack.c.l.b16 %v4875
        %v4932 = vunpack.c.l.b16 %v4876
        %v4933 = vpack.c.b16 %v4918, %v4917
        %v4934 = vpack.c.b16 %v4920, %v4919
        %v4935 = vpack.c.b16 %v4922, %v4921
        %v4936 = vpack.c.b16 %v4924, %v4923
        %v4937 = vpack.c.b16 %v4926, %v4925
        %v4938 = vpack.c.b16 %v4928, %v4927
        %v4939 = vpack.c.b16 %v4930, %v4929
        %v4940 = vpack.c.b16 %v4932, %v4931
        %4949 = vmatpush.bf16.msra.mxu0 %v4940
        %4950 = vmatpush.bf16.msra.mxu0 %v4939
        %4951 = vmatpush.bf16.msra.mxu0 %v4938
        %4952 = vmatpush.bf16.msra.mxu0 %v4937
        %4953 = vmatpush.bf16.msra.mxu0 %v4936
        %4954 = vmatpush.bf16.msra.mxu0 %v4935
        %4955 = vmatpush.bf16.msra.mxu0 %v4934
        %4956 = vmatpush.bf16.msra.mxu0 %v4933
        %4957 = vmatmul.bf16.gmra.mxu0 %v4893
        %v4958 = vpop.f32.mrf.mxu0
        %v4959 = vadd.f32 0.0, %v4958
        %v4960 = vpop.f32.mrf.mxu0
        %v4961 = vadd.f32 0.0, %v4960
        %4962 = vmatmul.bf16.gmra.mxu0 %v4894
        %v4963 = vpop.f32.mrf.mxu0
        %v4964 = vadd.f32 0.0, %v4963
        %v4965 = vpop.f32.mrf.mxu0
        %v4966 = vadd.f32 0.0, %v4965
        %4967 = vmatmul.bf16.gmra.mxu0 %v4895
        %v4968 = vpop.f32.mrf.mxu0
        %v4969 = vadd.f32 0.0, %v4968
        %v4970 = vpop.f32.mrf.mxu0
        %v4971 = vadd.f32 0.0, %v4970
        %4972 = vmatmul.bf16.gmra.mxu0 %v4896
        %v4973 = vpop.f32.mrf.mxu0
        %v4974 = vadd.f32 0.0, %v4973
        %v4975 = vpop.f32.mrf.mxu0
        %v4976 = vadd.f32 0.0, %v4975
        %4977 = vdwg.mxu0
        %v4978 = vadd.f32 %v4844, %v4959
        %v4979 = vadd.f32 %v4845, %v4961
        %v4980 = vadd.f32 %v4846, %v4964
        %v4981 = vadd.f32 %v4847, %v4966
        %v4982 = vadd.f32 %v4848, %v4969
        %v4983 = vadd.f32 %v4849, %v4971
        %v4984 = vadd.f32 %v4850, %v4974
        %v4985 = vadd.f32 %v4851, %v4976
        %s4986 = scalar_lea.vmem %s271, 288 [#allocation3]
        %v4987 = vld [vmem:[%s4986] sm:$0xf]
        %v4988 = vld [vmem:[%s4986 + $0x4] sm:$0xf]
        %v4989 = vld [vmem:[%s4986 + $0x8] sm:$0xf]
        %v4990 = vld [vmem:[%s4986 + $0xc] sm:$0xf]
        %v4991 = vld [vmem:[%s4986 + $0x10] sm:$0xf]
        %v4992 = vld [vmem:[%s4986 + $0x14] sm:$0xf]
        %v4993 = vld [vmem:[%s4986 + $0x18] sm:$0xf]
        %v4994 = vld [vmem:[%s4986 + $0x1c] sm:$0xf]
        %v4995 = vld [vmem:[%s1327] sm:$0xf]
        %v4996 = vld [vmem:[%s1327 + $0x4] sm:$0xf]
        %v4997 = vld [vmem:[%s1327 + $0x8] sm:$0xf]
        %v4998 = vld [vmem:[%s1327 + $0xc] sm:$0xf]
        %v4999 = vld [vmem:[%s1327 + $0x10] sm:$0xf]
        %v5000 = vld [vmem:[%s1327 + $0x14] sm:$0xf]
        %v5001 = vld [vmem:[%s1327 + $0x18] sm:$0xf]
        %v5002 = vld [vmem:[%s1327 + $0x1c] sm:$0xf]
        %v5003 = vld [vmem:[%s1327 + $0x20] sm:$0xf]
        %v5004 = vld [vmem:[%s1327 + $0x24] sm:$0xf]
        %v5005 = vld [vmem:[%s1327 + $0x28] sm:$0xf]
        %v5006 = vld [vmem:[%s1327 + $0x2c] sm:$0xf]
        %v5007 = vld [vmem:[%s1327 + $0x30] sm:$0xf]
        %v5008 = vld [vmem:[%s1327 + $0x34] sm:$0xf]
        %v5009 = vld [vmem:[%s1327 + $0x38] sm:$0xf]
        %v5010 = vld [vmem:[%s1327 + $0x3c] sm:$0xf]
        %v5019 = vunpack.c.l.b16 %v4987
        %v5020 = vunpack.c.l.b16 %v4988
        %v5021 = vunpack.c.l.b16 %v4989
        %v5022 = vunpack.c.l.b16 %v4990
        %v5023 = vunpack.c.l.b16 %v4991
        %v5024 = vunpack.c.l.b16 %v4992
        %v5025 = vunpack.c.l.b16 %v4993
        %v5026 = vunpack.c.l.b16 %v4994
        %v5027 = vpack.c.b16 %v5020, %v5019
        %v5028 = vpack.c.b16 %v5022, %v5021
        %v5029 = vpack.c.b16 %v5024, %v5023
        %v5030 = vpack.c.b16 %v5026, %v5025
        %v5051 = vunpack.c.l.b16 %v4995
        %v5052 = vunpack.c.l.b16 %v4996
        %v5053 = vunpack.c.l.b16 %v4997
        %v5054 = vunpack.c.l.b16 %v4998
        %v5055 = vunpack.c.l.b16 %v4999
        %v5056 = vunpack.c.l.b16 %v5000
        %v5057 = vunpack.c.l.b16 %v5001
        %v5058 = vunpack.c.l.b16 %v5002
        %v5059 = vunpack.c.l.b16 %v5003
        %v5060 = vunpack.c.l.b16 %v5004
        %v5061 = vunpack.c.l.b16 %v5005
        %v5062 = vunpack.c.l.b16 %v5006
        %v5063 = vunpack.c.l.b16 %v5007
        %v5064 = vunpack.c.l.b16 %v5008
        %v5065 = vunpack.c.l.b16 %v5009
        %v5066 = vunpack.c.l.b16 %v5010
        %v5067 = vpack.c.b16 %v5052, %v5051
        %v5068 = vpack.c.b16 %v5054, %v5053
        %v5069 = vpack.c.b16 %v5056, %v5055
        %v5070 = vpack.c.b16 %v5058, %v5057
        %v5071 = vpack.c.b16 %v5060, %v5059
        %v5072 = vpack.c.b16 %v5062, %v5061
        %v5073 = vpack.c.b16 %v5064, %v5063
        %v5074 = vpack.c.b16 %v5066, %v5065
        %5083 = vmatpush.bf16.msra.mxu0 %v5074
        %5084 = vmatpush.bf16.msra.mxu0 %v5073
        %5085 = vmatpush.bf16.msra.mxu0 %v5072
        %5086 = vmatpush.bf16.msra.mxu0 %v5071
        %5087 = vmatpush.bf16.msra.mxu0 %v5070
        %5088 = vmatpush.bf16.msra.mxu0 %v5069
        %5089 = vmatpush.bf16.msra.mxu0 %v5068
        %5090 = vmatpush.bf16.msra.mxu0 %v5067
        %5091 = vmatmul.bf16.gmra.mxu0 %v5027
        %v5092 = vpop.f32.mrf.mxu0
        %v5093 = vadd.f32 0.0, %v5092
        %v5094 = vpop.f32.mrf.mxu0
        %v5095 = vadd.f32 0.0, %v5094
        %5096 = vmatmul.bf16.gmra.mxu0 %v5028
        %v5097 = vpop.f32.mrf.mxu0
        %v5098 = vadd.f32 0.0, %v5097
        %v5099 = vpop.f32.mrf.mxu0
        %v5100 = vadd.f32 0.0, %v5099
        %5101 = vmatmul.bf16.gmra.mxu0 %v5029
        %v5102 = vpop.f32.mrf.mxu0
        %v5103 = vadd.f32 0.0, %v5102
        %v5104 = vpop.f32.mrf.mxu0
        %v5105 = vadd.f32 0.0, %v5104
        %5106 = vmatmul.bf16.gmra.mxu0 %v5030
        %v5107 = vpop.f32.mrf.mxu0
        %v5108 = vadd.f32 0.0, %v5107
        %v5109 = vpop.f32.mrf.mxu0
        %v5110 = vadd.f32 0.0, %v5109
        %5111 = vdwg.mxu0
        %v5112 = vadd.f32 %v4978, %v5093
        %v5113 = vadd.f32 %v4979, %v5095
        %v5114 = vadd.f32 %v4980, %v5098
        %v5115 = vadd.f32 %v4981, %v5100
        %v5116 = vadd.f32 %v4982, %v5103
        %v5117 = vadd.f32 %v4983, %v5105
        %v5118 = vadd.f32 %v4984, %v5108
        %v5119 = vadd.f32 %v4985, %v5110
        %s5120 = scalar_lea.vmem %s271, 448 [#allocation3]
        %v5121 = vld [vmem:[%s5120] sm:$0xf]
        %v5122 = vld [vmem:[%s5120 + $0x4] sm:$0xf]
        %v5123 = vld [vmem:[%s5120 + $0x8] sm:$0xf]
        %v5124 = vld [vmem:[%s5120 + $0xc] sm:$0xf]
        %v5125 = vld [vmem:[%s5120 + $0x10] sm:$0xf]
        %v5126 = vld [vmem:[%s5120 + $0x14] sm:$0xf]
        %v5127 = vld [vmem:[%s5120 + $0x18] sm:$0xf]
        %v5128 = vld [vmem:[%s5120 + $0x1c] sm:$0xf]
        %v5129 = vld [vmem:[%s1462] sm:$0xf]
        %v5130 = vld [vmem:[%s1462 + $0x4] sm:$0xf]
        %v5131 = vld [vmem:[%s1462 + $0x8] sm:$0xf]
        %v5132 = vld [vmem:[%s1462 + $0xc] sm:$0xf]
        %v5133 = vld [vmem:[%s1462 + $0x10] sm:$0xf]
        %v5134 = vld [vmem:[%s1462 + $0x14] sm:$0xf]
        %v5135 = vld [vmem:[%s1462 + $0x18] sm:$0xf]
        %v5136 = vld [vmem:[%s1462 + $0x1c] sm:$0xf]
        %v5137 = vld [vmem:[%s1462 + $0x20] sm:$0xf]
        %v5138 = vld [vmem:[%s1462 + $0x24] sm:$0xf]
        %v5139 = vld [vmem:[%s1462 + $0x28] sm:$0xf]
        %v5140 = vld [vmem:[%s1462 + $0x2c] sm:$0xf]
        %v5141 = vld [vmem:[%s1462 + $0x30] sm:$0xf]
        %v5142 = vld [vmem:[%s1462 + $0x34] sm:$0xf]
        %v5143 = vld [vmem:[%s1462 + $0x38] sm:$0xf]
        %v5144 = vld [vmem:[%s1462 + $0x3c] sm:$0xf]
        %v5153 = vunpack.c.l.b16 %v5121
        %v5154 = vunpack.c.l.b16 %v5122
        %v5155 = vunpack.c.l.b16 %v5123
        %v5156 = vunpack.c.l.b16 %v5124
        %v5157 = vunpack.c.l.b16 %v5125
        %v5158 = vunpack.c.l.b16 %v5126
        %v5159 = vunpack.c.l.b16 %v5127
        %v5160 = vunpack.c.l.b16 %v5128
        %v5161 = vpack.c.b16 %v5154, %v5153
        %v5162 = vpack.c.b16 %v5156, %v5155
        %v5163 = vpack.c.b16 %v5158, %v5157
        %v5164 = vpack.c.b16 %v5160, %v5159
        %v5185 = vunpack.c.l.b16 %v5129
        %v5186 = vunpack.c.l.b16 %v5130
        %v5187 = vunpack.c.l.b16 %v5131
        %v5188 = vunpack.c.l.b16 %v5132
        %v5189 = vunpack.c.l.b16 %v5133
        %v5190 = vunpack.c.l.b16 %v5134
        %v5191 = vunpack.c.l.b16 %v5135
        %v5192 = vunpack.c.l.b16 %v5136
        %v5193 = vunpack.c.l.b16 %v5137
        %v5194 = vunpack.c.l.b16 %v5138
        %v5195 = vunpack.c.l.b16 %v5139
        %v5196 = vunpack.c.l.b16 %v5140
        %v5197 = vunpack.c.l.b16 %v5141
        %v5198 = vunpack.c.l.b16 %v5142
        %v5199 = vunpack.c.l.b16 %v5143
        %v5200 = vunpack.c.l.b16 %v5144
        %v5201 = vpack.c.b16 %v5186, %v5185
        %v5202 = vpack.c.b16 %v5188, %v5187
        %v5203 = vpack.c.b16 %v5190, %v5189
        %v5204 = vpack.c.b16 %v5192, %v5191
        %v5205 = vpack.c.b16 %v5194, %v5193
        %v5206 = vpack.c.b16 %v5196, %v5195
        %v5207 = vpack.c.b16 %v5198, %v5197
        %v5208 = vpack.c.b16 %v5200, %v5199
        %5217 = vmatpush.bf16.msra.mxu0 %v5208
        %5218 = vmatpush.bf16.msra.mxu0 %v5207
        %5219 = vmatpush.bf16.msra.mxu0 %v5206
        %5220 = vmatpush.bf16.msra.mxu0 %v5205
        %5221 = vmatpush.bf16.msra.mxu0 %v5204
        %5222 = vmatpush.bf16.msra.mxu0 %v5203
        %5223 = vmatpush.bf16.msra.mxu0 %v5202
        %5224 = vmatpush.bf16.msra.mxu0 %v5201
        %5225 = vmatmul.bf16.gmra.mxu0 %v5161
        %v5226 = vpop.f32.mrf.mxu0
        %v5227 = vadd.f32 0.0, %v5226
        %v5228 = vpop.f32.mrf.mxu0
        %v5229 = vadd.f32 0.0, %v5228
        %5230 = vmatmul.bf16.gmra.mxu0 %v5162
        %v5231 = vpop.f32.mrf.mxu0
        %v5232 = vadd.f32 0.0, %v5231
        %v5233 = vpop.f32.mrf.mxu0
        %v5234 = vadd.f32 0.0, %v5233
        %5235 = vmatmul.bf16.gmra.mxu0 %v5163
        %v5236 = vpop.f32.mrf.mxu0
        %v5237 = vadd.f32 0.0, %v5236
        %v5238 = vpop.f32.mrf.mxu0
        %v5239 = vadd.f32 0.0, %v5238
        %5240 = vmatmul.bf16.gmra.mxu0 %v5164
        %v5241 = vpop.f32.mrf.mxu0
        %v5242 = vadd.f32 0.0, %v5241
        %v5243 = vpop.f32.mrf.mxu0
        %v5244 = vadd.f32 0.0, %v5243
        %5245 = vdwg.mxu0
        %v5246 = vadd.f32 %v5112, %v5227
        %v5247 = vadd.f32 %v5113, %v5229
        %v5248 = vadd.f32 %v5114, %v5232
        %v5249 = vadd.f32 %v5115, %v5234
        %v5250 = vadd.f32 %v5116, %v5237
        %v5251 = vadd.f32 %v5117, %v5239
        %v5252 = vadd.f32 %v5118, %v5242
        %v5253 = vadd.f32 %v5119, %v5244
        %5254 = vst [vmem:[#allocation2 + $0xc0] sm:$0xff] %v5246
        %5255 = vst [vmem:[#allocation2 + $0xc8] sm:$0xff] %v5247
        %5256 = vst [vmem:[#allocation2 + $0xd0] sm:$0xff] %v5248
        %5257 = vst [vmem:[#allocation2 + $0xd8] sm:$0xff] %v5249
        %5258 = vst [vmem:[#allocation2 + $0xe0] sm:$0xff] %v5250
        %5259 = vst [vmem:[#allocation2 + $0xe8] sm:$0xff] %v5251
        %5260 = vst [vmem:[#allocation2 + $0xf0] sm:$0xff] %v5252
        %5261 = vst [vmem:[#allocation2 + $0xf8] sm:$0xff] %v5253
        %p5262 = scmp.eq.s32.totalorder %s27, 1
        // Predicated region
        $region49: #{tpu_custom_call.1} parent=31 // pred_check
          %p5263 = pneg %p5262
        $region50: #{tpu_custom_call.1} parent=31 // pred_check_branch
          %5265 = sbr.rel (%p5263) target = $region52
        $region51: #{tpu_custom_call.1} parent=31 // pred_region
          %v5266 = vld [vmem:[#allocation2] sm:$0xff]
          %v5267 = vld [vmem:[#allocation2 + $0x8] sm:$0xff]
          %v5268 = vld [vmem:[#allocation2 + $0x10] sm:$0xff]
          %v5269 = vld [vmem:[#allocation2 + $0x18] sm:$0xff]
          %v5270 = vld [vmem:[#allocation2 + $0x20] sm:$0xff]
          %v5271 = vld [vmem:[#allocation2 + $0x28] sm:$0xff]
          %v5272 = vld [vmem:[#allocation2 + $0x30] sm:$0xff]
          %v5273 = vld [vmem:[#allocation2 + $0x38] sm:$0xff]
          %v5274 = vld [vmem:[#allocation2 + $0x40] sm:$0xff]
          %v5275 = vld [vmem:[#allocation2 + $0x48] sm:$0xff]
          %v5276 = vld [vmem:[#allocation2 + $0x50] sm:$0xff]
          %v5277 = vld [vmem:[#allocation2 + $0x58] sm:$0xff]
          %v5278 = vld [vmem:[#allocation2 + $0x60] sm:$0xff]
          %v5279 = vld [vmem:[#allocation2 + $0x68] sm:$0xff]
          %v5280 = vld [vmem:[#allocation2 + $0x70] sm:$0xff]
          %v5281 = vld [vmem:[#allocation2 + $0x78] sm:$0xff]
          %v5282 = vld [vmem:[#allocation2 + $0x80] sm:$0xff]
          %v5283 = vld [vmem:[#allocation2 + $0x88] sm:$0xff]
          %v5284 = vld [vmem:[#allocation2 + $0x90] sm:$0xff]
          %v5285 = vld [vmem:[#allocation2 + $0x98] sm:$0xff]
          %v5286 = vld [vmem:[#allocation2 + $0xa0] sm:$0xff]
          %v5287 = vld [vmem:[#allocation2 + $0xa8] sm:$0xff]
          %v5288 = vld [vmem:[#allocation2 + $0xb0] sm:$0xff]
          %v5289 = vld [vmem:[#allocation2 + $0xb8] sm:$0xff]
          %v5290 = vld [vmem:[#allocation2 + $0xc0] sm:$0xff]
          %v5291 = vld [vmem:[#allocation2 + $0xc8] sm:$0xff]
          %v5292 = vld [vmem:[#allocation2 + $0xd0] sm:$0xff]
          %v5293 = vld [vmem:[#allocation2 + $0xd8] sm:$0xff]
          %v5294 = vld [vmem:[#allocation2 + $0xe0] sm:$0xff]
          %v5295 = vld [vmem:[#allocation2 + $0xe8] sm:$0xff]
          %v5296 = vld [vmem:[#allocation2 + $0xf0] sm:$0xff]
          %v5297 = vld [vmem:[#allocation2 + $0xf8] sm:$0xff]
          %v5298 = vadd.f32 %v5266, %v5267
          %v5299 = vadd.f32 %v5298, %v5268
          %v5300 = vadd.f32 %v5299, %v5269
          %v5301 = vadd.f32 %v5300, %v5270
          %v5302 = vadd.f32 %v5301, %v5271
          %v5303 = vadd.f32 %v5302, %v5272
          %v5304 = vadd.f32 %v5303, %v5273
          %v5305 = vadd.f32 %v5304, %v5274
          %v5306 = vadd.f32 %v5305, %v5275
          %v5307 = vadd.f32 %v5306, %v5276
          %v5308 = vadd.f32 %v5307, %v5277
          %v5309 = vadd.f32 %v5308, %v5278
          %v5310 = vadd.f32 %v5309, %v5279
          %v5311 = vadd.f32 %v5310, %v5280
          %v5312 = vadd.f32 %v5311, %v5281
          %v5313 = vadd.f32 %v5312, %v5282
          %v5314 = vadd.f32 %v5313, %v5283
          %v5315 = vadd.f32 %v5314, %v5284
          %v5316 = vadd.f32 %v5315, %v5285
          %v5317 = vadd.f32 %v5316, %v5286
          %v5318 = vadd.f32 %v5317, %v5287
          %v5319 = vadd.f32 %v5318, %v5288
          %v5320 = vadd.f32 %v5319, %v5289
          %v5321 = vadd.f32 %v5320, %v5290
          %v5322 = vadd.f32 %v5321, %v5291
          %v5323 = vadd.f32 %v5322, %v5292
          %v5324 = vadd.f32 %v5323, %v5293
          %v5325 = vadd.f32 %v5324, %v5294
          %v5326 = vadd.f32 %v5325, %v5295
          %v5327 = vadd.f32 %v5326, %v5296
          %v5328 = vadd.f32 %v5327, %v5297
          %v5329 = vrot.slane %v5328, 4
          %v5330 = vadd.f32 %v5328, %v5329
          %v5331 = vrot.slane %v5330, 2
          %v5332 = vadd.f32 %v5330, %v5331
          %v5333 = vrot.slane %v5332, 1
          %v5334 = vadd.f32 %v5332, %v5333
          %v5335 = vmul.f32 %v5334, 0.00390625
          %v5336 = vsub.f32 %v5266, %v5335
          %v5337 = vsub.f32 %v5267, %v5335
          %v5338 = vsub.f32 %v5268, %v5335
          %v5339 = vsub.f32 %v5269, %v5335
          %v5340 = vsub.f32 %v5270, %v5335
          %v5341 = vsub.f32 %v5271, %v5335
          %v5342 = vsub.f32 %v5272, %v5335
          %v5343 = vsub.f32 %v5273, %v5335
          %v5344 = vsub.f32 %v5274, %v5335
          %v5345 = vsub.f32 %v5275, %v5335
          %v5346 = vsub.f32 %v5276, %v5335
          %v5347 = vsub.f32 %v5277, %v5335
          %v5348 = vsub.f32 %v5278, %v5335
          %v5349 = vsub.f32 %v5279, %v5335
          %v5350 = vsub.f32 %v5280, %v5335
          %v5351 = vsub.f32 %v5281, %v5335
          %v5352 = vsub.f32 %v5282, %v5335
          %v5353 = vsub.f32 %v5283, %v5335
          %v5354 = vsub.f32 %v5284, %v5335
          %v5355 = vsub.f32 %v5285, %v5335
          %v5356 = vsub.f32 %v5286, %v5335
          %v5357 = vsub.f32 %v5287, %v5335
          %v5358 = vsub.f32 %v5288, %v5335
          %v5359 = vsub.f32 %v5289, %v5335
          %v5360 = vsub.f32 %v5290, %v5335
          %v5361 = vsub.f32 %v5291, %v5335
          %v5362 = vsub.f32 %v5292, %v5335
          %v5363 = vsub.f32 %v5293, %v5335
          %v5364 = vsub.f32 %v5294, %v5335
          %v5365 = vsub.f32 %v5295, %v5335
          %v5366 = vsub.f32 %v5296, %v5335
          %v5367 = vsub.f32 %v5297, %v5335
          %v5368 = vmul.f32 %v5336, %v5336
          %v5369 = vmul.f32 %v5337, %v5337
          %v5370 = vmul.f32 %v5338, %v5338
          %v5371 = vmul.f32 %v5339, %v5339
          %v5372 = vmul.f32 %v5340, %v5340
          %v5373 = vmul.f32 %v5341, %v5341
          %v5374 = vmul.f32 %v5342, %v5342
          %v5375 = vmul.f32 %v5343, %v5343
          %v5376 = vmul.f32 %v5344, %v5344
          %v5377 = vmul.f32 %v5345, %v5345
          %v5378 = vmul.f32 %v5346, %v5346
          %v5379 = vmul.f32 %v5347, %v5347
          %v5380 = vmul.f32 %v5348, %v5348
          %v5381 = vmul.f32 %v5349, %v5349
          %v5382 = vmul.f32 %v5350, %v5350
          %v5383 = vmul.f32 %v5351, %v5351
          %v5384 = vmul.f32 %v5352, %v5352
          %v5385 = vmul.f32 %v5353, %v5353
          %v5386 = vmul.f32 %v5354, %v5354
          %v5387 = vmul.f32 %v5355, %v5355
          %v5388 = vmul.f32 %v5356, %v5356
          %v5389 = vmul.f32 %v5357, %v5357
          %v5390 = vmul.f32 %v5358, %v5358
          %v5391 = vmul.f32 %v5359, %v5359
          %v5392 = vmul.f32 %v5360, %v5360
          %v5393 = vmul.f32 %v5361, %v5361
          %v5394 = vmul.f32 %v5362, %v5362
          %v5395 = vmul.f32 %v5363, %v5363
          %v5396 = vmul.f32 %v5364, %v5364
          %v5397 = vmul.f32 %v5365, %v5365
          %v5398 = vmul.f32 %v5366, %v5366
          %v5399 = vmul.f32 %v5367, %v5367
          %v5400 = vadd.f32 %v5368, %v5369
          %v5401 = vadd.f32 %v5400, %v5370
          %v5402 = vadd.f32 %v5401, %v5371
          %v5403 = vadd.f32 %v5402, %v5372
          %v5404 = vadd.f32 %v5403, %v5373
          %v5405 = vadd.f32 %v5404, %v5374
          %v5406 = vadd.f32 %v5405, %v5375
          %v5407 = vadd.f32 %v5406, %v5376
          %v5408 = vadd.f32 %v5407, %v5377
          %v5409 = vadd.f32 %v5408, %v5378
          %v5410 = vadd.f32 %v5409, %v5379
          %v5411 = vadd.f32 %v5410, %v5380
          %v5412 = vadd.f32 %v5411, %v5381
          %v5413 = vadd.f32 %v5412, %v5382
          %v5414 = vadd.f32 %v5413, %v5383
          %v5415 = vadd.f32 %v5414, %v5384
          %v5416 = vadd.f32 %v5415, %v5385
          %v5417 = vadd.f32 %v5416, %v5386
          %v5418 = vadd.f32 %v5417, %v5387
          %v5419 = vadd.f32 %v5418, %v5388
          %v5420 = vadd.f32 %v5419, %v5389
          %v5421 = vadd.f32 %v5420, %v5390
          %v5422 = vadd.f32 %v5421, %v5391
          %v5423 = vadd.f32 %v5422, %v5392
          %v5424 = vadd.f32 %v5423, %v5393
          %v5425 = vadd.f32 %v5424, %v5394
          %v5426 = vadd.f32 %v5425, %v5395
          %v5427 = vadd.f32 %v5426, %v5396
          %v5428 = vadd.f32 %v5427, %v5397
          %v5429 = vadd.f32 %v5428, %v5398
          %v5430 = vadd.f32 %v5429, %v5399
          %v5431 = vrot.slane %v5430, 4
          %v5432 = vadd.f32 %v5430, %v5431
          %v5433 = vrot.slane %v5432, 2
          %v5434 = vadd.f32 %v5432, %v5433
          %v5435 = vrot.slane %v5434, 1
          %v5436 = vadd.f32 %v5434, %v5435
          %v5437 = vmul.f32 %v5436, 0.00390625
          %v5438 = vld [vmem:[%s291] sm:$0x1]
          %v5439 = vadd.f32 %v5437, 1e-05
          %v5440 = vrsqrt.pop %v5439
          %v5441 = vmul.f32 %v5440, %v5439
          %v5442 = vmul.f32 %v5441, %v5440
          %v5443 = vmul.f32 0.5, %v5442
          %v5444 = vsub.f32 1.5, %v5443
          %v5445 = vmul.f32 %v5440, %v5444
          %vm5446 = vweird.f32 %v5439
          %vm5447 = vweird.f32 %v5440
          %vm5448 = vmor %vm5446, %vm5447
          %v5449 = vsel %vm5448, %v5440, %v5445
          %v5450 = vmul.f32 %v5438, %v5449
          %v5451 = vperm.slane %v5450, 0
          %v5452 = vmul.f32 %v5336, %v5451
          %v5453 = vmul.f32 %v5337, %v5451
          %v5454 = vmul.f32 %v5338, %v5451
          %v5455 = vmul.f32 %v5339, %v5451
          %v5456 = vmul.f32 %v5340, %v5451
          %v5457 = vmul.f32 %v5341, %v5451
          %v5458 = vmul.f32 %v5342, %v5451
          %v5459 = vmul.f32 %v5343, %v5451
          %v5460 = vmul.f32 %v5344, %v5451
          %v5461 = vmul.f32 %v5345, %v5451
          %v5462 = vmul.f32 %v5346, %v5451
          %v5463 = vmul.f32 %v5347, %v5451
          %v5464 = vmul.f32 %v5348, %v5451
          %v5465 = vmul.f32 %v5349, %v5451
          %v5466 = vmul.f32 %v5350, %v5451
          %v5467 = vmul.f32 %v5351, %v5451
          %v5468 = vmul.f32 %v5352, %v5451
          %v5469 = vmul.f32 %v5353, %v5451
          %v5470 = vmul.f32 %v5354, %v5451
          %v5471 = vmul.f32 %v5355, %v5451
          %v5472 = vmul.f32 %v5356, %v5451
          %v5473 = vmul.f32 %v5357, %v5451
          %v5474 = vmul.f32 %v5358, %v5451
          %v5475 = vmul.f32 %v5359, %v5451
          %v5476 = vmul.f32 %v5360, %v5451
          %v5477 = vmul.f32 %v5361, %v5451
          %v5478 = vmul.f32 %v5362, %v5451
          %v5479 = vmul.f32 %v5363, %v5451
          %v5480 = vmul.f32 %v5364, %v5451
          %v5481 = vmul.f32 %v5365, %v5451
          %v5482 = vmul.f32 %v5366, %v5451
          %v5483 = vmul.f32 %v5367, %v5451
          %v5484 = vld [vmem:[%s291 + $0x1] sm:$0x1]
          %v5485 = vperm.slane %v5484, 0
          %v5486 = vadd.f32 %v5452, %v5485
          %v5487 = vadd.f32 %v5453, %v5485
          %v5488 = vadd.f32 %v5454, %v5485
          %v5489 = vadd.f32 %v5455, %v5485
          %v5490 = vadd.f32 %v5456, %v5485
          %v5491 = vadd.f32 %v5457, %v5485
          %v5492 = vadd.f32 %v5458, %v5485
          %v5493 = vadd.f32 %v5459, %v5485
          %v5494 = vadd.f32 %v5460, %v5485
          %v5495 = vadd.f32 %v5461, %v5485
          %v5496 = vadd.f32 %v5462, %v5485
          %v5497 = vadd.f32 %v5463, %v5485
          %v5498 = vadd.f32 %v5464, %v5485
          %v5499 = vadd.f32 %v5465, %v5485
          %v5500 = vadd.f32 %v5466, %v5485
          %v5501 = vadd.f32 %v5467, %v5485
          %v5502 = vadd.f32 %v5468, %v5485
          %v5503 = vadd.f32 %v5469, %v5485
          %v5504 = vadd.f32 %v5470, %v5485
          %v5505 = vadd.f32 %v5471, %v5485
          %v5506 = vadd.f32 %v5472, %v5485
          %v5507 = vadd.f32 %v5473, %v5485
          %v5508 = vadd.f32 %v5474, %v5485
          %v5509 = vadd.f32 %v5475, %v5485
          %v5510 = vadd.f32 %v5476, %v5485
          %v5511 = vadd.f32 %v5477, %v5485
          %v5512 = vadd.f32 %v5478, %v5485
          %v5513 = vadd.f32 %v5479, %v5485
          %v5514 = vadd.f32 %v5480, %v5485
          %v5515 = vadd.f32 %v5481, %v5485
          %v5516 = vadd.f32 %v5482, %v5485
          %v5517 = vadd.f32 %v5483, %v5485
          %v5518 = vmax.f32 %v5486, 0.0
          %v5519 = vmax.f32 %v5487, 0.0
          %v5520 = vmax.f32 %v5488, 0.0
          %v5521 = vmax.f32 %v5489, 0.0
          %v5522 = vmax.f32 %v5490, 0.0
          %v5523 = vmax.f32 %v5491, 0.0
          %v5524 = vmax.f32 %v5492, 0.0
          %v5525 = vmax.f32 %v5493, 0.0
          %v5526 = vmax.f32 %v5494, 0.0
          %v5527 = vmax.f32 %v5495, 0.0
          %v5528 = vmax.f32 %v5496, 0.0
          %v5529 = vmax.f32 %v5497, 0.0
          %v5530 = vmax.f32 %v5498, 0.0
          %v5531 = vmax.f32 %v5499, 0.0
          %v5532 = vmax.f32 %v5500, 0.0
          %v5533 = vmax.f32 %v5501, 0.0
          %v5534 = vmax.f32 %v5502, 0.0
          %v5535 = vmax.f32 %v5503, 0.0
          %v5536 = vmax.f32 %v5504, 0.0
          %v5537 = vmax.f32 %v5505, 0.0
          %v5538 = vmax.f32 %v5506, 0.0
          %v5539 = vmax.f32 %v5507, 0.0
          %v5540 = vmax.f32 %v5508, 0.0
          %v5541 = vmax.f32 %v5509, 0.0
          %v5542 = vmax.f32 %v5510, 0.0
          %v5543 = vmax.f32 %v5511, 0.0
          %v5544 = vmax.f32 %v5512, 0.0
          %v5545 = vmax.f32 %v5513, 0.0
          %v5546 = vmax.f32 %v5514, 0.0
          %v5547 = vmax.f32 %v5515, 0.0
          %v5548 = vmax.f32 %v5516, 0.0
          %v5549 = vmax.f32 %v5517, 0.0
          %v5550 = vld [vmem:[%s291 + $0x2] sm:$0x1]
          %v5551 = vperm.slane %v5550, 0
          %v5552 = vmul.f32 %v5518, %v5551
          %v5553 = vmul.f32 %v5519, %v5551
          %v5554 = vmul.f32 %v5520, %v5551
          %v5555 = vmul.f32 %v5521, %v5551
          %v5556 = vmul.f32 %v5522, %v5551
          %v5557 = vmul.f32 %v5523, %v5551
          %v5558 = vmul.f32 %v5524, %v5551
          %v5559 = vmul.f32 %v5525, %v5551
          %v5560 = vmul.f32 %v5526, %v5551
          %v5561 = vmul.f32 %v5527, %v5551
          %v5562 = vmul.f32 %v5528, %v5551
          %v5563 = vmul.f32 %v5529, %v5551
          %v5564 = vmul.f32 %v5530, %v5551
          %v5565 = vmul.f32 %v5531, %v5551
          %v5566 = vmul.f32 %v5532, %v5551
          %v5567 = vmul.f32 %v5533, %v5551
          %v5568 = vmul.f32 %v5534, %v5551
          %v5569 = vmul.f32 %v5535, %v5551
          %v5570 = vmul.f32 %v5536, %v5551
          %v5571 = vmul.f32 %v5537, %v5551
          %v5572 = vmul.f32 %v5538, %v5551
          %v5573 = vmul.f32 %v5539, %v5551
          %v5574 = vmul.f32 %v5540, %v5551
          %v5575 = vmul.f32 %v5541, %v5551
          %v5576 = vmul.f32 %v5542, %v5551
          %v5577 = vmul.f32 %v5543, %v5551
          %v5578 = vmul.f32 %v5544, %v5551
          %v5579 = vmul.f32 %v5545, %v5551
          %v5580 = vmul.f32 %v5546, %v5551
          %v5581 = vmul.f32 %v5547, %v5551
          %v5582 = vmul.f32 %v5548, %v5551
          %v5583 = vmul.f32 %v5549, %v5551
          %5584 = vadd.xlane.f32.xlu0 %v5552
          %v5585 = vpop.xlane.xlu0 %5584
          %5586 = vadd.xlane.f32.xlu0 %v5553
          %v5587 = vpop.xlane.xlu0 %5586
          %5588 = vadd.xlane.f32.xlu0 %v5554
          %v5589 = vpop.xlane.xlu0 %5588
          %5590 = vadd.xlane.f32.xlu0 %v5555
          %v5591 = vpop.xlane.xlu0 %5590
          %5592 = vadd.xlane.f32.xlu0 %v5556
          %v5593 = vpop.xlane.xlu0 %5592
          %5594 = vadd.xlane.f32.xlu0 %v5557
          %v5595 = vpop.xlane.xlu0 %5594
          %5596 = vadd.xlane.f32.xlu0 %v5558
          %v5597 = vpop.xlane.xlu0 %5596
          %5598 = vadd.xlane.f32.xlu0 %v5559
          %v5599 = vpop.xlane.xlu0 %5598
          %5600 = vadd.xlane.f32.xlu0 %v5560
          %v5601 = vpop.xlane.xlu0 %5600
          %5602 = vadd.xlane.f32.xlu0 %v5561
          %v5603 = vpop.xlane.xlu0 %5602
          %5604 = vadd.xlane.f32.xlu0 %v5562
          %v5605 = vpop.xlane.xlu0 %5604
          %5606 = vadd.xlane.f32.xlu0 %v5563
          %v5607 = vpop.xlane.xlu0 %5606
          %5608 = vadd.xlane.f32.xlu0 %v5564
          %v5609 = vpop.xlane.xlu0 %5608
          %5610 = vadd.xlane.f32.xlu0 %v5565
          %v5611 = vpop.xlane.xlu0 %5610
          %5612 = vadd.xlane.f32.xlu0 %v5566
          %v5613 = vpop.xlane.xlu0 %5612
          %5614 = vadd.xlane.f32.xlu0 %v5567
          %v5615 = vpop.xlane.xlu0 %5614
          %5616 = vadd.xlane.f32.xlu0 %v5568
          %v5617 = vpop.xlane.xlu0 %5616
          %5618 = vadd.xlane.f32.xlu0 %v5569
          %v5619 = vpop.xlane.xlu0 %5618
          %5620 = vadd.xlane.f32.xlu0 %v5570
          %v5621 = vpop.xlane.xlu0 %5620
          %5622 = vadd.xlane.f32.xlu0 %v5571
          %v5623 = vpop.xlane.xlu0 %5622
          %5624 = vadd.xlane.f32.xlu0 %v5572
          %v5625 = vpop.xlane.xlu0 %5624
          %5626 = vadd.xlane.f32.xlu0 %v5573
          %v5627 = vpop.xlane.xlu0 %5626
          %5628 = vadd.xlane.f32.xlu0 %v5574
          %v5629 = vpop.xlane.xlu0 %5628
          %5630 = vadd.xlane.f32.xlu0 %v5575
          %v5631 = vpop.xlane.xlu0 %5630
          %5632 = vadd.xlane.f32.xlu0 %v5576
          %v5633 = vpop.xlane.xlu0 %5632
          %5634 = vadd.xlane.f32.xlu0 %v5577
          %v5635 = vpop.xlane.xlu0 %5634
          %5636 = vadd.xlane.f32.xlu0 %v5578
          %v5637 = vpop.xlane.xlu0 %5636
          %5638 = vadd.xlane.f32.xlu0 %v5579
          %v5639 = vpop.xlane.xlu0 %5638
          %5640 = vadd.xlane.f32.xlu0 %v5580
          %v5641 = vpop.xlane.xlu0 %5640
          %5642 = vadd.xlane.f32.xlu0 %v5581
          %v5643 = vpop.xlane.xlu0 %5642
          %5644 = vadd.xlane.f32.xlu0 %v5582
          %v5645 = vpop.xlane.xlu0 %5644
          %5646 = vadd.xlane.f32.xlu0 %v5583
          %v5647 = vpop.xlane.xlu0 %5646
          %p5648 = scmp.eq.s32.totalorder %s26, 0
          // Predicated region
          $region53: #{tpu_custom_call.1} parent=51 // pred_check
            %p5649 = pneg %p5648
          $region54: #{tpu_custom_call.1} parent=51 // pred_check_branch
            %5651 = sbr.rel (%p5649) target = $region56
          $region55: #{tpu_custom_call.1} parent=51 // pred_region
            %vm5652 = vcmask 7168
            %5653 = vst.msk [vmem:[%s330] sm:$0xff] %vm5652, %v5585
            %5654 = vst.msk [vmem:[%s330 + $0x8] sm:$0xff] %vm5652, %v5587
            %5655 = vst.msk [vmem:[%s330 + $0x10] sm:$0xff] %vm5652, %v5589
            %5656 = vst.msk [vmem:[%s330 + $0x18] sm:$0xff] %vm5652, %v5591
            %5657 = vst.msk [vmem:[%s330 + $0x20] sm:$0xff] %vm5652, %v5593
            %5658 = vst.msk [vmem:[%s330 + $0x28] sm:$0xff] %vm5652, %v5595
            %5659 = vst.msk [vmem:[%s330 + $0x30] sm:$0xff] %vm5652, %v5597
            %5660 = vst.msk [vmem:[%s330 + $0x38] sm:$0xff] %vm5652, %v5599
            %5661 = vst.msk [vmem:[%s330 + $0x40] sm:$0xff] %vm5652, %v5601
            %5662 = vst.msk [vmem:[%s330 + $0x48] sm:$0xff] %vm5652, %v5603
            %5663 = vst.msk [vmem:[%s330 + $0x50] sm:$0xff] %vm5652, %v5605
            %5664 = vst.msk [vmem:[%s330 + $0x58] sm:$0xff] %vm5652, %v5607
            %5665 = vst.msk [vmem:[%s330 + $0x60] sm:$0xff] %vm5652, %v5609
            %5666 = vst.msk [vmem:[%s330 + $0x68] sm:$0xff] %vm5652, %v5611
            %5667 = vst.msk [vmem:[%s330 + $0x70] sm:$0xff] %vm5652, %v5613
            %5668 = vst.msk [vmem:[%s330 + $0x78] sm:$0xff] %vm5652, %v5615
            %5669 = vst.msk [vmem:[%s330 + $0x80] sm:$0xff] %vm5652, %v5617
            %5670 = vst.msk [vmem:[%s330 + $0x88] sm:$0xff] %vm5652, %v5619
            %5671 = vst.msk [vmem:[%s330 + $0x90] sm:$0xff] %vm5652, %v5621
            %5672 = vst.msk [vmem:[%s330 + $0x98] sm:$0xff] %vm5652, %v5623
            %5673 = vst.msk [vmem:[%s330 + $0xa0] sm:$0xff] %vm5652, %v5625
            %5674 = vst.msk [vmem:[%s330 + $0xa8] sm:$0xff] %vm5652, %v5627
            %5675 = vst.msk [vmem:[%s330 + $0xb0] sm:$0xff] %vm5652, %v5629
            %5676 = vst.msk [vmem:[%s330 + $0xb8] sm:$0xff] %vm5652, %v5631
            %5677 = vst.msk [vmem:[%s330 + $0xc0] sm:$0xff] %vm5652, %v5633
            %5678 = vst.msk [vmem:[%s330 + $0xc8] sm:$0xff] %vm5652, %v5635
            %5679 = vst.msk [vmem:[%s330 + $0xd0] sm:$0xff] %vm5652, %v5637
            %5680 = vst.msk [vmem:[%s330 + $0xd8] sm:$0xff] %vm5652, %v5639
            %5681 = vst.msk [vmem:[%s330 + $0xe0] sm:$0xff] %vm5652, %v5641
            %5682 = vst.msk [vmem:[%s330 + $0xe8] sm:$0xff] %vm5652, %v5643
            %5683 = vst.msk [vmem:[%s330 + $0xf0] sm:$0xff] %vm5652, %v5645
            %5684 = vst.msk [vmem:[%s330 + $0xf8] sm:$0xff] %vm5652, %v5647
          $region56: #{tpu_custom_call.1} parent=51 // pred_fallthru
            _
          %p5685 = scmp.gt.s32.totalorder %s26, 0
          // Predicated region
          $region57: #{tpu_custom_call.1} parent=51 // pred_check
            %p5686 = pneg %p5685
          $region58: #{tpu_custom_call.1} parent=51 // pred_check_branch
            %5688 = sbr.rel (%p5686) target = $region60
          $region59: #{tpu_custom_call.1} parent=51 // pred_region
            %v5689 = vld [vmem:[%s330] sm:$0xff]
            %v5690 = vld [vmem:[%s330 + $0x8] sm:$0xff]
            %v5691 = vld [vmem:[%s330 + $0x10] sm:$0xff]
            %v5692 = vld [vmem:[%s330 + $0x18] sm:$0xff]
            %v5693 = vld [vmem:[%s330 + $0x20] sm:$0xff]
            %v5694 = vld [vmem:[%s330 + $0x28] sm:$0xff]
            %v5695 = vld [vmem:[%s330 + $0x30] sm:$0xff]
            %v5696 = vld [vmem:[%s330 + $0x38] sm:$0xff]
            %v5697 = vld [vmem:[%s330 + $0x40] sm:$0xff]
            %v5698 = vld [vmem:[%s330 + $0x48] sm:$0xff]
            %v5699 = vld [vmem:[%s330 + $0x50] sm:$0xff]
            %v5700 = vld [vmem:[%s330 + $0x58] sm:$0xff]
            %v5701 = vld [vmem:[%s330 + $0x60] sm:$0xff]
            %v5702 = vld [vmem:[%s330 + $0x68] sm:$0xff]
            %v5703 = vld [vmem:[%s330 + $0x70] sm:$0xff]
            %v5704 = vld [vmem:[%s330 + $0x78] sm:$0xff]
            %v5705 = vld [vmem:[%s330 + $0x80] sm:$0xff]
            %v5706 = vld [vmem:[%s330 + $0x88] sm:$0xff]
            %v5707 = vld [vmem:[%s330 + $0x90] sm:$0xff]
            %v5708 = vld [vmem:[%s330 + $0x98] sm:$0xff]
            %v5709 = vld [vmem:[%s330 + $0xa0] sm:$0xff]
            %v5710 = vld [vmem:[%s330 + $0xa8] sm:$0xff]
            %v5711 = vld [vmem:[%s330 + $0xb0] sm:$0xff]
            %v5712 = vld [vmem:[%s330 + $0xb8] sm:$0xff]
            %v5713 = vld [vmem:[%s330 + $0xc0] sm:$0xff]
            %v5714 = vld [vmem:[%s330 + $0xc8] sm:$0xff]
            %v5715 = vld [vmem:[%s330 + $0xd0] sm:$0xff]
            %v5716 = vld [vmem:[%s330 + $0xd8] sm:$0xff]
            %v5717 = vld [vmem:[%s330 + $0xe0] sm:$0xff]
            %v5718 = vld [vmem:[%s330 + $0xe8] sm:$0xff]
            %v5719 = vld [vmem:[%s330 + $0xf0] sm:$0xff]
            %v5720 = vld [vmem:[%s330 + $0xf8] sm:$0xff]
            %v5721 = vadd.f32 %v5689, %v5585
            %v5722 = vadd.f32 %v5690, %v5587
            %v5723 = vadd.f32 %v5691, %v5589
            %v5724 = vadd.f32 %v5692, %v5591
            %v5725 = vadd.f32 %v5693, %v5593
            %v5726 = vadd.f32 %v5694, %v5595
            %v5727 = vadd.f32 %v5695, %v5597
            %v5728 = vadd.f32 %v5696, %v5599
            %v5729 = vadd.f32 %v5697, %v5601
            %v5730 = vadd.f32 %v5698, %v5603
            %v5731 = vadd.f32 %v5699, %v5605
            %v5732 = vadd.f32 %v5700, %v5607
            %v5733 = vadd.f32 %v5701, %v5609
            %v5734 = vadd.f32 %v5702, %v5611
            %v5735 = vadd.f32 %v5703, %v5613
            %v5736 = vadd.f32 %v5704, %v5615
            %v5737 = vadd.f32 %v5705, %v5617
            %v5738 = vadd.f32 %v5706, %v5619
            %v5739 = vadd.f32 %v5707, %v5621
            %v5740 = vadd.f32 %v5708, %v5623
            %v5741 = vadd.f32 %v5709, %v5625
            %v5742 = vadd.f32 %v5710, %v5627
            %v5743 = vadd.f32 %v5711, %v5629
            %v5744 = vadd.f32 %v5712, %v5631
            %v5745 = vadd.f32 %v5713, %v5633
            %v5746 = vadd.f32 %v5714, %v5635
            %v5747 = vadd.f32 %v5715, %v5637
            %v5748 = vadd.f32 %v5716, %v5639
            %v5749 = vadd.f32 %v5717, %v5641
            %v5750 = vadd.f32 %v5718, %v5643
            %v5751 = vadd.f32 %v5719, %v5645
            %v5752 = vadd.f32 %v5720, %v5647
            %vm5753 = vcmask 7168
            %5754 = vst.msk [vmem:[%s330] sm:$0xff] %vm5753, %v5721
            %5755 = vst.msk [vmem:[%s330 + $0x8] sm:$0xff] %vm5753, %v5722
            %5756 = vst.msk [vmem:[%s330 + $0x10] sm:$0xff] %vm5753, %v5723
            %5757 = vst.msk [vmem:[%s330 + $0x18] sm:$0xff] %vm5753, %v5724
            %5758 = vst.msk [vmem:[%s330 + $0x20] sm:$0xff] %vm5753, %v5725
            %5759 = vst.msk [vmem:[%s330 + $0x28] sm:$0xff] %vm5753, %v5726
            %5760 = vst.msk [vmem:[%s330 + $0x30] sm:$0xff] %vm5753, %v5727
            %5761 = vst.msk [vmem:[%s330 + $0x38] sm:$0xff] %vm5753, %v5728
            %5762 = vst.msk [vmem:[%s330 + $0x40] sm:$0xff] %vm5753, %v5729
            %5763 = vst.msk [vmem:[%s330 + $0x48] sm:$0xff] %vm5753, %v5730
            %5764 = vst.msk [vmem:[%s330 + $0x50] sm:$0xff] %vm5753, %v5731
            %5765 = vst.msk [vmem:[%s330 + $0x58] sm:$0xff] %vm5753, %v5732
            %5766 = vst.msk [vmem:[%s330 + $0x60] sm:$0xff] %vm5753, %v5733
            %5767 = vst.msk [vmem:[%s330 + $0x68] sm:$0xff] %vm5753, %v5734
            %5768 = vst.msk [vmem:[%s330 + $0x70] sm:$0xff] %vm5753, %v5735
            %5769 = vst.msk [vmem:[%s330 + $0x78] sm:$0xff] %vm5753, %v5736
            %5770 = vst.msk [vmem:[%s330 + $0x80] sm:$0xff] %vm5753, %v5737
            %5771 = vst.msk [vmem:[%s330 + $0x88] sm:$0xff] %vm5753, %v5738
            %5772 = vst.msk [vmem:[%s330 + $0x90] sm:$0xff] %vm5753, %v5739
            %5773 = vst.msk [vmem:[%s330 + $0x98] sm:$0xff] %vm5753, %v5740
            %5774 = vst.msk [vmem:[%s330 + $0xa0] sm:$0xff] %vm5753, %v5741
            %5775 = vst.msk [vmem:[%s330 + $0xa8] sm:$0xff] %vm5753, %v5742
            %5776 = vst.msk [vmem:[%s330 + $0xb0] sm:$0xff] %vm5753, %v5743
            %5777 = vst.msk [vmem:[%s330 + $0xb8] sm:$0xff] %vm5753, %v5744
            %5778 = vst.msk [vmem:[%s330 + $0xc0] sm:$0xff] %vm5753, %v5745
            %5779 = vst.msk [vmem:[%s330 + $0xc8] sm:$0xff] %vm5753, %v5746
            %5780 = vst.msk [vmem:[%s330 + $0xd0] sm:$0xff] %vm5753, %v5747
            %5781 = vst.msk [vmem:[%s330 + $0xd8] sm:$0xff] %vm5753, %v5748
            %5782 = vst.msk [vmem:[%s330 + $0xe0] sm:$0xff] %vm5753, %v5749
            %5783 = vst.msk [vmem:[%s330 + $0xe8] sm:$0xff] %vm5753, %v5750
            %5784 = vst.msk [vmem:[%s330 + $0xf0] sm:$0xff] %vm5753, %v5751
            %5785 = vst.msk [vmem:[%s330 + $0xf8] sm:$0xff] %vm5753, %v5752
          $region60: #{tpu_custom_call.1} parent=51 // pred_fallthru
            _
        $region52: #{tpu_custom_call.1} parent=31 // pred_fallthru
          _
        %p5786 = scmp.lt.s32.totalorder %s25, 5
        %s5787 = scalar_select %p5786, %s25, 5
        %s5788 = smul.addr %s5787, 32
        %s5789 = smul.addr %s5788, 8
        %s5790 = scalar_lea.vmem %s3, %s5789
        // Predicated region
        $region61: #{tpu_custom_call.1} parent=31 // pred_check
          %p5791 = pneg %p143
        $region62: #{tpu_custom_call.1} parent=31 // pred_check_branch
          %5793 = sbr.rel (%p5791) target = $region64
        $region63: #{tpu_custom_call.1} parent=31 // pred_region
          _
        $region64: #{tpu_custom_call.1} parent=31 // pred_fallthru
          _
      $region32: #{tpu_custom_call.1} parent=5 // pred_fallthru
        _
      %p5794 = scmp.le.s32.totalorder 2, %s15
      // Predicated region
      $region65: #{tpu_custom_call.1} parent=5 // pred_check
        %p5795 = pneg %p5794
      $region66: #{tpu_custom_call.1} parent=5 // pred_check_branch
        %5797 = sbr.rel (%p5795) target = $region68
      $region67: #{tpu_custom_call.1} parent=5 // pred_region
        %s5798 = ssub.s32 %s15, 2
        // Predicated region
        $region69: #{tpu_custom_call.1} parent=67 // pred_check
          %p5799 = pneg %p149
        $region70: #{tpu_custom_call.1} parent=67 // pred_check_branch
          %5801 = sbr.rel (%p5799) target = $region72
        $region71: #{tpu_custom_call.1} parent=67 // pred_region
          %p5802 = scmp.lt.s32.totalorder %s28, 5
          %s5803 = scalar_select %p5802, %s28, 5
          %s5804 = smul.addr %s5803, 32
          %s5805 = smul.addr %s5804, 8
          %s5806 = scalar_lea.vmem %s3, %s5805
        $region72: #{tpu_custom_call.1} parent=67 // pred_fallthru
          _
      $region68: #{tpu_custom_call.1} parent=5 // pred_fallthru
        _
    $region6: #{tpu_custom_call.1} parent=1 // loop_footer
      %s19 = sadd.s32 1, %s15
    $region7: #{tpu_custom_call.1} parent=1 // loop_footer_branch
      %14 = sbr.rel target = $region3
    $region8: #{tpu_custom_call.1} parent=1 // loop_exit
      _
    %5807 = vsyncpa [#allocation4], 1
    %s5808 = scalar_lea.sflag [#allocation4], 1
    %5809 = vsyncpa %s5808, 1
    %5810 = vsyncpa [#allocation6], 1
    %s5811 = scalar_lea.sflag [#allocation6], 1
    %5812 = vsyncpa %s5811, 1

</llo_original>
